<compile_context>
chip_gen: v6e
topology: v6e:2x2x1
jax: 0.10.0
libtpu: 0.0.40
codegen_flags: <defaults>
</compile_context>

<pallas_src>
import jax
import jax.numpy as jnp
from jax.experimental import pallas as pl
from jax.experimental.pallas import tpu as pltpu


def _round_up(x, m):
    return ((x + m - 1) // m) * m


def _make_ffn_kernel(compute_dtype, accumulate_in_out):
    """relu(x @ W1 + b1) @ W2, b2 folded into the accumulator init."""

    def kernel(x_ref, w1_ref, b1_ref, w2_ref, b2_ref, o_ref, *scratch):
        # x_ref : (tm, n)   w1_ref: (n, th)   b1_ref: (1, th)
        # w2_ref: (th, n)   b2_ref: (1, n)    o_ref : (tm, n)
        acc = o_ref if accumulate_in_out else scratch[0]
        j = pl.program_id(1)

        @pl.when(j == 0)
        def _init():
            # Fold the output bias into the accumulator init (done once, free VPU work).
            acc[...] = jnp.broadcast_to(
                b2_ref[...].astype(jnp.float32), acc.shape)

        h = jnp.dot(x_ref[...].astype(compute_dtype),
                    w1_ref[...].astype(compute_dtype),
                    preferred_element_type=jnp.float32)
        h = jnp.maximum(h + b1_ref[...].astype(jnp.float32), 0.0)       # ReLU
        acc[...] += jnp.dot(h.astype(compute_dtype),
                            w2_ref[...].astype(compute_dtype),
                            preferred_element_type=jnp.float32)

        if not accumulate_in_out:
            @pl.when(j == pl.num_programs(1) - 1)
            def _finalize():
                o_ref[...] = acc[...].astype(o_ref.dtype)

    return kernel


def feed_forward(x, w1, b1, w2, b2, *, tm=None, th=None,
                 compute_dtype=jnp.bfloat16):
    """x: (..., n_embd) -> (..., n_embd). Fused Linear+ReLU+Linear Pallas kernel."""
    orig_shape = x.shape
    out_dtype = x.dtype
    n_embd = orig_shape[-1]
    hidden = w1.shape[1]
    assert w1.shape == (n_embd, hidden)
    assert b1.shape == (hidden,)
    assert w2.shape == (hidden, n_embd)
    assert b2.shape == (n_embd,)

    x2 = x.reshape(-1, n_embd)
    m = x2.shape[0]

    # ---- chip-aware knobs ---------------------------------------------------
    kind = jax.devices()[0].device_kind.lower()
    is_v7 = "v7" in kind
    is_v6 = "v6" in kind
    is_v5e = ("v5e" in kind) or ("v5 lite" in kind) or ("v5lite" in kind)
    num_cores = 2 if is_v7 else 1

    if is_v7:
        vmem_cap = 56 << 20      # 64 MiB physical per TC; leave headroom for scratch
        tm_target = 512          # ~3.2 TB/s vs ~1 PF/s -> compute crossover ~ 310 rows
    elif is_v6:
        vmem_cap = 100 << 20     # 128 MiB physical
        tm_target = 1024         # ~1.4 TB/s vs 918 TF/s -> crossover ~ 680 rows
    elif is_v5e:
        vmem_cap = 100 << 20
        tm_target = 256          # ~0.82 TB/s vs 197 TF/s -> crossover ~ 240 rows
    else:
        vmem_cap = 100 << 20
        tm_target = 512
    tile_budget = vmem_cap - (8 << 20)

    x_item = jnp.dtype(x.dtype).itemsize
    w_item = jnp.dtype(w1.dtype).itemsize
    out_item = jnp.dtype(out_dtype).itemsize
    acc_in_out = jnp.dtype(out_dtype) == jnp.dtype(jnp.float32)

    def footprint(tm_, th_, n_d):
        per_buf = (tm_ * n_d * x_item        # x tile
                   + n_d * th_ * w_item      # W1 chunk
                   + 8 * th_ * 4             # b1 chunk (sublane padded)
                   + th_ * n_d * w_item      # W2 chunk
                   + 8 * n_d * 4             # b2
                   + tm_ * n_d * out_item)   # out tile
        total = 2 * per_buf                  # double-buffered pipeline
        if not acc_in_out:
            total += tm_ * n_d * 4           # f32 accumulator scratch
        return total

    # ---- lane-align the feature dim (avoid masked partial stores) -----------
    n_embd_p = _round_up(n_embd, 128)
    n_pad = n_embd_p - n_embd
    if n_pad:
        x2 = jnp.pad(x2, ((0, 0), (0, n_pad)))
        w1 = jnp.pad(w1, ((0, n_pad), (0, 0)))
        w2 = jnp.pad(w2, ((0, 0), (0, n_pad)))
        b2 = jnp.pad(b2, ((0, n_pad),))

    # ---- row tiling (M axis, "parallel") -------------------------------------
    row_align = 8
    if tm is None:
        tm = tm_target
    tm = max(row_align, min(_round_up(tm, row_align), _round_up(m, row_align)))
    # v7x shards the "parallel" M axis across 2 TensorCores: avoid grid[0] == 1.
    if num_cores >= 2 and m > row_align and _round_up(m, tm) // tm < 2:
        tm = max(row_align, _round_up(-(-m // 2), row_align))
    # Shrink tm until the tiles (at the minimal hidden chunk) fit the VMEM budget.
    min_th = min(hidden, 128)
    while tm > row_align and footprint(tm, min_th, n_embd_p) > tile_budget:
        tm = max(row_align, _round_up(tm // 2, row_align))
    m_padded = _round_up(m, tm)
    if m_padded != m:
        x2 = jnp.pad(x2, ((0, m_padded - m), (0, 0)))

    # ---- hidden tiling (reduction axis, "arbitrary", last in grid) ----------
    if th is None:
        if footprint(tm, hidden, n_embd_p) <= tile_budget:
            th = hidden          # single chunk: fewest steps / accumulator RMW passes
        else:
            th = max(128, min(2048, _round_up(hidden, 128)))
            while th > 128 and footprint(tm, th, n_embd_p) > tile_budget:
                th -= 128
    th = min(th, hidden)
    if th < hidden:
        th = max(128, (th // 128) * 128)     # lane-aligned chunk when tiling hidden
    hidden_p = _round_up(hidden, th)
    pad_h = hidden_p - hidden
    if pad_h:
        # Exact: relu(x @ 0 + 0) == 0 and the padded W2 rows are zero, so padded
        # hidden chunks contribute nothing to the accumulator.
        w1 = jnp.pad(w1, ((0, 0), (0, pad_h)))
        b1 = jnp.pad(b1, ((0, pad_h),))
        w2 = jnp.pad(w2, ((0, pad_h), (0, 0)))

    b1_2d = b1.reshape(1, hidden_p)
    b2_2d = b2.reshape(1, n_embd_p)

    grid = (m_padded // tm, hidden_p // th)

    cost = pl.CostEstimate(
        flops=4 * m_padded * n_embd_p * hidden_p,           # two GEMMs: 2*M*N*K each
        transcendentals=0,
        bytes_accessed=(m_padded * n_embd_p * x_item                    # x (read once)
                        + grid[0] * n_embd_p * hidden_p * w_item        # W1 per row tile
                        + grid[0] * hidden_p * n_embd_p * w_item        # W2 per row tile
                        + m_padded * n_embd_p * out_item))              # output

    kernel = _make_ffn_kernel(compute_dtype, acc_in_out)
    scratch_shapes = [] if acc_in_out else [pltpu.VMEM((tm, n_embd_p), jnp.float32)]

    out = pl.pallas_call(
        kernel,
        out_shape=jax.ShapeDtypeStruct((m_padded, n_embd_p), out_dtype),
        grid_spec=pltpu.PrefetchScalarGridSpec(
            num_scalar_prefetch=0,
            grid=grid,
            in_specs=[
                pl.BlockSpec((tm, n_embd_p), lambda i, j: (i, 0)),    # x tile
                pl.BlockSpec((n_embd_p, th), lambda i, j: (0, j)),    # W1 chunk
                pl.BlockSpec((1, th), lambda i, j: (0, j)),           # b1 chunk
                pl.BlockSpec((th, n_embd_p), lambda i, j: (j, 0)),    # W2 chunk
                pl.BlockSpec((1, n_embd_p), lambda i, j: (0, 0)),     # b2
            ],
            out_specs=pl.BlockSpec((tm, n_embd_p), lambda i, j: (i, 0)),
            scratch_shapes=scratch_shapes,
        ),
        compiler_params=pltpu.CompilerParams(
            dimension_semantics=("parallel", "arbitrary"),
            vmem_limit_bytes=vmem_cap),
        cost_estimate=cost,
    )(x2, w1, b1_2d, w2, b2_2d)

    out = out[:m, :n_embd]     # drop any M / feature padding (no-op if none)
    return out.reshape(orig_shape)


def init_params(key, n_embd):
    """Deterministic init mimicking nn.Linear's uniform(-1/sqrt(fan_in), +1/sqrt(fan_in))."""
    hidden = 4 * n_embd
    k1, k2, k3, k4 = jax.random.split(key, 4)
    bound1 = 1.0 / (n_embd ** 0.5)
    bound2 = 1.0 / (hidden ** 0.5)
    w1 = jax.random.uniform(k1, (n_embd, hidden), jnp.float32, -bound1, bound1)
    b1 = jax.random.uniform(k2, (hidden,), jnp.float32, -bound1, bound1)
    w2 = jax.random.uniform(k3, (hidden, n_embd), jnp.float32, -bound2, bound2)
    b2 = jax.random.uniform(k4, (n_embd,), jnp.float32, -bound2, bound2)
    return w1, b1, w2, b2


if __name__ == "__main__":
    # Small shapes consistent with the module: batch=2, seq=8, n_embd=384 (hidden=1536).
    B, T, N_EMBD = 2, 8, 384
    key = jax.random.PRNGKey(0)
    kx, kp = jax.random.split(key)

    x = jax.random.normal(kx, (B, T, N_EMBD), jnp.float32)
    w1, b1, w2, b2 = init_params(kp, N_EMBD)

    out = feed_forward(x, w1, b1, w2, b2)
    out = jax.block_until_ready(out)
    assert out.shape == (B, T, N_EMBD)

    # Reference in plain JAX following the same bf16-compute / f32-accumulate path.
    xb = x.reshape(-1, N_EMBD).astype(jnp.bfloat16)
    h_ref = jnp.dot(xb, w1.astype(jnp.bfloat16),
                    preferred_element_type=jnp.float32) + b1
    h_ref = jnp.maximum(h_ref, 0.0).astype(jnp.bfloat16)
    ref = jnp.dot(h_ref, w2.astype(jnp.bfloat16),
                  preferred_element_type=jnp.float32) + b2
    ref = ref.reshape(B, T, N_EMBD).astype(out.dtype)

    assert jnp.allclose(out, ref, atol=1e-2, rtol=1e-2)

    print("KERNEL_OK")
</pallas_src>

<mosaic_0001>
module attributes {stable_mosaic.version = 11 : i64} {
  func.func @kernel(%arg0: i32, %arg1: i32, %arg2: memref<16x384xf32, #tpu.memory_space<vmem>>, %arg3: memref<384x1536xf32, #tpu.memory_space<vmem>>, %arg4: memref<1x1536xf32, #tpu.memory_space<vmem>>, %arg5: memref<1536x384xf32, #tpu.memory_space<vmem>>, %arg6: memref<1x384xf32, #tpu.memory_space<vmem>>, %arg7: memref<16x384xf32, #tpu.memory_space<vmem>>) attributes {dimension_semantics = [#tpu.dimension_semantics<parallel>, #tpu.dimension_semantics<arbitrary>], iteration_bounds = array<i64: 1, 1>, scalar_prefetch = 0 : i64, scratch_operands = 0 : i64, tpu.core_type = #tpu.core_type<tc>, window_params = [{transform_indices = @transform_0, window_bounds = array<i64: 16, 384>}, {transform_indices = @transform_1, window_bounds = array<i64: 384, 1536>}, {transform_indices = @transform_2, window_bounds = array<i64: 1, 1536>}, {transform_indices = @transform_3, window_bounds = array<i64: 1536, 384>}, {pipeline_mode = #tpu.pipeline_mode<synchronous>, transform_indices = @transform_4, window_bounds = array<i64: 1, 384>}, {transform_indices = @transform_5, window_bounds = array<i64: 16, 384>}]} {
    %c0_i32 = arith.constant 0 : i32
    %0 = arith.cmpi eq, %arg1, %c0_i32 : i32
    %1 = arith.extui %0 : i1 to i32
    %c0_i32_0 = arith.constant 0 : i32
    %2 = arith.cmpi ne, %1, %c0_i32_0 : i32
    scf.if %2 {
      %c0_14 = arith.constant 0 : index
      %c0_15 = arith.constant 0 : index
      %20 = vector.load %arg6[%c0_14, %c0_15] : memref<1x384xf32, #tpu.memory_space<vmem>>, vector<1x384xf32>
      %21 = vector.shape_cast %20 : vector<1x384xf32> to vector<1x384xf32>
      %22 = vector.broadcast %21 : vector<1x384xf32> to vector<16x384xf32>
      %c0_16 = arith.constant 0 : index
      %c0_17 = arith.constant 0 : index
      %23 = vector.load %arg7[%c0_16, %c0_17] : memref<16x384xf32, #tpu.memory_space<vmem>>, vector<16x384xf32>
      tpu.vector_store %arg7[%c0_16, %c0_17], %22 {strides = array<i32>} : memref<16x384xf32, #tpu.memory_space<vmem>>, vector<16x384xf32>,
    } else {
    }
    %c0 = arith.constant 0 : index
    %c0_1 = arith.constant 0 : index
    %3 = vector.load %arg2[%c0, %c0_1] : memref<16x384xf32, #tpu.memory_space<vmem>>, vector<16x384xf32>
    %4 = arith.truncf %3 : vector<16x384xf32> to vector<16x384xbf16>
    %c0_2 = arith.constant 0 : index
    %c0_3 = arith.constant 0 : index
    %5 = vector.load %arg3[%c0_2, %c0_3] : memref<384x1536xf32, #tpu.memory_space<vmem>>, vector<384x1536xf32>
    %6 = arith.truncf %5 : vector<384x1536xf32> to vector<384x1536xbf16>
    %cst = arith.constant dense<0.000000e+00> : vector<16x1536xf32>
    %7 = tpu.matmul %4, %6, %cst {dimension_numbers = #tpu.dot_dimension_numbers<[1], [0], [0], [1], [0, 0, 1, 1], [], []>} : vector<16x384xbf16>, vector<384x1536xbf16>, vector<16x1536xf32> -> vector<16x1536xf32>
    %c0_4 = arith.constant 0 : index
    %c0_5 = arith.constant 0 : index
    %8 = vector.load %arg4[%c0_4, %c0_5] : memref<1x1536xf32, #tpu.memory_space<vmem>>, vector<1x1536xf32>
    %9 = vector.broadcast %8 : vector<1x1536xf32> to vector<16x1536xf32>
    %10 = arith.addf %7, %9 : vector<16x1536xf32>
    %cst_6 = arith.constant 0.000000e+00 : f32
    %11 = vector.broadcast %cst_6 : f32 to vector<16x1536xf32>
    %12 = arith.maximumf %10, %11 : vector<16x1536xf32>
    %c0_7 = arith.constant 0 : index
    %c0_8 = arith.constant 0 : index
    %13 = vector.load %arg7[%c0_7, %c0_8] : memref<16x384xf32, #tpu.memory_space<vmem>>, vector<16x384xf32>
    %14 = arith.truncf %12 : vector<16x1536xf32> to vector<16x1536xbf16>
    %c0_9 = arith.constant 0 : index
    %c0_10 = arith.constant 0 : index
    %15 = vector.load %arg5[%c0_9, %c0_10] : memref<1536x384xf32, #tpu.memory_space<vmem>>, vector<1536x384xf32>
    %16 = arith.truncf %15 : vector<1536x384xf32> to vector<1536x384xbf16>
    %cst_11 = arith.constant dense<0.000000e+00> : vector<16x384xf32>
    %17 = tpu.matmul %14, %16, %cst_11 {dimension_numbers = #tpu.dot_dimension_numbers<[1], [0], [0], [1], [0, 0, 1, 1], [], []>} : vector<16x1536xbf16>, vector<1536x384xbf16>, vector<16x384xf32> -> vector<16x384xf32>
    %18 = arith.addf %13, %17 : vector<16x384xf32>
    %c0_12 = arith.constant 0 : index
    %c0_13 = arith.constant 0 : index
    %19 = vector.load %arg7[%c0_12, %c0_13] : memref<16x384xf32, #tpu.memory_space<vmem>>, vector<16x384xf32>
    tpu.vector_store %arg7[%c0_12, %c0_13], %18 {strides = array<i32>} : memref<16x384xf32, #tpu.memory_space<vmem>>, vector<16x384xf32>,
    return
  }
  func.func @transform_0(%arg0: i32, %arg1: i32) -> (i32, i32) {
    %c0_i32 = arith.constant 0 : i32
    %c0_i32_0 = arith.constant 0 : i32
    return %arg0, %c0_i32 : i32, i32
  }
  func.func @transform_1(%arg0: i32, %arg1: i32) -> (i32, i32) {
    %c0_i32 = arith.constant 0 : i32
    %c0_i32_0 = arith.constant 0 : i32
    return %c0_i32, %arg1 : i32, i32
  }
  func.func @transform_2(%arg0: i32, %arg1: i32) -> (i32, i32) {
    %c0_i32 = arith.constant 0 : i32
    %c0_i32_0 = arith.constant 0 : i32
    return %c0_i32, %arg1 : i32, i32
  }
  func.func @transform_3(%arg0: i32, %arg1: i32) -> (i32, i32) {
    %c0_i32 = arith.constant 0 : i32
    %c0_i32_0 = arith.constant 0 : i32
    return %arg1, %c0_i32 : i32, i32
  }
  func.func @transform_4(%arg0: i32, %arg1: i32) -> (i32, i32) {
    %c0_i32 = arith.constant 0 : i32
    %c0_i32_0 = arith.constant 0 : i32
    %c0_i32_1 = arith.constant 0 : i32
    return %c0_i32, %c0_i32_0 : i32, i32
  }
  func.func @transform_5(%arg0: i32, %arg1: i32) -> (i32, i32) {
    %c0_i32 = arith.constant 0 : i32
    %c0_i32_0 = arith.constant 0 : i32
    return %arg0, %c0_i32 : i32, i32
  }
}

</mosaic_0001>

<llo_original>
// kernel: tpu_custom_call.1
$region0: #{tpu_custom_call.1}
  #allocation0 [shape = 'u32[]', space=smem, size = 0x4, offset = 0x4, fixed_abs, tag = 'smem constant byte address 0x4 - core index']
  #allocation1 [shape = 'u32[144,128]{1,0:T(1,128)}', space=vmem, size = 0x12000, scoped, tag = 'internal scratch']
  %s0 = inlined_call_operand.hbm [shape: f32[16,384], index: 0, kind: input, shape index: {}]
  %s1 = inlined_call_operand.hbm [shape: f32[384,1536], index: 1, kind: input, shape index: {}]
  %s2 = inlined_call_operand.hbm [shape: f32[1,1536], index: 2, kind: input, shape index: {}]
  %s3 = inlined_call_operand.hbm [shape: f32[1536,384], index: 3, kind: input, shape index: {}]
  %s4 = inlined_call_operand.hbm [shape: f32[1,384], index: 4, kind: input, shape index: {}]
  %s5 = inlined_call_operand.hbm [shape: f32[16,384], index: 5, kind: output, shape index: {}]
  %s6 = sld [smem:[#allocation0]]
  $region54: #{tpu_custom_call.1} parent=0
    _
  %s8 = ssub.s32 1, %s6
  %s9 = scalar_select 0, %s8, %s6
  $region1: #{tpu_custom_call.1} parent=0
    #allocation2 [shape = 'u8[24576]{0}', space=vmem, size = 0x6000, scoped, tag = 'input window, operand 0, single buffered']
    #allocation3 [shape = 's32[1]{0}', space=sflag, size = 0x4, scoped, tag = 'scoped memory for tpu_custom_call.1']
    #allocation4 [shape = 's32[1]{0}', space=sflag, size = 0x4, scoped, tag = 'scoped memory for tpu_custom_call.1']
    #allocation5 [shape = 'u8[2359296]{0}', space=vmem, size = 0x240000, scoped, tag = 'input window, operand 1, single buffered']
    #allocation6 [shape = 's32[1]{0}', space=sflag, size = 0x4, scoped, tag = 'scoped memory for tpu_custom_call.1']
    #allocation7 [shape = 'u8[6144]{0}', space=vmem, size = 0x1800, scoped, tag = 'input window, operand 2, single buffered']
    #allocation8 [shape = 'u8[2359296]{0}', space=vmem, size = 0x240000, scoped, tag = 'input window, operand 3, single buffered']
    #allocation9 [shape = 's32[1]{0}', space=sflag, size = 0x4, scoped, tag = 'scoped memory for tpu_custom_call.1']
    #allocation10 [shape = 'u8[1536]{0}', space=vmem, size = 0x800, scoped, tag = 'input window, operand 4, single buffered']
    #allocation11 [shape = 'u8[24576]{0}', space=vmem, size = 0x6000, scoped, tag = 'output window, operand 0, single buffered']
    %10 = vsyncpa [#allocation3], 0
    %11 = vsyncpa [#allocation6], 0
    %12 = vsyncpa [#allocation9], 0
    %13 = vsyncpa [#allocation4], 0
    // Predicated region
    $region2: #{tpu_custom_call.1} parent=1 // pred_check
      _
    $region3: #{tpu_custom_call.1} parent=1 // pred_check_branch
      %15 = sbr.rel (0) target = $region5
    $region4: #{tpu_custom_call.1} parent=1 // pred_region
      %s17 = ssub.s32 768, 768
      %18 = vsyncadd [#allocation3], %s17
      %s19 = sshll.u32 [#allocation2], 4
      %s20 = int_to_ptr.vmem [resolvable:$true] %s19
      %25 = dma.hbm_to_vmem [thread:$0]  %s0, 768, %s20, [#allocation3], 384, 384, 24
    $region5: #{tpu_custom_call.1} parent=1 // pred_fallthru
      _
    // Predicated region
    $region6: #{tpu_custom_call.1} parent=1 // pred_check
      _
    $region7: #{tpu_custom_call.1} parent=1 // pred_check_branch
      %27 = sbr.rel (0) target = $region9
    $region8: #{tpu_custom_call.1} parent=1 // pred_region
      %s29 = ssub.s32 73728, 73728
      %30 = vsyncadd [#allocation6], %s29
      %s31 = sshll.u32 [#allocation5], 4
      %s32 = int_to_ptr.vmem [resolvable:$true] %s31
      %37 = dma.hbm_to_vmem [thread:$0]  %s1, 73728, %s32, [#allocation6], 1536, 1536, 96
    $region9: #{tpu_custom_call.1} parent=1 // pred_fallthru
      _
    // Predicated region
    $region10: #{tpu_custom_call.1} parent=1 // pred_check
      _
    $region11: #{tpu_custom_call.1} parent=1 // pred_check_branch
      %39 = sbr.rel (0) target = $region13
    $region12: #{tpu_custom_call.1} parent=1 // pred_region
      %s41 = ssub.s32 192, 192
      %42 = vsyncadd [#allocation6], %s41
      %s44 = sshll.u32 [#allocation7], 4
      %s45 = int_to_ptr.vmem [resolvable:$true] %s44
      %47 = dma.hbm_to_vmem [thread:$0]  %s2, 192, %s45, [#allocation6]
    $region13: #{tpu_custom_call.1} parent=1 // pred_fallthru
      _
    // Predicated region
    $region14: #{tpu_custom_call.1} parent=1 // pred_check
      _
    $region15: #{tpu_custom_call.1} parent=1 // pred_check_branch
      %49 = sbr.rel (0) target = $region17
    $region16: #{tpu_custom_call.1} parent=1 // pred_region
      %s51 = ssub.s32 73728, 73728
      %52 = vsyncadd [#allocation9], %s51
      %s53 = sshll.u32 [#allocation8], 4
      %s54 = int_to_ptr.vmem [resolvable:$true] %s53
      %59 = dma.hbm_to_vmem [thread:$0]  %s3, 73728, %s54, [#allocation9], 384, 384, 24
    $region17: #{tpu_custom_call.1} parent=1 // pred_fallthru
      _
    // Predicated region
    $region18: #{tpu_custom_call.1} parent=1 // pred_check
      _
    $region19: #{tpu_custom_call.1} parent=1 // pred_check_branch
      %61 = sbr.rel (0) target = $region21
    $region20: #{tpu_custom_call.1} parent=1 // pred_region
      %s63 = ssub.s32 48, 48
      %64 = vsyncadd [#allocation9], %s63
      %s66 = sshll.u32 [#allocation10], 4
      %s67 = int_to_ptr.vmem [resolvable:$true] %s66
      %69 = dma.hbm_to_vmem [thread:$0]  %s4, 48, %s67, [#allocation9]
    $region21: #{tpu_custom_call.1} parent=1 // pred_fallthru
      _
    // Predicated region
    $region22: #{tpu_custom_call.1} parent=1 // pred_check
      _
    $region23: #{tpu_custom_call.1} parent=1 // pred_check_branch
      %71 = sbr.rel (0) target = $region25
    $region24: #{tpu_custom_call.1} parent=1 // pred_region
      %72 = dma.done [#allocation3], 768
    $region25: #{tpu_custom_call.1} parent=1 // pred_fallthru
      _
    // Predicated region
    $region26: #{tpu_custom_call.1} parent=1 // pred_check
      _
    $region27: #{tpu_custom_call.1} parent=1 // pred_check_branch
      %74 = sbr.rel (0) target = $region29
    $region28: #{tpu_custom_call.1} parent=1 // pred_region
      %75 = dma.done [#allocation6], 73728
    $region29: #{tpu_custom_call.1} parent=1 // pred_fallthru
      _
    // Predicated region
    $region30: #{tpu_custom_call.1} parent=1 // pred_check
      _
    $region31: #{tpu_custom_call.1} parent=1 // pred_check_branch
      %77 = sbr.rel (0) target = $region33
    $region32: #{tpu_custom_call.1} parent=1 // pred_region
      %78 = dma.done [#allocation6], 192
    $region33: #{tpu_custom_call.1} parent=1 // pred_fallthru
      _
    // Predicated region
    $region34: #{tpu_custom_call.1} parent=1 // pred_check
      _
    $region35: #{tpu_custom_call.1} parent=1 // pred_check_branch
      %80 = sbr.rel (0) target = $region37
    $region36: #{tpu_custom_call.1} parent=1 // pred_region
      %81 = dma.done [#allocation9], 73728
    $region37: #{tpu_custom_call.1} parent=1 // pred_fallthru
      _
    // Predicated region
    $region38: #{tpu_custom_call.1} parent=1 // pred_check
      _
    $region39: #{tpu_custom_call.1} parent=1 // pred_check_branch
      %83 = sbr.rel (0) target = $region41
    $region40: #{tpu_custom_call.1} parent=1 // pred_region
      %84 = dma.done [#allocation9], 48
    $region41: #{tpu_custom_call.1} parent=1 // pred_fallthru
      _
    %p86 = scmp.eq.s32.totalorder 0, 0
    // Predicated region
    $region42: #{tpu_custom_call.1} parent=1 // pred_check
      %p87 = pneg %p86
    $region43: #{tpu_custom_call.1} parent=1 // pred_check_branch
      %89 = sbr.rel (%p87) target = $region45
    $region44: #{tpu_custom_call.1} parent=1 // pred_region
      %v90 = vld [vmem:[#allocation10] sm:$0x7]
      %v92 = vlaneseq
      %v93 = vshrl.u32 %v92, 7
      %v94 = vsub.s32 0, %v93
      %v95 = vrot.slane %v90, %v94
      %v96 = vlaneseq
      %v97 = vshrl.u32 %v96, 7
      %v98 = vsub.s32 1, %v97
      %v99 = vrot.slane %v90, %v98
      %v100 = vlaneseq
      %v101 = vshrl.u32 %v100, 7
      %v102 = vsub.s32 2, %v101
      %v103 = vrot.slane %v90, %v102
      %107 = vst [vmem:[#allocation11] sm:$0xff] %v95
      %108 = vst [vmem:[#allocation11 + $0x8] sm:$0xff] %v99
      %109 = vst [vmem:[#allocation11 + $0x10] sm:$0xff] %v103
      %110 = vst [vmem:[#allocation11 + $0x18] sm:$0xff] %v95
      %111 = vst [vmem:[#allocation11 + $0x20] sm:$0xff] %v99
      %112 = vst [vmem:[#allocation11 + $0x28] sm:$0xff] %v103
    $region45: #{tpu_custom_call.1} parent=1 // pred_fallthru
      _
    %v113 = vld [vmem:[#allocation2] sm:$0xff]
    %v114 = vld [vmem:[#allocation2 + $0x8] sm:$0xff]
    %v115 = vld [vmem:[#allocation2 + $0x10] sm:$0xff]
    %v116 = vld [vmem:[#allocation2 + $0x18] sm:$0xff]
    %v117 = vld [vmem:[#allocation2 + $0x20] sm:$0xff]
    %v118 = vld [vmem:[#allocation2 + $0x28] sm:$0xff]
    %v119 = vpack.c.bf16 %v116, %v113
    %v120 = vpack.c.bf16 %v117, %v114
    %v121 = vpack.c.bf16 %v118, %v115
    %v122 = vld [vmem:[#allocation5] sm:$0xff]
    %v123 = vld [vmem:[#allocation5 + $0x8] sm:$0xff]
    %v124 = vld [vmem:[#allocation5 + $0x10] sm:$0xff]
    %v125 = vld [vmem:[#allocation5 + $0x18] sm:$0xff]
    %v126 = vld [vmem:[#allocation5 + $0x20] sm:$0xff]
    %v127 = vld [vmem:[#allocation5 + $0x28] sm:$0xff]
    %v128 = vld [vmem:[#allocation5 + $0x30] sm:$0xff]
    %v129 = vld [vmem:[#allocation5 + $0x38] sm:$0xff]
    %v130 = vld [vmem:[#allocation5 + $0x40] sm:$0xff]
    %v131 = vld [vmem:[#allocation5 + $0x48] sm:$0xff]
    %v132 = vld [vmem:[#allocation5 + $0x50] sm:$0xff]
    %v133 = vld [vmem:[#allocation5 + $0x58] sm:$0xff]
    %v134 = vld [vmem:[#allocation5 + $0x60] sm:$0xff]
    %v135 = vld [vmem:[#allocation5 + $0x68] sm:$0xff]
    %v136 = vld [vmem:[#allocation5 + $0x70] sm:$0xff]
    %v137 = vld [vmem:[#allocation5 + $0x78] sm:$0xff]
    %v138 = vld [vmem:[#allocation5 + $0x80] sm:$0xff]
    %v139 = vld [vmem:[#allocation5 + $0x88] sm:$0xff]
    %v140 = vld [vmem:[#allocation5 + $0x90] sm:$0xff]
    %v141 = vld [vmem:[#allocation5 + $0x98] sm:$0xff]
    %v142 = vld [vmem:[#allocation5 + $0xa0] sm:$0xff]
    %v143 = vld [vmem:[#allocation5 + $0xa8] sm:$0xff]
    %v144 = vld [vmem:[#allocation5 + $0xb0] sm:$0xff]
    %v145 = vld [vmem:[#allocation5 + $0xb8] sm:$0xff]
    %v146 = vld [vmem:[#allocation5 + $0xc0] sm:$0xff]
    %v147 = vld [vmem:[#allocation5 + $0xc8] sm:$0xff]
    %v148 = vld [vmem:[#allocation5 + $0xd0] sm:$0xff]
    %v149 = vld [vmem:[#allocation5 + $0xd8] sm:$0xff]
    %v150 = vld [vmem:[#allocation5 + $0xe0] sm:$0xff]
    %v151 = vld [vmem:[#allocation5 + $0xe8] sm:$0xff]
    %v152 = vld [vmem:[#allocation5 + $0xf0] sm:$0xff]
    %v153 = vld [vmem:[#allocation5 + $0xf8] sm:$0xff]
    %v154 = vld [vmem:[#allocation5 + $0x100] sm:$0xff]
    %v155 = vld [vmem:[#allocation5 + $0x108] sm:$0xff]
    %v156 = vld [vmem:[#allocation5 + $0x110] sm:$0xff]
    %v157 = vld [vmem:[#allocation5 + $0x118] sm:$0xff]
    %v158 = vld [vmem:[#allocation5 + $0x120] sm:$0xff]
    %v159 = vld [vmem:[#allocation5 + $0x128] sm:$0xff]
    %v160 = vld [vmem:[#allocation5 + $0x130] sm:$0xff]
    %v161 = vld [vmem:[#allocation5 + $0x138] sm:$0xff]
    %v162 = vld [vmem:[#allocation5 + $0x140] sm:$0xff]
    %v163 = vld [vmem:[#allocation5 + $0x148] sm:$0xff]
    %v164 = vld [vmem:[#allocation5 + $0x150] sm:$0xff]
    %v165 = vld [vmem:[#allocation5 + $0x158] sm:$0xff]
    %v166 = vld [vmem:[#allocation5 + $0x160] sm:$0xff]
    %v167 = vld [vmem:[#allocation5 + $0x168] sm:$0xff]
    %v168 = vld [vmem:[#allocation5 + $0x170] sm:$0xff]
    %v169 = vld [vmem:[#allocation5 + $0x178] sm:$0xff]
    %v170 = vld [vmem:[#allocation5 + $0x180] sm:$0xff]
    %v171 = vld [vmem:[#allocation5 + $0x188] sm:$0xff]
    %v172 = vld [vmem:[#allocation5 + $0x190] sm:$0xff]
    %v173 = vld [vmem:[#allocation5 + $0x198] sm:$0xff]
    %v174 = vld [vmem:[#allocation5 + $0x1a0] sm:$0xff]
    %v175 = vld [vmem:[#allocation5 + $0x1a8] sm:$0xff]
    %v176 = vld [vmem:[#allocation5 + $0x1b0] sm:$0xff]
    %v177 = vld [vmem:[#allocation5 + $0x1b8] sm:$0xff]
    %v178 = vld [vmem:[#allocation5 + $0x1c0] sm:$0xff]
    %v179 = vld [vmem:[#allocation5 + $0x1c8] sm:$0xff]
    %v180 = vld [vmem:[#allocation5 + $0x1d0] sm:$0xff]
    %v181 = vld [vmem:[#allocation5 + $0x1d8] sm:$0xff]
    %v182 = vld [vmem:[#allocation5 + $0x1e0] sm:$0xff]
    %v183 = vld [vmem:[#allocation5 + $0x1e8] sm:$0xff]
    %v184 = vld [vmem:[#allocation5 + $0x1f0] sm:$0xff]
    %v185 = vld [vmem:[#allocation5 + $0x1f8] sm:$0xff]
    %v186 = vld [vmem:[#allocation5 + $0x200] sm:$0xff]
    %v187 = vld [vmem:[#allocation5 + $0x208] sm:$0xff]
    %v188 = vld [vmem:[#allocation5 + $0x210] sm:$0xff]
    %v189 = vld [vmem:[#allocation5 + $0x218] sm:$0xff]
    %v190 = vld [vmem:[#allocation5 + $0x220] sm:$0xff]
    %v191 = vld [vmem:[#allocation5 + $0x228] sm:$0xff]
    %v192 = vld [vmem:[#allocation5 + $0x230] sm:$0xff]
    %v193 = vld [vmem:[#allocation5 + $0x238] sm:$0xff]
    %v194 = vld [vmem:[#allocation5 + $0x240] sm:$0xff]
    %v195 = vld [vmem:[#allocation5 + $0x248] sm:$0xff]
    %v196 = vld [vmem:[#allocation5 + $0x250] sm:$0xff]
    %v197 = vld [vmem:[#allocation5 + $0x258] sm:$0xff]
    %v198 = vld [vmem:[#allocation5 + $0x260] sm:$0xff]
    %v199 = vld [vmem:[#allocation5 + $0x268] sm:$0xff]
    %v200 = vld [vmem:[#allocation5 + $0x270] sm:$0xff]
    %v201 = vld [vmem:[#allocation5 + $0x278] sm:$0xff]
    %v202 = vld [vmem:[#allocation5 + $0x280] sm:$0xff]
    %v203 = vld [vmem:[#allocation5 + $0x288] sm:$0xff]
    %v204 = vld [vmem:[#allocation5 + $0x290] sm:$0xff]
    %v205 = vld [vmem:[#allocation5 + $0x298] sm:$0xff]
    %v206 = vld [vmem:[#allocation5 + $0x2a0] sm:$0xff]
    %v207 = vld [vmem:[#allocation5 + $0x2a8] sm:$0xff]
    %v208 = vld [vmem:[#allocation5 + $0x2b0] sm:$0xff]
    %v209 = vld [vmem:[#allocation5 + $0x2b8] sm:$0xff]
    %v210 = vld [vmem:[#allocation5 + $0x2c0] sm:$0xff]
    %v211 = vld [vmem:[#allocation5 + $0x2c8] sm:$0xff]
    %v212 = vld [vmem:[#allocation5 + $0x2d0] sm:$0xff]
    %v213 = vld [vmem:[#allocation5 + $0x2d8] sm:$0xff]
    %v214 = vld [vmem:[#allocation5 + $0x2e0] sm:$0xff]
    %v215 = vld [vmem:[#allocation5 + $0x2e8] sm:$0xff]
    %v216 = vld [vmem:[#allocation5 + $0x2f0] sm:$0xff]
    %v217 = vld [vmem:[#allocation5 + $0x2f8] sm:$0xff]
    %v218 = vld [vmem:[#allocation5 + $0x300] sm:$0xff]
    %v219 = vld [vmem:[#allocation5 + $0x308] sm:$0xff]
    %v220 = vld [vmem:[#allocation5 + $0x310] sm:$0xff]
    %v221 = vld [vmem:[#allocation5 + $0x318] sm:$0xff]
    %v222 = vld [vmem:[#allocation5 + $0x320] sm:$0xff]
    %v223 = vld [vmem:[#allocation5 + $0x328] sm:$0xff]
    %v224 = vld [vmem:[#allocation5 + $0x330] sm:$0xff]
    %v225 = vld [vmem:[#allocation5 + $0x338] sm:$0xff]
    %v226 = vld [vmem:[#allocation5 + $0x340] sm:$0xff]
    %v227 = vld [vmem:[#allocation5 + $0x348] sm:$0xff]
    %v228 = vld [vmem:[#allocation5 + $0x350] sm:$0xff]
    %v229 = vld [vmem:[#allocation5 + $0x358] sm:$0xff]
    %v230 = vld [vmem:[#allocation5 + $0x360] sm:$0xff]
    %v231 = vld [vmem:[#allocation5 + $0x368] sm:$0xff]
    %v232 = vld [vmem:[#allocation5 + $0x370] sm:$0xff]
    %v233 = vld [vmem:[#allocation5 + $0x378] sm:$0xff]
    %v234 = vld [vmem:[#allocation5 + $0x380] sm:$0xff]
    %v235 = vld [vmem:[#allocation5 + $0x388] sm:$0xff]
    %v236 = vld [vmem:[#allocation5 + $0x390] sm:$0xff]
    %v237 = vld [vmem:[#allocation5 + $0x398] sm:$0xff]
    %v238 = vld [vmem:[#allocation5 + $0x3a0] sm:$0xff]
    %v239 = vld [vmem:[#allocation5 + $0x3a8] sm:$0xff]
    %v240 = vld [vmem:[#allocation5 + $0x3b0] sm:$0xff]
    %v241 = vld [vmem:[#allocation5 + $0x3b8] sm:$0xff]
    %v242 = vld [vmem:[#allocation5 + $0x3c0] sm:$0xff]
    %v243 = vld [vmem:[#allocation5 + $0x3c8] sm:$0xff]
    %v244 = vld [vmem:[#allocation5 + $0x3d0] sm:$0xff]
    %v245 = vld [vmem:[#allocation5 + $0x3d8] sm:$0xff]
    %v246 = vld [vmem:[#allocation5 + $0x3e0] sm:$0xff]
    %v247 = vld [vmem:[#allocation5 + $0x3e8] sm:$0xff]
    %v248 = vld [vmem:[#allocation5 + $0x3f0] sm:$0xff]
    %v249 = vld [vmem:[#allocation5 + $0x3f8] sm:$0xff]
    %v250 = vld [vmem:[#allocation5 + $0x400] sm:$0xff]
    %v251 = vld [vmem:[#allocation5 + $0x408] sm:$0xff]
    %v252 = vld [vmem:[#allocation5 + $0x410] sm:$0xff]
    %v253 = vld [vmem:[#allocation5 + $0x418] sm:$0xff]
    %v254 = vld [vmem:[#allocation5 + $0x420] sm:$0xff]
    %v255 = vld [vmem:[#allocation5 + $0x428] sm:$0xff]
    %v256 = vld [vmem:[#allocation5 + $0x430] sm:$0xff]
    %v257 = vld [vmem:[#allocation5 + $0x438] sm:$0xff]
    %v258 = vld [vmem:[#allocation5 + $0x440] sm:$0xff]
    %v259 = vld [vmem:[#allocation5 + $0x448] sm:$0xff]
    %v260 = vld [vmem:[#allocation5 + $0x450] sm:$0xff]
    %v261 = vld [vmem:[#allocation5 + $0x458] sm:$0xff]
    %v262 = vld [vmem:[#allocation5 + $0x460] sm:$0xff]
    %v263 = vld [vmem:[#allocation5 + $0x468] sm:$0xff]
    %v264 = vld [vmem:[#allocation5 + $0x470] sm:$0xff]
    %v265 = vld [vmem:[#allocation5 + $0x478] sm:$0xff]
    %v266 = vld [vmem:[#allocation5 + $0x480] sm:$0xff]
    %v267 = vld [vmem:[#allocation5 + $0x488] sm:$0xff]
    %v268 = vld [vmem:[#allocation5 + $0x490] sm:$0xff]
    %v269 = vld [vmem:[#allocation5 + $0x498] sm:$0xff]
    %v270 = vld [vmem:[#allocation5 + $0x4a0] sm:$0xff]
    %v271 = vld [vmem:[#allocation5 + $0x4a8] sm:$0xff]
    %v272 = vld [vmem:[#allocation5 + $0x4b0] sm:$0xff]
    %v273 = vld [vmem:[#allocation5 + $0x4b8] sm:$0xff]
    %v274 = vld [vmem:[#allocation5 + $0x4c0] sm:$0xff]
    %v275 = vld [vmem:[#allocation5 + $0x4c8] sm:$0xff]
    %v276 = vld [vmem:[#allocation5 + $0x4d0] sm:$0xff]
    %v277 = vld [vmem:[#allocation5 + $0x4d8] sm:$0xff]
    %v278 = vld [vmem:[#allocation5 + $0x4e0] sm:$0xff]
    %v279 = vld [vmem:[#allocation5 + $0x4e8] sm:$0xff]
    %v280 = vld [vmem:[#allocation5 + $0x4f0] sm:$0xff]
    %v281 = vld [vmem:[#allocation5 + $0x4f8] sm:$0xff]
    %v282 = vld [vmem:[#allocation5 + $0x500] sm:$0xff]
    %v283 = vld [vmem:[#allocation5 + $0x508] sm:$0xff]
    %v284 = vld [vmem:[#allocation5 + $0x510] sm:$0xff]
    %v285 = vld [vmem:[#allocation5 + $0x518] sm:$0xff]
    %v286 = vld [vmem:[#allocation5 + $0x520] sm:$0xff]
    %v287 = vld [vmem:[#allocation5 + $0x528] sm:$0xff]
    %v288 = vld [vmem:[#allocation5 + $0x530] sm:$0xff]
    %v289 = vld [vmem:[#allocation5 + $0x538] sm:$0xff]
    %v290 = vld [vmem:[#allocation5 + $0x540] sm:$0xff]
    %v291 = vld [vmem:[#allocation5 + $0x548] sm:$0xff]
    %v292 = vld [vmem:[#allocation5 + $0x550] sm:$0xff]
    %v293 = vld [vmem:[#allocation5 + $0x558] sm:$0xff]
    %v294 = vld [vmem:[#allocation5 + $0x560] sm:$0xff]
    %v295 = vld [vmem:[#allocation5 + $0x568] sm:$0xff]
    %v296 = vld [vmem:[#allocation5 + $0x570] sm:$0xff]
    %v297 = vld [vmem:[#allocation5 + $0x578] sm:$0xff]
    %v298 = vld [vmem:[#allocation5 + $0x580] sm:$0xff]
    %v299 = vld [vmem:[#allocation5 + $0x588] sm:$0xff]
    %v300 = vld [vmem:[#allocation5 + $0x590] sm:$0xff]
    %v301 = vld [vmem:[#allocation5 + $0x598] sm:$0xff]
    %v302 = vld [vmem:[#allocation5 + $0x5a0] sm:$0xff]
    %v303 = vld [vmem:[#allocation5 + $0x5a8] sm:$0xff]
    %v304 = vld [vmem:[#allocation5 + $0x5b0] sm:$0xff]
    %v305 = vld [vmem:[#allocation5 + $0x5b8] sm:$0xff]
    %v306 = vld [vmem:[#allocation5 + $0x5c0] sm:$0xff]
    %v307 = vld [vmem:[#allocation5 + $0x5c8] sm:$0xff]
    %v308 = vld [vmem:[#allocation5 + $0x5d0] sm:$0xff]
    %v309 = vld [vmem:[#allocation5 + $0x5d8] sm:$0xff]
    %v310 = vld [vmem:[#allocation5 + $0x5e0] sm:$0xff]
    %v311 = vld [vmem:[#allocation5 + $0x5e8] sm:$0xff]
    %v312 = vld [vmem:[#allocation5 + $0x5f0] sm:$0xff]
    %v313 = vld [vmem:[#allocation5 + $0x5f8] sm:$0xff]
    %v314 = vld [vmem:[#allocation5 + $0x600] sm:$0xff]
    %v315 = vld [vmem:[#allocation5 + $0x608] sm:$0xff]
    %v316 = vld [vmem:[#allocation5 + $0x610] sm:$0xff]
    %v317 = vld [vmem:[#allocation5 + $0x618] sm:$0xff]
    %v318 = vld [vmem:[#allocation5 + $0x620] sm:$0xff]
    %v319 = vld [vmem:[#allocation5 + $0x628] sm:$0xff]
    %v320 = vld [vmem:[#allocation5 + $0x630] sm:$0xff]
    %v321 = vld [vmem:[#allocation5 + $0x638] sm:$0xff]
    %v322 = vld [vmem:[#allocation5 + $0x640] sm:$0xff]
    %v323 = vld [vmem:[#allocation5 + $0x648] sm:$0xff]
    %v324 = vld [vmem:[#allocation5 + $0x650] sm:$0xff]
    %v325 = vld [vmem:[#allocation5 + $0x658] sm:$0xff]
    %v326 = vld [vmem:[#allocation5 + $0x660] sm:$0xff]
    %v327 = vld [vmem:[#allocation5 + $0x668] sm:$0xff]
    %v328 = vld [vmem:[#allocation5 + $0x670] sm:$0xff]
    %v329 = vld [vmem:[#allocation5 + $0x678] sm:$0xff]
    %v330 = vld [vmem:[#allocation5 + $0x680] sm:$0xff]
    %v331 = vld [vmem:[#allocation5 + $0x688] sm:$0xff]
    %v332 = vld [vmem:[#allocation5 + $0x690] sm:$0xff]
    %v333 = vld [vmem:[#allocation5 + $0x698] sm:$0xff]
    %v334 = vld [vmem:[#allocation5 + $0x6a0] sm:$0xff]
    %v335 = vld [vmem:[#allocation5 + $0x6a8] sm:$0xff]
    %v336 = vld [vmem:[#allocation5 + $0x6b0] sm:$0xff]
    %v337 = vld [vmem:[#allocation5 + $0x6b8] sm:$0xff]
    %v338 = vld [vmem:[#allocation5 + $0x6c0] sm:$0xff]
    %v339 = vld [vmem:[#allocation5 + $0x6c8] sm:$0xff]
    %v340 = vld [vmem:[#allocation5 + $0x6d0] sm:$0xff]
    %v341 = vld [vmem:[#allocation5 + $0x6d8] sm:$0xff]
    %v342 = vld [vmem:[#allocation5 + $0x6e0] sm:$0xff]
    %v343 = vld [vmem:[#allocation5 + $0x6e8] sm:$0xff]
    %v344 = vld [vmem:[#allocation5 + $0x6f0] sm:$0xff]
    %v345 = vld [vmem:[#allocation5 + $0x6f8] sm:$0xff]
    %v346 = vld [vmem:[#allocation5 + $0x700] sm:$0xff]
    %v347 = vld [vmem:[#allocation5 + $0x708] sm:$0xff]
    %v348 = vld [vmem:[#allocation5 + $0x710] sm:$0xff]
    %v349 = vld [vmem:[#allocation5 + $0x718] sm:$0xff]
    %v350 = vld [vmem:[#allocation5 + $0x720] sm:$0xff]
    %v351 = vld [vmem:[#allocation5 + $0x728] sm:$0xff]
    %v352 = vld [vmem:[#allocation5 + $0x730] sm:$0xff]
    %v353 = vld [vmem:[#allocation5 + $0x738] sm:$0xff]
    %v354 = vld [vmem:[#allocation5 + $0x740] sm:$0xff]
    %v355 = vld [vmem:[#allocation5 + $0x748] sm:$0xff]
    %v356 = vld [vmem:[#allocation5 + $0x750] sm:$0xff]
    %v357 = vld [vmem:[#allocation5 + $0x758] sm:$0xff]
    %v358 = vld [vmem:[#allocation5 + $0x760] sm:$0xff]
    %v359 = vld [vmem:[#allocation5 + $0x768] sm:$0xff]
    %v360 = vld [vmem:[#allocation5 + $0x770] sm:$0xff]
    %v361 = vld [vmem:[#allocation5 + $0x778] sm:$0xff]
    %v362 = vld [vmem:[#allocation5 + $0x780] sm:$0xff]
    %v363 = vld [vmem:[#allocation5 + $0x788] sm:$0xff]
    %v364 = vld [vmem:[#allocation5 + $0x790] sm:$0xff]
    %v365 = vld [vmem:[#allocation5 + $0x798] sm:$0xff]
    %v366 = vld [vmem:[#allocation5 + $0x7a0] sm:$0xff]
    %v367 = vld [vmem:[#allocation5 + $0x7a8] sm:$0xff]
    %v368 = vld [vmem:[#allocation5 + $0x7b0] sm:$0xff]
    %v369 = vld [vmem:[#allocation5 + $0x7b8] sm:$0xff]
    %v370 = vld [vmem:[#allocation5 + $0x7c0] sm:$0xff]
    %v371 = vld [vmem:[#allocation5 + $0x7c8] sm:$0xff]
    %v372 = vld [vmem:[#allocation5 + $0x7d0] sm:$0xff]
    %v373 = vld [vmem:[#allocation5 + $0x7d8] sm:$0xff]
    %v374 = vld [vmem:[#allocation5 + $0x7e0] sm:$0xff]
    %v375 = vld [vmem:[#allocation5 + $0x7e8] sm:$0xff]
    %v376 = vld [vmem:[#allocation5 + $0x7f0] sm:$0xff]
    %v377 = vld [vmem:[#allocation5 + $0x7f8] sm:$0xff]
    %v378 = vld [vmem:[#allocation5 + $0x800] sm:$0xff]
    %v379 = vld [vmem:[#allocation5 + $0x808] sm:$0xff]
    %v380 = vld [vmem:[#allocation5 + $0x810] sm:$0xff]
    %v381 = vld [vmem:[#allocation5 + $0x818] sm:$0xff]
    %v382 = vld [vmem:[#allocation5 + $0x820] sm:$0xff]
    %v383 = vld [vmem:[#allocation5 + $0x828] sm:$0xff]
    %v384 = vld [vmem:[#allocation5 + $0x830] sm:$0xff]
    %v385 = vld [vmem:[#allocation5 + $0x838] sm:$0xff]
    %v386 = vld [vmem:[#allocation5 + $0x840] sm:$0xff]
    %v387 = vld [vmem:[#allocation5 + $0x848] sm:$0xff]
    %v388 = vld [vmem:[#allocation5 + $0x850] sm:$0xff]
    %v389 = vld [vmem:[#allocation5 + $0x858] sm:$0xff]
    %v390 = vld [vmem:[#allocation5 + $0x860] sm:$0xff]
    %v391 = vld [vmem:[#allocation5 + $0x868] sm:$0xff]
    %v392 = vld [vmem:[#allocation5 + $0x870] sm:$0xff]
    %v393 = vld [vmem:[#allocation5 + $0x878] sm:$0xff]
    %v394 = vld [vmem:[#allocation5 + $0x880] sm:$0xff]
    %v395 = vld [vmem:[#allocation5 + $0x888] sm:$0xff]
    %v396 = vld [vmem:[#allocation5 + $0x890] sm:$0xff]
    %v397 = vld [vmem:[#allocation5 + $0x898] sm:$0xff]
    %v398 = vld [vmem:[#allocation5 + $0x8a0] sm:$0xff]
    %v399 = vld [vmem:[#allocation5 + $0x8a8] sm:$0xff]
    %v400 = vld [vmem:[#allocation5 + $0x8b0] sm:$0xff]
    %v401 = vld [vmem:[#allocation5 + $0x8b8] sm:$0xff]
    %v402 = vld [vmem:[#allocation5 + $0x8c0] sm:$0xff]
    %v403 = vld [vmem:[#allocation5 + $0x8c8] sm:$0xff]
    %v404 = vld [vmem:[#allocation5 + $0x8d0] sm:$0xff]
    %v405 = vld [vmem:[#allocation5 + $0x8d8] sm:$0xff]
    %v406 = vld [vmem:[#allocation5 + $0x8e0] sm:$0xff]
    %v407 = vld [vmem:[#allocation5 + $0x8e8] sm:$0xff]
    %v408 = vld [vmem:[#allocation5 + $0x8f0] sm:$0xff]
    %v409 = vld [vmem:[#allocation5 + $0x8f8] sm:$0xff]
    %v410 = vld [vmem:[#allocation5 + $0x900] sm:$0xff]
    %v411 = vld [vmem:[#allocation5 + $0x908] sm:$0xff]
    %v412 = vld [vmem:[#allocation5 + $0x910] sm:$0xff]
    %v413 = vld [vmem:[#allocation5 + $0x918] sm:$0xff]
    %v414 = vld [vmem:[#allocation5 + $0x920] sm:$0xff]
    %v415 = vld [vmem:[#allocation5 + $0x928] sm:$0xff]
    %v416 = vld [vmem:[#allocation5 + $0x930] sm:$0xff]
    %v417 = vld [vmem:[#allocation5 + $0x938] sm:$0xff]
    %v418 = vld [vmem:[#allocation5 + $0x940] sm:$0xff]
    %v419 = vld [vmem:[#allocation5 + $0x948] sm:$0xff]
    %v420 = vld [vmem:[#allocation5 + $0x950] sm:$0xff]
    %v421 = vld [vmem:[#allocation5 + $0x958] sm:$0xff]
    %v422 = vld [vmem:[#allocation5 + $0x960] sm:$0xff]
    %v423 = vld [vmem:[#allocation5 + $0x968] sm:$0xff]
    %v424 = vld [vmem:[#allocation5 + $0x970] sm:$0xff]
    %v425 = vld [vmem:[#allocation5 + $0x978] sm:$0xff]
    %v426 = vld [vmem:[#allocation5 + $0x980] sm:$0xff]
    %v427 = vld [vmem:[#allocation5 + $0x988] sm:$0xff]
    %v428 = vld [vmem:[#allocation5 + $0x990] sm:$0xff]
    %v429 = vld [vmem:[#allocation5 + $0x998] sm:$0xff]
    %v430 = vld [vmem:[#allocation5 + $0x9a0] sm:$0xff]
    %v431 = vld [vmem:[#allocation5 + $0x9a8] sm:$0xff]
    %v432 = vld [vmem:[#allocation5 + $0x9b0] sm:$0xff]
    %v433 = vld [vmem:[#allocation5 + $0x9b8] sm:$0xff]
    %v434 = vld [vmem:[#allocation5 + $0x9c0] sm:$0xff]
    %v435 = vld [vmem:[#allocation5 + $0x9c8] sm:$0xff]
    %v436 = vld [vmem:[#allocation5 + $0x9d0] sm:$0xff]
    %v437 = vld [vmem:[#allocation5 + $0x9d8] sm:$0xff]
    %v438 = vld [vmem:[#allocation5 + $0x9e0] sm:$0xff]
    %v439 = vld [vmem:[#allocation5 + $0x9e8] sm:$0xff]
    %v440 = vld [vmem:[#allocation5 + $0x9f0] sm:$0xff]
    %v441 = vld [vmem:[#allocation5 + $0x9f8] sm:$0xff]
    %v442 = vld [vmem:[#allocation5 + $0xa00] sm:$0xff]
    %v443 = vld [vmem:[#allocation5 + $0xa08] sm:$0xff]
    %v444 = vld [vmem:[#allocation5 + $0xa10] sm:$0xff]
    %v445 = vld [vmem:[#allocation5 + $0xa18] sm:$0xff]
    %v446 = vld [vmem:[#allocation5 + $0xa20] sm:$0xff]
    %v447 = vld [vmem:[#allocation5 + $0xa28] sm:$0xff]
    %v448 = vld [vmem:[#allocation5 + $0xa30] sm:$0xff]
    %v449 = vld [vmem:[#allocation5 + $0xa38] sm:$0xff]
    %v450 = vld [vmem:[#allocation5 + $0xa40] sm:$0xff]
    %v451 = vld [vmem:[#allocation5 + $0xa48] sm:$0xff]
    %v452 = vld [vmem:[#allocation5 + $0xa50] sm:$0xff]
    %v453 = vld [vmem:[#allocation5 + $0xa58] sm:$0xff]
    %v454 = vld [vmem:[#allocation5 + $0xa60] sm:$0xff]
    %v455 = vld [vmem:[#allocation5 + $0xa68] sm:$0xff]
    %v456 = vld [vmem:[#allocation5 + $0xa70] sm:$0xff]
    %v457 = vld [vmem:[#allocation5 + $0xa78] sm:$0xff]
    %v458 = vld [vmem:[#allocation5 + $0xa80] sm:$0xff]
    %v459 = vld [vmem:[#allocation5 + $0xa88] sm:$0xff]
    %v460 = vld [vmem:[#allocation5 + $0xa90] sm:$0xff]
    %v461 = vld [vmem:[#allocation5 + $0xa98] sm:$0xff]
    %v462 = vld [vmem:[#allocation5 + $0xaa0] sm:$0xff]
    %v463 = vld [vmem:[#allocation5 + $0xaa8] sm:$0xff]
    %v464 = vld [vmem:[#allocation5 + $0xab0] sm:$0xff]
    %v465 = vld [vmem:[#allocation5 + $0xab8] sm:$0xff]
    %v466 = vld [vmem:[#allocation5 + $0xac0] sm:$0xff]
    %v467 = vld [vmem:[#allocation5 + $0xac8] sm:$0xff]
    %v468 = vld [vmem:[#allocation5 + $0xad0] sm:$0xff]
    %v469 = vld [vmem:[#allocation5 + $0xad8] sm:$0xff]
    %v470 = vld [vmem:[#allocation5 + $0xae0] sm:$0xff]
    %v471 = vld [vmem:[#allocation5 + $0xae8] sm:$0xff]
    %v472 = vld [vmem:[#allocation5 + $0xaf0] sm:$0xff]
    %v473 = vld [vmem:[#allocation5 + $0xaf8] sm:$0xff]
    %v474 = vld [vmem:[#allocation5 + $0xb00] sm:$0xff]
    %v475 = vld [vmem:[#allocation5 + $0xb08] sm:$0xff]
    %v476 = vld [vmem:[#allocation5 + $0xb10] sm:$0xff]
    %v477 = vld [vmem:[#allocation5 + $0xb18] sm:$0xff]
    %v478 = vld [vmem:[#allocation5 + $0xb20] sm:$0xff]
    %v479 = vld [vmem:[#allocation5 + $0xb28] sm:$0xff]
    %v480 = vld [vmem:[#allocation5 + $0xb30] sm:$0xff]
    %v481 = vld [vmem:[#allocation5 + $0xb38] sm:$0xff]
    %v482 = vld [vmem:[#allocation5 + $0xb40] sm:$0xff]
    %v483 = vld [vmem:[#allocation5 + $0xb48] sm:$0xff]
    %v484 = vld [vmem:[#allocation5 + $0xb50] sm:$0xff]
    %v485 = vld [vmem:[#allocation5 + $0xb58] sm:$0xff]
    %v486 = vld [vmem:[#allocation5 + $0xb60] sm:$0xff]
    %v487 = vld [vmem:[#allocation5 + $0xb68] sm:$0xff]
    %v488 = vld [vmem:[#allocation5 + $0xb70] sm:$0xff]
    %v489 = vld [vmem:[#allocation5 + $0xb78] sm:$0xff]
    %v490 = vld [vmem:[#allocation5 + $0xb80] sm:$0xff]
    %v491 = vld [vmem:[#allocation5 + $0xb88] sm:$0xff]
    %v492 = vld [vmem:[#allocation5 + $0xb90] sm:$0xff]
    %v493 = vld [vmem:[#allocation5 + $0xb98] sm:$0xff]
    %v494 = vld [vmem:[#allocation5 + $0xba0] sm:$0xff]
    %v495 = vld [vmem:[#allocation5 + $0xba8] sm:$0xff]
    %v496 = vld [vmem:[#allocation5 + $0xbb0] sm:$0xff]
    %v497 = vld [vmem:[#allocation5 + $0xbb8] sm:$0xff]
    %v498 = vld [vmem:[#allocation5 + $0xbc0] sm:$0xff]
    %v499 = vld [vmem:[#allocation5 + $0xbc8] sm:$0xff]
    %v500 = vld [vmem:[#allocation5 + $0xbd0] sm:$0xff]
    %v501 = vld [vmem:[#allocation5 + $0xbd8] sm:$0xff]
    %v502 = vld [vmem:[#allocation5 + $0xbe0] sm:$0xff]
    %v503 = vld [vmem:[#allocation5 + $0xbe8] sm:$0xff]
    %v504 = vld [vmem:[#allocation5 + $0xbf0] sm:$0xff]
    %v505 = vld [vmem:[#allocation5 + $0xbf8] sm:$0xff]
    %v506 = vld [vmem:[#allocation5 + $0xc00] sm:$0xff]
    %v507 = vld [vmem:[#allocation5 + $0xc08] sm:$0xff]
    %v508 = vld [vmem:[#allocation5 + $0xc10] sm:$0xff]
    %v509 = vld [vmem:[#allocation5 + $0xc18] sm:$0xff]
    %v510 = vld [vmem:[#allocation5 + $0xc20] sm:$0xff]
    %v511 = vld [vmem:[#allocation5 + $0xc28] sm:$0xff]
    %v512 = vld [vmem:[#allocation5 + $0xc30] sm:$0xff]
    %v513 = vld [vmem:[#allocation5 + $0xc38] sm:$0xff]
    %v514 = vld [vmem:[#allocation5 + $0xc40] sm:$0xff]
    %v515 = vld [vmem:[#allocation5 + $0xc48] sm:$0xff]
    %v516 = vld [vmem:[#allocation5 + $0xc50] sm:$0xff]
    %v517 = vld [vmem:[#allocation5 + $0xc58] sm:$0xff]
    %v518 = vld [vmem:[#allocation5 + $0xc60] sm:$0xff]
    %v519 = vld [vmem:[#allocation5 + $0xc68] sm:$0xff]
    %v520 = vld [vmem:[#allocation5 + $0xc70] sm:$0xff]
    %v521 = vld [vmem:[#allocation5 + $0xc78] sm:$0xff]
    %v522 = vld [vmem:[#allocation5 + $0xc80] sm:$0xff]
    %v523 = vld [vmem:[#allocation5 + $0xc88] sm:$0xff]
    %v524 = vld [vmem:[#allocation5 + $0xc90] sm:$0xff]
    %v525 = vld [vmem:[#allocation5 + $0xc98] sm:$0xff]
    %v526 = vld [vmem:[#allocation5 + $0xca0] sm:$0xff]
    %v527 = vld [vmem:[#allocation5 + $0xca8] sm:$0xff]
    %v528 = vld [vmem:[#allocation5 + $0xcb0] sm:$0xff]
    %v529 = vld [vmem:[#allocation5 + $0xcb8] sm:$0xff]
    %v530 = vld [vmem:[#allocation5 + $0xcc0] sm:$0xff]
    %v531 = vld [vmem:[#allocation5 + $0xcc8] sm:$0xff]
    %v532 = vld [vmem:[#allocation5 + $0xcd0] sm:$0xff]
    %v533 = vld [vmem:[#allocation5 + $0xcd8] sm:$0xff]
    %v534 = vld [vmem:[#allocation5 + $0xce0] sm:$0xff]
    %v535 = vld [vmem:[#allocation5 + $0xce8] sm:$0xff]
    %v536 = vld [vmem:[#allocation5 + $0xcf0] sm:$0xff]
    %v537 = vld [vmem:[#allocation5 + $0xcf8] sm:$0xff]
    %v538 = vld [vmem:[#allocation5 + $0xd00] sm:$0xff]
    %v539 = vld [vmem:[#allocation5 + $0xd08] sm:$0xff]
    %v540 = vld [vmem:[#allocation5 + $0xd10] sm:$0xff]
    %v541 = vld [vmem:[#allocation5 + $0xd18] sm:$0xff]
    %v542 = vld [vmem:[#allocation5 + $0xd20] sm:$0xff]
    %v543 = vld [vmem:[#allocation5 + $0xd28] sm:$0xff]
    %v544 = vld [vmem:[#allocation5 + $0xd30] sm:$0xff]
    %v545 = vld [vmem:[#allocation5 + $0xd38] sm:$0xff]
    %v546 = vld [vmem:[#allocation5 + $0xd40] sm:$0xff]
    %v547 = vld [vmem:[#allocation5 + $0xd48] sm:$0xff]
    %v548 = vld [vmem:[#allocation5 + $0xd50] sm:$0xff]
    %v549 = vld [vmem:[#allocation5 + $0xd58] sm:$0xff]
    %v550 = vld [vmem:[#allocation5 + $0xd60] sm:$0xff]
    %v551 = vld [vmem:[#allocation5 + $0xd68] sm:$0xff]
    %v552 = vld [vmem:[#allocation5 + $0xd70] sm:$0xff]
    %v553 = vld [vmem:[#allocation5 + $0xd78] sm:$0xff]
    %v554 = vld [vmem:[#allocation5 + $0xd80] sm:$0xff]
    %v555 = vld [vmem:[#allocation5 + $0xd88] sm:$0xff]
    %v556 = vld [vmem:[#allocation5 + $0xd90] sm:$0xff]
    %v557 = vld [vmem:[#allocation5 + $0xd98] sm:$0xff]
    %v558 = vld [vmem:[#allocation5 + $0xda0] sm:$0xff]
    %v559 = vld [vmem:[#allocation5 + $0xda8] sm:$0xff]
    %v560 = vld [vmem:[#allocation5 + $0xdb0] sm:$0xff]
    %v561 = vld [vmem:[#allocation5 + $0xdb8] sm:$0xff]
    %v562 = vld [vmem:[#allocation5 + $0xdc0] sm:$0xff]
    %v563 = vld [vmem:[#allocation5 + $0xdc8] sm:$0xff]
    %v564 = vld [vmem:[#allocation5 + $0xdd0] sm:$0xff]
    %v565 = vld [vmem:[#allocation5 + $0xdd8] sm:$0xff]
    %v566 = vld [vmem:[#allocation5 + $0xde0] sm:$0xff]
    %v567 = vld [vmem:[#allocation5 + $0xde8] sm:$0xff]
    %v568 = vld [vmem:[#allocation5 + $0xdf0] sm:$0xff]
    %v569 = vld [vmem:[#allocation5 + $0xdf8] sm:$0xff]
    %v570 = vld [vmem:[#allocation5 + $0xe00] sm:$0xff]
    %v571 = vld [vmem:[#allocation5 + $0xe08] sm:$0xff]
    %v572 = vld [vmem:[#allocation5 + $0xe10] sm:$0xff]
    %v573 = vld [vmem:[#allocation5 + $0xe18] sm:$0xff]
    %v574 = vld [vmem:[#allocation5 + $0xe20] sm:$0xff]
    %v575 = vld [vmem:[#allocation5 + $0xe28] sm:$0xff]
    %v576 = vld [vmem:[#allocation5 + $0xe30] sm:$0xff]
    %v577 = vld [vmem:[#allocation5 + $0xe38] sm:$0xff]
    %v578 = vld [vmem:[#allocation5 + $0xe40] sm:$0xff]
    %v579 = vld [vmem:[#allocation5 + $0xe48] sm:$0xff]
    %v580 = vld [vmem:[#allocation5 + $0xe50] sm:$0xff]
    %v581 = vld [vmem:[#allocation5 + $0xe58] sm:$0xff]
    %v582 = vld [vmem:[#allocation5 + $0xe60] sm:$0xff]
    %v583 = vld [vmem:[#allocation5 + $0xe68] sm:$0xff]
    %v584 = vld [vmem:[#allocation5 + $0xe70] sm:$0xff]
    %v585 = vld [vmem:[#allocation5 + $0xe78] sm:$0xff]
    %v586 = vld [vmem:[#allocation5 + $0xe80] sm:$0xff]
    %v587 = vld [vmem:[#allocation5 + $0xe88] sm:$0xff]
    %v588 = vld [vmem:[#allocation5 + $0xe90] sm:$0xff]
    %v589 = vld [vmem:[#allocation5 + $0xe98] sm:$0xff]
    %v590 = vld [vmem:[#allocation5 + $0xea0] sm:$0xff]
    %v591 = vld [vmem:[#allocation5 + $0xea8] sm:$0xff]
    %v592 = vld [vmem:[#allocation5 + $0xeb0] sm:$0xff]
    %v593 = vld [vmem:[#allocation5 + $0xeb8] sm:$0xff]
    %v594 = vld [vmem:[#allocation5 + $0xec0] sm:$0xff]
    %v595 = vld [vmem:[#allocation5 + $0xec8] sm:$0xff]
    %v596 = vld [vmem:[#allocation5 + $0xed0] sm:$0xff]
    %v597 = vld [vmem:[#allocation5 + $0xed8] sm:$0xff]
    %v598 = vld [vmem:[#allocation5 + $0xee0] sm:$0xff]
    %v599 = vld [vmem:[#allocation5 + $0xee8] sm:$0xff]
    %v600 = vld [vmem:[#allocation5 + $0xef0] sm:$0xff]
    %v601 = vld [vmem:[#allocation5 + $0xef8] sm:$0xff]
    %v602 = vld [vmem:[#allocation5 + $0xf00] sm:$0xff]
    %v603 = vld [vmem:[#allocation5 + $0xf08] sm:$0xff]
    %v604 = vld [vmem:[#allocation5 + $0xf10] sm:$0xff]
    %v605 = vld [vmem:[#allocation5 + $0xf18] sm:$0xff]
    %v606 = vld [vmem:[#allocation5 + $0xf20] sm:$0xff]
    %v607 = vld [vmem:[#allocation5 + $0xf28] sm:$0xff]
    %v608 = vld [vmem:[#allocation5 + $0xf30] sm:$0xff]
    %v609 = vld [vmem:[#allocation5 + $0xf38] sm:$0xff]
    %v610 = vld [vmem:[#allocation5 + $0xf40] sm:$0xff]
    %v611 = vld [vmem:[#allocation5 + $0xf48] sm:$0xff]
    %v612 = vld [vmem:[#allocation5 + $0xf50] sm:$0xff]
    %v613 = vld [vmem:[#allocation5 + $0xf58] sm:$0xff]
    %v614 = vld [vmem:[#allocation5 + $0xf60] sm:$0xff]
    %v615 = vld [vmem:[#allocation5 + $0xf68] sm:$0xff]
    %v616 = vld [vmem:[#allocation5 + $0xf70] sm:$0xff]
    %v617 = vld [vmem:[#allocation5 + $0xf78] sm:$0xff]
    %v618 = vld [vmem:[#allocation5 + $0xf80] sm:$0xff]
    %v619 = vld [vmem:[#allocation5 + $0xf88] sm:$0xff]
    %v620 = vld [vmem:[#allocation5 + $0xf90] sm:$0xff]
    %v621 = vld [vmem:[#allocation5 + $0xf98] sm:$0xff]
    %v622 = vld [vmem:[#allocation5 + $0xfa0] sm:$0xff]
    %v623 = vld [vmem:[#allocation5 + $0xfa8] sm:$0xff]
    %v624 = vld [vmem:[#allocation5 + $0xfb0] sm:$0xff]
    %v625 = vld [vmem:[#allocation5 + $0xfb8] sm:$0xff]
    %v626 = vld [vmem:[#allocation5 + $0xfc0] sm:$0xff]
    %v627 = vld [vmem:[#allocation5 + $0xfc8] sm:$0xff]
    %v628 = vld [vmem:[#allocation5 + $0xfd0] sm:$0xff]
    %v629 = vld [vmem:[#allocation5 + $0xfd8] sm:$0xff]
    %v630 = vld [vmem:[#allocation5 + $0xfe0] sm:$0xff]
    %v631 = vld [vmem:[#allocation5 + $0xfe8] sm:$0xff]
    %v632 = vld [vmem:[#allocation5 + $0xff0] sm:$0xff]
    %v633 = vld [vmem:[#allocation5 + $0xff8] sm:$0xff]
    %v634 = vld [vmem:[#allocation5 + $0x1000] sm:$0xff]
    %v635 = vld [vmem:[#allocation5 + $0x1008] sm:$0xff]
    %v636 = vld [vmem:[#allocation5 + $0x1010] sm:$0xff]
    %v637 = vld [vmem:[#allocation5 + $0x1018] sm:$0xff]
    %v638 = vld [vmem:[#allocation5 + $0x1020] sm:$0xff]
    %v639 = vld [vmem:[#allocation5 + $0x1028] sm:$0xff]
    %v640 = vld [vmem:[#allocation5 + $0x1030] sm:$0xff]
    %v641 = vld [vmem:[#allocation5 + $0x1038] sm:$0xff]
    %v642 = vld [vmem:[#allocation5 + $0x1040] sm:$0xff]
    %v643 = vld [vmem:[#allocation5 + $0x1048] sm:$0xff]
    %v644 = vld [vmem:[#allocation5 + $0x1050] sm:$0xff]
    %v645 = vld [vmem:[#allocation5 + $0x1058] sm:$0xff]
    %v646 = vld [vmem:[#allocation5 + $0x1060] sm:$0xff]
    %v647 = vld [vmem:[#allocation5 + $0x1068] sm:$0xff]
    %v648 = vld [vmem:[#allocation5 + $0x1070] sm:$0xff]
    %v649 = vld [vmem:[#allocation5 + $0x1078] sm:$0xff]
    %v650 = vld [vmem:[#allocation5 + $0x1080] sm:$0xff]
    %v651 = vld [vmem:[#allocation5 + $0x1088] sm:$0xff]
    %v652 = vld [vmem:[#allocation5 + $0x1090] sm:$0xff]
    %v653 = vld [vmem:[#allocation5 + $0x1098] sm:$0xff]
    %v654 = vld [vmem:[#allocation5 + $0x10a0] sm:$0xff]
    %v655 = vld [vmem:[#allocation5 + $0x10a8] sm:$0xff]
    %v656 = vld [vmem:[#allocation5 + $0x10b0] sm:$0xff]
    %v657 = vld [vmem:[#allocation5 + $0x10b8] sm:$0xff]
    %v658 = vld [vmem:[#allocation5 + $0x10c0] sm:$0xff]
    %v659 = vld [vmem:[#allocation5 + $0x10c8] sm:$0xff]
    %v660 = vld [vmem:[#allocation5 + $0x10d0] sm:$0xff]
    %v661 = vld [vmem:[#allocation5 + $0x10d8] sm:$0xff]
    %v662 = vld [vmem:[#allocation5 + $0x10e0] sm:$0xff]
    %v663 = vld [vmem:[#allocation5 + $0x10e8] sm:$0xff]
    %v664 = vld [vmem:[#allocation5 + $0x10f0] sm:$0xff]
    %v665 = vld [vmem:[#allocation5 + $0x10f8] sm:$0xff]
    %v666 = vld [vmem:[#allocation5 + $0x1100] sm:$0xff]
    %v667 = vld [vmem:[#allocation5 + $0x1108] sm:$0xff]
    %v668 = vld [vmem:[#allocation5 + $0x1110] sm:$0xff]
    %v669 = vld [vmem:[#allocation5 + $0x1118] sm:$0xff]
    %v670 = vld [vmem:[#allocation5 + $0x1120] sm:$0xff]
    %v671 = vld [vmem:[#allocation5 + $0x1128] sm:$0xff]
    %v672 = vld [vmem:[#allocation5 + $0x1130] sm:$0xff]
    %v673 = vld [vmem:[#allocation5 + $0x1138] sm:$0xff]
    %v674 = vld [vmem:[#allocation5 + $0x1140] sm:$0xff]
    %v675 = vld [vmem:[#allocation5 + $0x1148] sm:$0xff]
    %v676 = vld [vmem:[#allocation5 + $0x1150] sm:$0xff]
    %v677 = vld [vmem:[#allocation5 + $0x1158] sm:$0xff]
    %v678 = vld [vmem:[#allocation5 + $0x1160] sm:$0xff]
    %v679 = vld [vmem:[#allocation5 + $0x1168] sm:$0xff]
    %v680 = vld [vmem:[#allocation5 + $0x1170] sm:$0xff]
    %v681 = vld [vmem:[#allocation5 + $0x1178] sm:$0xff]
    %v682 = vld [vmem:[#allocation5 + $0x1180] sm:$0xff]
    %v683 = vld [vmem:[#allocation5 + $0x1188] sm:$0xff]
    %v684 = vld [vmem:[#allocation5 + $0x1190] sm:$0xff]
    %v685 = vld [vmem:[#allocation5 + $0x1198] sm:$0xff]
    %v686 = vld [vmem:[#allocation5 + $0x11a0] sm:$0xff]
    %v687 = vld [vmem:[#allocation5 + $0x11a8] sm:$0xff]
    %v688 = vld [vmem:[#allocation5 + $0x11b0] sm:$0xff]
    %v689 = vld [vmem:[#allocation5 + $0x11b8] sm:$0xff]
    %v690 = vld [vmem:[#allocation5 + $0x11c0] sm:$0xff]
    %v691 = vld [vmem:[#allocation5 + $0x11c8] sm:$0xff]
    %v692 = vld [vmem:[#allocation5 + $0x11d0] sm:$0xff]
    %v693 = vld [vmem:[#allocation5 + $0x11d8] sm:$0xff]
    %v694 = vld [vmem:[#allocation5 + $0x11e0] sm:$0xff]
    %v695 = vld [vmem:[#allocation5 + $0x11e8] sm:$0xff]
    %v696 = vld [vmem:[#allocation5 + $0x11f0] sm:$0xff]
    %v697 = vld [vmem:[#allocation5 + $0x11f8] sm:$0xff]
    %v698 = vpack.c.bf16 %v134, %v122
    %v699 = vpack.c.bf16 %v135, %v123
    %v700 = vpack.c.bf16 %v136, %v124
    %v701 = vpack.c.bf16 %v137, %v125
    %v702 = vpack.c.bf16 %v138, %v126
    %v703 = vpack.c.bf16 %v139, %v127
    %v704 = vpack.c.bf16 %v140, %v128
    %v705 = vpack.c.bf16 %v141, %v129
    %v706 = vpack.c.bf16 %v142, %v130
    %v707 = vpack.c.bf16 %v143, %v131
    %v708 = vpack.c.bf16 %v144, %v132
    %v709 = vpack.c.bf16 %v145, %v133
    %v710 = vpack.c.bf16 %v158, %v146
    %v711 = vpack.c.bf16 %v159, %v147
    %v712 = vpack.c.bf16 %v160, %v148
    %v713 = vpack.c.bf16 %v161, %v149
    %v714 = vpack.c.bf16 %v162, %v150
    %v715 = vpack.c.bf16 %v163, %v151
    %v716 = vpack.c.bf16 %v164, %v152
    %v717 = vpack.c.bf16 %v165, %v153
    %v718 = vpack.c.bf16 %v166, %v154
    %v719 = vpack.c.bf16 %v167, %v155
    %v720 = vpack.c.bf16 %v168, %v156
    %v721 = vpack.c.bf16 %v169, %v157
    %v722 = vpack.c.bf16 %v182, %v170
    %v723 = vpack.c.bf16 %v183, %v171
    %v724 = vpack.c.bf16 %v184, %v172
    %v725 = vpack.c.bf16 %v185, %v173
    %v726 = vpack.c.bf16 %v186, %v174
    %v727 = vpack.c.bf16 %v187, %v175
    %v728 = vpack.c.bf16 %v188, %v176
    %v729 = vpack.c.bf16 %v189, %v177
    %v730 = vpack.c.bf16 %v190, %v178
    %v731 = vpack.c.bf16 %v191, %v179
    %v732 = vpack.c.bf16 %v192, %v180
    %v733 = vpack.c.bf16 %v193, %v181
    %v734 = vpack.c.bf16 %v206, %v194
    %v735 = vpack.c.bf16 %v207, %v195
    %v736 = vpack.c.bf16 %v208, %v196
    %v737 = vpack.c.bf16 %v209, %v197
    %v738 = vpack.c.bf16 %v210, %v198
    %v739 = vpack.c.bf16 %v211, %v199
    %v740 = vpack.c.bf16 %v212, %v200
    %v741 = vpack.c.bf16 %v213, %v201
    %v742 = vpack.c.bf16 %v214, %v202
    %v743 = vpack.c.bf16 %v215, %v203
    %v744 = vpack.c.bf16 %v216, %v204
    %v745 = vpack.c.bf16 %v217, %v205
    %v746 = vpack.c.bf16 %v230, %v218
    %v747 = vpack.c.bf16 %v231, %v219
    %v748 = vpack.c.bf16 %v232, %v220
    %v749 = vpack.c.bf16 %v233, %v221
    %v750 = vpack.c.bf16 %v234, %v222
    %v751 = vpack.c.bf16 %v235, %v223
    %v752 = vpack.c.bf16 %v236, %v224
    %v753 = vpack.c.bf16 %v237, %v225
    %v754 = vpack.c.bf16 %v238, %v226
    %v755 = vpack.c.bf16 %v239, %v227
    %v756 = vpack.c.bf16 %v240, %v228
    %v757 = vpack.c.bf16 %v241, %v229
    %v758 = vpack.c.bf16 %v254, %v242
    %v759 = vpack.c.bf16 %v255, %v243
    %v760 = vpack.c.bf16 %v256, %v244
    %v761 = vpack.c.bf16 %v257, %v245
    %v762 = vpack.c.bf16 %v258, %v246
    %v763 = vpack.c.bf16 %v259, %v247
    %v764 = vpack.c.bf16 %v260, %v248
    %v765 = vpack.c.bf16 %v261, %v249
    %v766 = vpack.c.bf16 %v262, %v250
    %v767 = vpack.c.bf16 %v263, %v251
    %v768 = vpack.c.bf16 %v264, %v252
    %v769 = vpack.c.bf16 %v265, %v253
    %v770 = vpack.c.bf16 %v278, %v266
    %v771 = vpack.c.bf16 %v279, %v267
    %v772 = vpack.c.bf16 %v280, %v268
    %v773 = vpack.c.bf16 %v281, %v269
    %v774 = vpack.c.bf16 %v282, %v270
    %v775 = vpack.c.bf16 %v283, %v271
    %v776 = vpack.c.bf16 %v284, %v272
    %v777 = vpack.c.bf16 %v285, %v273
    %v778 = vpack.c.bf16 %v286, %v274
    %v779 = vpack.c.bf16 %v287, %v275
    %v780 = vpack.c.bf16 %v288, %v276
    %v781 = vpack.c.bf16 %v289, %v277
    %v782 = vpack.c.bf16 %v302, %v290
    %v783 = vpack.c.bf16 %v303, %v291
    %v784 = vpack.c.bf16 %v304, %v292
    %v785 = vpack.c.bf16 %v305, %v293
    %v786 = vpack.c.bf16 %v306, %v294
    %v787 = vpack.c.bf16 %v307, %v295
    %v788 = vpack.c.bf16 %v308, %v296
    %v789 = vpack.c.bf16 %v309, %v297
    %v790 = vpack.c.bf16 %v310, %v298
    %v791 = vpack.c.bf16 %v311, %v299
    %v792 = vpack.c.bf16 %v312, %v300
    %v793 = vpack.c.bf16 %v313, %v301
    %v794 = vpack.c.bf16 %v326, %v314
    %v795 = vpack.c.bf16 %v327, %v315
    %v796 = vpack.c.bf16 %v328, %v316
    %v797 = vpack.c.bf16 %v329, %v317
    %v798 = vpack.c.bf16 %v330, %v318
    %v799 = vpack.c.bf16 %v331, %v319
    %v800 = vpack.c.bf16 %v332, %v320
    %v801 = vpack.c.bf16 %v333, %v321
    %v802 = vpack.c.bf16 %v334, %v322
    %v803 = vpack.c.bf16 %v335, %v323
    %v804 = vpack.c.bf16 %v336, %v324
    %v805 = vpack.c.bf16 %v337, %v325
    %v806 = vpack.c.bf16 %v350, %v338
    %v807 = vpack.c.bf16 %v351, %v339
    %v808 = vpack.c.bf16 %v352, %v340
    %v809 = vpack.c.bf16 %v353, %v341
    %v810 = vpack.c.bf16 %v354, %v342
    %v811 = vpack.c.bf16 %v355, %v343
    %v812 = vpack.c.bf16 %v356, %v344
    %v813 = vpack.c.bf16 %v357, %v345
    %v814 = vpack.c.bf16 %v358, %v346
    %v815 = vpack.c.bf16 %v359, %v347
    %v816 = vpack.c.bf16 %v360, %v348
    %v817 = vpack.c.bf16 %v361, %v349
    %v818 = vpack.c.bf16 %v374, %v362
    %v819 = vpack.c.bf16 %v375, %v363
    %v820 = vpack.c.bf16 %v376, %v364
    %v821 = vpack.c.bf16 %v377, %v365
    %v822 = vpack.c.bf16 %v378, %v366
    %v823 = vpack.c.bf16 %v379, %v367
    %v824 = vpack.c.bf16 %v380, %v368
    %v825 = vpack.c.bf16 %v381, %v369
    %v826 = vpack.c.bf16 %v382, %v370
    %v827 = vpack.c.bf16 %v383, %v371
    %v828 = vpack.c.bf16 %v384, %v372
    %v829 = vpack.c.bf16 %v385, %v373
    %v830 = vpack.c.bf16 %v398, %v386
    %v831 = vpack.c.bf16 %v399, %v387
    %v832 = vpack.c.bf16 %v400, %v388
    %v833 = vpack.c.bf16 %v401, %v389
    %v834 = vpack.c.bf16 %v402, %v390
    %v835 = vpack.c.bf16 %v403, %v391
    %v836 = vpack.c.bf16 %v404, %v392
    %v837 = vpack.c.bf16 %v405, %v393
    %v838 = vpack.c.bf16 %v406, %v394
    %v839 = vpack.c.bf16 %v407, %v395
    %v840 = vpack.c.bf16 %v408, %v396
    %v841 = vpack.c.bf16 %v409, %v397
    %v842 = vpack.c.bf16 %v422, %v410
    %v843 = vpack.c.bf16 %v423, %v411
    %v844 = vpack.c.bf16 %v424, %v412
    %v845 = vpack.c.bf16 %v425, %v413
    %v846 = vpack.c.bf16 %v426, %v414
    %v847 = vpack.c.bf16 %v427, %v415
    %v848 = vpack.c.bf16 %v428, %v416
    %v849 = vpack.c.bf16 %v429, %v417
    %v850 = vpack.c.bf16 %v430, %v418
    %v851 = vpack.c.bf16 %v431, %v419
    %v852 = vpack.c.bf16 %v432, %v420
    %v853 = vpack.c.bf16 %v433, %v421
    %v854 = vpack.c.bf16 %v446, %v434
    %v855 = vpack.c.bf16 %v447, %v435
    %v856 = vpack.c.bf16 %v448, %v436
    %v857 = vpack.c.bf16 %v449, %v437
    %v858 = vpack.c.bf16 %v450, %v438
    %v859 = vpack.c.bf16 %v451, %v439
    %v860 = vpack.c.bf16 %v452, %v440
    %v861 = vpack.c.bf16 %v453, %v441
    %v862 = vpack.c.bf16 %v454, %v442
    %v863 = vpack.c.bf16 %v455, %v443
    %v864 = vpack.c.bf16 %v456, %v444
    %v865 = vpack.c.bf16 %v457, %v445
    %v866 = vpack.c.bf16 %v470, %v458
    %v867 = vpack.c.bf16 %v471, %v459
    %v868 = vpack.c.bf16 %v472, %v460
    %v869 = vpack.c.bf16 %v473, %v461
    %v870 = vpack.c.bf16 %v474, %v462
    %v871 = vpack.c.bf16 %v475, %v463
    %v872 = vpack.c.bf16 %v476, %v464
    %v873 = vpack.c.bf16 %v477, %v465
    %v874 = vpack.c.bf16 %v478, %v466
    %v875 = vpack.c.bf16 %v479, %v467
    %v876 = vpack.c.bf16 %v480, %v468
    %v877 = vpack.c.bf16 %v481, %v469
    %v878 = vpack.c.bf16 %v494, %v482
    %v879 = vpack.c.bf16 %v495, %v483
    %v880 = vpack.c.bf16 %v496, %v484
    %v881 = vpack.c.bf16 %v497, %v485
    %v882 = vpack.c.bf16 %v498, %v486
    %v883 = vpack.c.bf16 %v499, %v487
    %v884 = vpack.c.bf16 %v500, %v488
    %v885 = vpack.c.bf16 %v501, %v489
    %v886 = vpack.c.bf16 %v502, %v490
    %v887 = vpack.c.bf16 %v503, %v491
    %v888 = vpack.c.bf16 %v504, %v492
    %v889 = vpack.c.bf16 %v505, %v493
    %v890 = vpack.c.bf16 %v518, %v506
    %v891 = vpack.c.bf16 %v519, %v507
    %v892 = vpack.c.bf16 %v520, %v508
    %v893 = vpack.c.bf16 %v521, %v509
    %v894 = vpack.c.bf16 %v522, %v510
    %v895 = vpack.c.bf16 %v523, %v511
    %v896 = vpack.c.bf16 %v524, %v512
    %v897 = vpack.c.bf16 %v525, %v513
    %v898 = vpack.c.bf16 %v526, %v514
    %v899 = vpack.c.bf16 %v527, %v515
    %v900 = vpack.c.bf16 %v528, %v516
    %v901 = vpack.c.bf16 %v529, %v517
    %v902 = vpack.c.bf16 %v542, %v530
    %v903 = vpack.c.bf16 %v543, %v531
    %v904 = vpack.c.bf16 %v544, %v532
    %v905 = vpack.c.bf16 %v545, %v533
    %v906 = vpack.c.bf16 %v546, %v534
    %v907 = vpack.c.bf16 %v547, %v535
    %v908 = vpack.c.bf16 %v548, %v536
    %v909 = vpack.c.bf16 %v549, %v537
    %v910 = vpack.c.bf16 %v550, %v538
    %v911 = vpack.c.bf16 %v551, %v539
    %v912 = vpack.c.bf16 %v552, %v540
    %v913 = vpack.c.bf16 %v553, %v541
    %v914 = vpack.c.bf16 %v566, %v554
    %v915 = vpack.c.bf16 %v567, %v555
    %v916 = vpack.c.bf16 %v568, %v556
    %v917 = vpack.c.bf16 %v569, %v557
    %v918 = vpack.c.bf16 %v570, %v558
    %v919 = vpack.c.bf16 %v571, %v559
    %v920 = vpack.c.bf16 %v572, %v560
    %v921 = vpack.c.bf16 %v573, %v561
    %v922 = vpack.c.bf16 %v574, %v562
    %v923 = vpack.c.bf16 %v575, %v563
    %v924 = vpack.c.bf16 %v576, %v564
    %v925 = vpack.c.bf16 %v577, %v565
    %v926 = vpack.c.bf16 %v590, %v578
    %v927 = vpack.c.bf16 %v591, %v579
    %v928 = vpack.c.bf16 %v592, %v580
    %v929 = vpack.c.bf16 %v593, %v581
    %v930 = vpack.c.bf16 %v594, %v582
    %v931 = vpack.c.bf16 %v595, %v583
    %v932 = vpack.c.bf16 %v596, %v584
    %v933 = vpack.c.bf16 %v597, %v585
    %v934 = vpack.c.bf16 %v598, %v586
    %v935 = vpack.c.bf16 %v599, %v587
    %v936 = vpack.c.bf16 %v600, %v588
    %v937 = vpack.c.bf16 %v601, %v589
    %v938 = vpack.c.bf16 %v614, %v602
    %v939 = vpack.c.bf16 %v615, %v603
    %v940 = vpack.c.bf16 %v616, %v604
    %v941 = vpack.c.bf16 %v617, %v605
    %v942 = vpack.c.bf16 %v618, %v606
    %v943 = vpack.c.bf16 %v619, %v607
    %v944 = vpack.c.bf16 %v620, %v608
    %v945 = vpack.c.bf16 %v621, %v609
    %v946 = vpack.c.bf16 %v622, %v610
    %v947 = vpack.c.bf16 %v623, %v611
    %v948 = vpack.c.bf16 %v624, %v612
    %v949 = vpack.c.bf16 %v625, %v613
    %v950 = vpack.c.bf16 %v638, %v626
    %v951 = vpack.c.bf16 %v639, %v627
    %v952 = vpack.c.bf16 %v640, %v628
    %v953 = vpack.c.bf16 %v641, %v629
    %v954 = vpack.c.bf16 %v642, %v630
    %v955 = vpack.c.bf16 %v643, %v631
    %v956 = vpack.c.bf16 %v644, %v632
    %v957 = vpack.c.bf16 %v645, %v633
    %v958 = vpack.c.bf16 %v646, %v634
    %v959 = vpack.c.bf16 %v647, %v635
    %v960 = vpack.c.bf16 %v648, %v636
    %v961 = vpack.c.bf16 %v649, %v637
    %v962 = vpack.c.bf16 %v662, %v650
    %v963 = vpack.c.bf16 %v663, %v651
    %v964 = vpack.c.bf16 %v664, %v652
    %v965 = vpack.c.bf16 %v665, %v653
    %v966 = vpack.c.bf16 %v666, %v654
    %v967 = vpack.c.bf16 %v667, %v655
    %v968 = vpack.c.bf16 %v668, %v656
    %v969 = vpack.c.bf16 %v669, %v657
    %v970 = vpack.c.bf16 %v670, %v658
    %v971 = vpack.c.bf16 %v671, %v659
    %v972 = vpack.c.bf16 %v672, %v660
    %v973 = vpack.c.bf16 %v673, %v661
    %v974 = vpack.c.bf16 %v686, %v674
    %v975 = vpack.c.bf16 %v687, %v675
    %v976 = vpack.c.bf16 %v688, %v676
    %v977 = vpack.c.bf16 %v689, %v677
    %v978 = vpack.c.bf16 %v690, %v678
    %v979 = vpack.c.bf16 %v691, %v679
    %v980 = vpack.c.bf16 %v692, %v680
    %v981 = vpack.c.bf16 %v693, %v681
    %v982 = vpack.c.bf16 %v694, %v682
    %v983 = vpack.c.bf16 %v695, %v683
    %v984 = vpack.c.bf16 %v696, %v684
    %v985 = vpack.c.bf16 %v697, %v685
    %v986 = vld [vmem:[#allocation7] sm:$0xff]
    %v987 = vld [vmem:[#allocation7 + $0x8] sm:$0xf]
    %v990 = vlaneseq
    %v991 = vshrl.u32 %v990, 7
    %v992 = vsub.s32 0, %v991
    %v993 = vrot.slane %v986, %v992
    %v994 = vlaneseq
    %v995 = vshrl.u32 %v994, 7
    %v996 = vsub.s32 1, %v995
    %v997 = vrot.slane %v986, %v996
    %v998 = vlaneseq
    %v999 = vshrl.u32 %v998, 7
    %v1000 = vsub.s32 2, %v999
    %v1001 = vrot.slane %v986, %v1000
    %v1002 = vlaneseq
    %v1003 = vshrl.u32 %v1002, 7
    %v1004 = vsub.s32 3, %v1003
    %v1005 = vrot.slane %v986, %v1004
    %v1006 = vlaneseq
    %v1007 = vshrl.u32 %v1006, 7
    %v1008 = vsub.s32 4, %v1007
    %v1009 = vrot.slane %v986, %v1008
    %v1010 = vlaneseq
    %v1011 = vshrl.u32 %v1010, 7
    %v1012 = vsub.s32 5, %v1011
    %v1013 = vrot.slane %v986, %v1012
    %v1014 = vlaneseq
    %v1015 = vshrl.u32 %v1014, 7
    %v1016 = vsub.s32 6, %v1015
    %v1017 = vrot.slane %v986, %v1016
    %v1018 = vlaneseq
    %v1019 = vshrl.u32 %v1018, 7
    %v1020 = vsub.s32 7, %v1019
    %v1021 = vrot.slane %v986, %v1020
    %v1022 = vlaneseq
    %v1023 = vshrl.u32 %v1022, 7
    %v1024 = vsub.s32 0, %v1023
    %v1025 = vrot.slane %v987, %v1024
    %v1026 = vlaneseq
    %v1027 = vshrl.u32 %v1026, 7
    %v1028 = vsub.s32 1, %v1027
    %v1029 = vrot.slane %v987, %v1028
    %v1030 = vlaneseq
    %v1031 = vshrl.u32 %v1030, 7
    %v1032 = vsub.s32 2, %v1031
    %v1033 = vrot.slane %v987, %v1032
    %v1034 = vlaneseq
    %v1035 = vshrl.u32 %v1034, 7
    %v1036 = vsub.s32 3, %v1035
    %v1037 = vrot.slane %v987, %v1036
    %1050 = vmatprep.subr.bf16.mxu0 %v783
    %1051 = vmatpush1.bf16.msra.mxu0 %v782
    %1052 = vmatprep.subr.bf16.mxu0 %v771
    %1053 = vmatpush1.bf16.msra.mxu0 %v770
    %1054 = vmatprep.subr.bf16.mxu0 %v759
    %1055 = vmatpush1.bf16.msra.mxu0 %v758
    %1056 = vmatprep.subr.bf16.mxu0 %v747
    %1057 = vmatpush1.bf16.msra.mxu0 %v746
    %1058 = vmatprep.subr.bf16.mxu0 %v735
    %1059 = vmatpush1.bf16.msra.mxu0 %v734
    %1060 = vmatprep.subr.bf16.mxu0 %v723
    %1061 = vmatpush1.bf16.msra.mxu0 %v722
    %1062 = vmatprep.subr.bf16.mxu0 %v711
    %1063 = vmatpush1.bf16.msra.mxu0 %v710
    %1064 = vmatprep.subr.bf16.mxu0 %v699
    %1065 = vmatpush1.bf16.msra.mxu0 %v698
    %1066 = vmatprep.subr.bf16.mxu0 %v879
    %1067 = vmatpush2.bf16.msra.mxu0 %v878
    %1068 = vmatprep.subr.bf16.mxu0 %v867
    %1069 = vmatpush2.bf16.msra.mxu0 %v866
    %1070 = vmatprep.subr.bf16.mxu0 %v855
    %1071 = vmatpush2.bf16.msra.mxu0 %v854
    %1072 = vmatprep.subr.bf16.mxu0 %v843
    %1073 = vmatpush2.bf16.msra.mxu0 %v842
    %1074 = vmatprep.subr.bf16.mxu0 %v831
    %1075 = vmatpush2.bf16.msra.mxu0 %v830
    %1076 = vmatprep.subr.bf16.mxu0 %v819
    %1077 = vmatpush2.bf16.msra.mxu0 %v818
    %1078 = vmatprep.subr.bf16.mxu0 %v807
    %1079 = vmatpush2.bf16.msra.mxu0 %v806
    %1080 = vmatprep.subr.bf16.mxu0 %v795
    %1081 = vmatpush2.bf16.msra.mxu0 %v794
    %1082 = vmatprep.mubr.bf16.mxu0 %v120
    %1083 = vmatmul.mubr.bf16.gmra.mxu0 %v119
    %v1084 = vpop.f32.mrf.mxu0
    %v1085 = vadd.f32 %v993, %v1084
    %v1086 = vpop.f32.mrf.mxu0
    %v1087 = vadd.f32 %v997, %v1086
    %v1088 = vpop.f32.mrf.mxu0
    %v1089 = vadd.f32 %v993, %v1088
    %v1090 = vpop.f32.mrf.mxu0
    %v1091 = vadd.f32 %v997, %v1090
    %1092 = vdwg.mxu0
    %1093 = vmatprep.subr.bf16.mxu0 %v975
    %1094 = vmatpush1.bf16.msra.mxu0 %v974
    %1095 = vmatprep.subr.bf16.mxu0 %v963
    %1096 = vmatpush1.bf16.msra.mxu0 %v962
    %1097 = vmatprep.subr.bf16.mxu0 %v951
    %1098 = vmatpush1.bf16.msra.mxu0 %v950
    %1099 = vmatprep.subr.bf16.mxu0 %v939
    %1100 = vmatpush1.bf16.msra.mxu0 %v938
    %1101 = vmatprep.subr.bf16.mxu0 %v927
    %1102 = vmatpush1.bf16.msra.mxu0 %v926
    %1103 = vmatprep.subr.bf16.mxu0 %v915
    %1104 = vmatpush1.bf16.msra.mxu0 %v914
    %1105 = vmatprep.subr.bf16.mxu0 %v903
    %1106 = vmatpush1.bf16.msra.mxu0 %v902
    %1107 = vmatprep.subr.bf16.mxu0 %v891
    %1108 = vmatpush1.bf16.msra.mxu0 %v890
    %1109 = vmatprep.subr.bf16.mxu0 0
    %1110 = vmatpush2.bf16.msra.mxu0 0
    %1111 = vmatprep.subr.bf16.mxu0 0
    %1112 = vmatpush2.bf16.msra.mxu0 0
    %1113 = vmatprep.subr.bf16.mxu0 0
    %1114 = vmatpush2.bf16.msra.mxu0 0
    %1115 = vmatprep.subr.bf16.mxu0 0
    %1116 = vmatpush2.bf16.msra.mxu0 0
    %1117 = vmatprep.subr.bf16.mxu0 0
    %1118 = vmatpush2.bf16.msra.mxu0 0
    %1119 = vmatprep.subr.bf16.mxu0 0
    %1120 = vmatpush2.bf16.msra.mxu0 0
    %1121 = vmatprep.subr.bf16.mxu0 0
    %1122 = vmatpush2.bf16.msra.mxu0 0
    %1123 = vmatprep.subr.bf16.mxu0 0
    %1124 = vmatpush2.bf16.msra.mxu0 0
    %1125 = vmatprep.mubr.bf16.mxu0 0
    %1126 = vmatmul.mubr.bf16.gmra.mxu0 %v121
    %v1127 = vpop.f32.mrf.mxu0
    %v1128 = vadd.f32 %v1085, %v1127
    %v1129 = vpop.f32.mrf.mxu0
    %v1130 = vadd.f32 %v1087, %v1129
    %v1131 = vpop.f32.mrf.mxu0
    %v1132 = vadd.f32 %v1089, %v1131
    %v1133 = vpop.f32.mrf.mxu0
    %v1134 = vadd.f32 %v1091, %v1133
    %1135 = vdwg.mxu0
    %1136 = vmatprep.subr.bf16.mxu0 %v785
    %1137 = vmatpush1.bf16.msra.mxu0 %v784
    %1138 = vmatprep.subr.bf16.mxu0 %v773
    %1139 = vmatpush1.bf16.msra.mxu0 %v772
    %1140 = vmatprep.subr.bf16.mxu0 %v761
    %1141 = vmatpush1.bf16.msra.mxu0 %v760
    %1142 = vmatprep.subr.bf16.mxu0 %v749
    %1143 = vmatpush1.bf16.msra.mxu0 %v748
    %1144 = vmatprep.subr.bf16.mxu0 %v737
    %1145 = vmatpush1.bf16.msra.mxu0 %v736
    %1146 = vmatprep.subr.bf16.mxu0 %v725
    %1147 = vmatpush1.bf16.msra.mxu0 %v724
    %1148 = vmatprep.subr.bf16.mxu0 %v713
    %1149 = vmatpush1.bf16.msra.mxu0 %v712
    %1150 = vmatprep.subr.bf16.mxu0 %v701
    %1151 = vmatpush1.bf16.msra.mxu0 %v700
    %1152 = vmatprep.subr.bf16.mxu0 %v881
    %1153 = vmatpush2.bf16.msra.mxu0 %v880
    %1154 = vmatprep.subr.bf16.mxu0 %v869
    %1155 = vmatpush2.bf16.msra.mxu0 %v868
    %1156 = vmatprep.subr.bf16.mxu0 %v857
    %1157 = vmatpush2.bf16.msra.mxu0 %v856
    %1158 = vmatprep.subr.bf16.mxu0 %v845
    %1159 = vmatpush2.bf16.msra.mxu0 %v844
    %1160 = vmatprep.subr.bf16.mxu0 %v833
    %1161 = vmatpush2.bf16.msra.mxu0 %v832
    %1162 = vmatprep.subr.bf16.mxu0 %v821
    %1163 = vmatpush2.bf16.msra.mxu0 %v820
    %1164 = vmatprep.subr.bf16.mxu0 %v809
    %1165 = vmatpush2.bf16.msra.mxu0 %v808
    %1166 = vmatprep.subr.bf16.mxu0 %v797
    %1167 = vmatpush2.bf16.msra.mxu0 %v796
    %1168 = vmatprep.mubr.bf16.mxu0 %v120
    %1169 = vmatmul.mubr.bf16.gmra.mxu0 %v119
    %v1170 = vpop.f32.mrf.mxu0
    %v1171 = vadd.f32 %v1001, %v1170
    %v1172 = vpop.f32.mrf.mxu0
    %v1173 = vadd.f32 %v1005, %v1172
    %v1174 = vpop.f32.mrf.mxu0
    %v1175 = vadd.f32 %v1001, %v1174
    %v1176 = vpop.f32.mrf.mxu0
    %v1177 = vadd.f32 %v1005, %v1176
    %1178 = vdwg.mxu0
    %1179 = vmatprep.subr.bf16.mxu0 %v977
    %1180 = vmatpush1.bf16.msra.mxu0 %v976
    %1181 = vmatprep.subr.bf16.mxu0 %v965
    %1182 = vmatpush1.bf16.msra.mxu0 %v964
    %1183 = vmatprep.subr.bf16.mxu0 %v953
    %1184 = vmatpush1.bf16.msra.mxu0 %v952
    %1185 = vmatprep.subr.bf16.mxu0 %v941
    %1186 = vmatpush1.bf16.msra.mxu0 %v940
    %1187 = vmatprep.subr.bf16.mxu0 %v929
    %1188 = vmatpush1.bf16.msra.mxu0 %v928
    %1189 = vmatprep.subr.bf16.mxu0 %v917
    %1190 = vmatpush1.bf16.msra.mxu0 %v916
    %1191 = vmatprep.subr.bf16.mxu0 %v905
    %1192 = vmatpush1.bf16.msra.mxu0 %v904
    %1193 = vmatprep.subr.bf16.mxu0 %v893
    %1194 = vmatpush1.bf16.msra.mxu0 %v892
    %1195 = vmatprep.subr.bf16.mxu0 0
    %1196 = vmatpush2.bf16.msra.mxu0 0
    %1197 = vmatprep.subr.bf16.mxu0 0
    %1198 = vmatpush2.bf16.msra.mxu0 0
    %1199 = vmatprep.subr.bf16.mxu0 0
    %1200 = vmatpush2.bf16.msra.mxu0 0
    %1201 = vmatprep.subr.bf16.mxu0 0
    %1202 = vmatpush2.bf16.msra.mxu0 0
    %1203 = vmatprep.subr.bf16.mxu0 0
    %1204 = vmatpush2.bf16.msra.mxu0 0
    %1205 = vmatprep.subr.bf16.mxu0 0
    %1206 = vmatpush2.bf16.msra.mxu0 0
    %1207 = vmatprep.subr.bf16.mxu0 0
    %1208 = vmatpush2.bf16.msra.mxu0 0
    %1209 = vmatprep.subr.bf16.mxu0 0
    %1210 = vmatpush2.bf16.msra.mxu0 0
    %1211 = vmatprep.mubr.bf16.mxu0 0
    %1212 = vmatmul.mubr.bf16.gmra.mxu0 %v121
    %v1213 = vpop.f32.mrf.mxu0
    %v1214 = vadd.f32 %v1171, %v1213
    %v1215 = vpop.f32.mrf.mxu0
    %v1216 = vadd.f32 %v1173, %v1215
    %v1217 = vpop.f32.mrf.mxu0
    %v1218 = vadd.f32 %v1175, %v1217
    %v1219 = vpop.f32.mrf.mxu0
    %v1220 = vadd.f32 %v1177, %v1219
    %1221 = vdwg.mxu0
    %1222 = vmatprep.subr.bf16.mxu0 %v787
    %1223 = vmatpush1.bf16.msra.mxu0 %v786
    %1224 = vmatprep.subr.bf16.mxu0 %v775
    %1225 = vmatpush1.bf16.msra.mxu0 %v774
    %1226 = vmatprep.subr.bf16.mxu0 %v763
    %1227 = vmatpush1.bf16.msra.mxu0 %v762
    %1228 = vmatprep.subr.bf16.mxu0 %v751
    %1229 = vmatpush1.bf16.msra.mxu0 %v750
    %1230 = vmatprep.subr.bf16.mxu0 %v739
    %1231 = vmatpush1.bf16.msra.mxu0 %v738
    %1232 = vmatprep.subr.bf16.mxu0 %v727
    %1233 = vmatpush1.bf16.msra.mxu0 %v726
    %1234 = vmatprep.subr.bf16.mxu0 %v715
    %1235 = vmatpush1.bf16.msra.mxu0 %v714
    %1236 = vmatprep.subr.bf16.mxu0 %v703
    %1237 = vmatpush1.bf16.msra.mxu0 %v702
    %1238 = vmatprep.subr.bf16.mxu0 %v883
    %1239 = vmatpush2.bf16.msra.mxu0 %v882
    %1240 = vmatprep.subr.bf16.mxu0 %v871
    %1241 = vmatpush2.bf16.msra.mxu0 %v870
    %1242 = vmatprep.subr.bf16.mxu0 %v859
    %1243 = vmatpush2.bf16.msra.mxu0 %v858
    %1244 = vmatprep.subr.bf16.mxu0 %v847
    %1245 = vmatpush2.bf16.msra.mxu0 %v846
    %1246 = vmatprep.subr.bf16.mxu0 %v835
    %1247 = vmatpush2.bf16.msra.mxu0 %v834
    %1248 = vmatprep.subr.bf16.mxu0 %v823
    %1249 = vmatpush2.bf16.msra.mxu0 %v822
    %1250 = vmatprep.subr.bf16.mxu0 %v811
    %1251 = vmatpush2.bf16.msra.mxu0 %v810
    %1252 = vmatprep.subr.bf16.mxu0 %v799
    %1253 = vmatpush2.bf16.msra.mxu0 %v798
    %1254 = vmatprep.mubr.bf16.mxu0 %v120
    %1255 = vmatmul.mubr.bf16.gmra.mxu0 %v119
    %v1256 = vpop.f32.mrf.mxu0
    %v1257 = vadd.f32 %v1009, %v1256
    %v1258 = vpop.f32.mrf.mxu0
    %v1259 = vadd.f32 %v1013, %v1258
    %v1260 = vpop.f32.mrf.mxu0
    %v1261 = vadd.f32 %v1009, %v1260
    %v1262 = vpop.f32.mrf.mxu0
    %v1263 = vadd.f32 %v1013, %v1262
    %1264 = vdwg.mxu0
    %1265 = vmatprep.subr.bf16.mxu0 %v979
    %1266 = vmatpush1.bf16.msra.mxu0 %v978
    %1267 = vmatprep.subr.bf16.mxu0 %v967
    %1268 = vmatpush1.bf16.msra.mxu0 %v966
    %1269 = vmatprep.subr.bf16.mxu0 %v955
    %1270 = vmatpush1.bf16.msra.mxu0 %v954
    %1271 = vmatprep.subr.bf16.mxu0 %v943
    %1272 = vmatpush1.bf16.msra.mxu0 %v942
    %1273 = vmatprep.subr.bf16.mxu0 %v931
    %1274 = vmatpush1.bf16.msra.mxu0 %v930
    %1275 = vmatprep.subr.bf16.mxu0 %v919
    %1276 = vmatpush1.bf16.msra.mxu0 %v918
    %1277 = vmatprep.subr.bf16.mxu0 %v907
    %1278 = vmatpush1.bf16.msra.mxu0 %v906
    %1279 = vmatprep.subr.bf16.mxu0 %v895
    %1280 = vmatpush1.bf16.msra.mxu0 %v894
    %1281 = vmatprep.subr.bf16.mxu0 0
    %1282 = vmatpush2.bf16.msra.mxu0 0
    %1283 = vmatprep.subr.bf16.mxu0 0
    %1284 = vmatpush2.bf16.msra.mxu0 0
    %1285 = vmatprep.subr.bf16.mxu0 0
    %1286 = vmatpush2.bf16.msra.mxu0 0
    %1287 = vmatprep.subr.bf16.mxu0 0
    %1288 = vmatpush2.bf16.msra.mxu0 0
    %1289 = vmatprep.subr.bf16.mxu0 0
    %1290 = vmatpush2.bf16.msra.mxu0 0
    %1291 = vmatprep.subr.bf16.mxu0 0
    %1292 = vmatpush2.bf16.msra.mxu0 0
    %1293 = vmatprep.subr.bf16.mxu0 0
    %1294 = vmatpush2.bf16.msra.mxu0 0
    %1295 = vmatprep.subr.bf16.mxu0 0
    %1296 = vmatpush2.bf16.msra.mxu0 0
    %1297 = vmatprep.mubr.bf16.mxu0 0
    %1298 = vmatmul.mubr.bf16.gmra.mxu0 %v121
    %v1299 = vpop.f32.mrf.mxu0
    %v1300 = vadd.f32 %v1257, %v1299
    %v1301 = vpop.f32.mrf.mxu0
    %v1302 = vadd.f32 %v1259, %v1301
    %v1303 = vpop.f32.mrf.mxu0
    %v1304 = vadd.f32 %v1261, %v1303
    %v1305 = vpop.f32.mrf.mxu0
    %v1306 = vadd.f32 %v1263, %v1305
    %1307 = vdwg.mxu0
    %1308 = vmatprep.subr.bf16.mxu0 %v789
    %1309 = vmatpush1.bf16.msra.mxu0 %v788
    %1310 = vmatprep.subr.bf16.mxu0 %v777
    %1311 = vmatpush1.bf16.msra.mxu0 %v776
    %1312 = vmatprep.subr.bf16.mxu0 %v765
    %1313 = vmatpush1.bf16.msra.mxu0 %v764
    %1314 = vmatprep.subr.bf16.mxu0 %v753
    %1315 = vmatpush1.bf16.msra.mxu0 %v752
    %1316 = vmatprep.subr.bf16.mxu0 %v741
    %1317 = vmatpush1.bf16.msra.mxu0 %v740
    %1318 = vmatprep.subr.bf16.mxu0 %v729
    %1319 = vmatpush1.bf16.msra.mxu0 %v728
    %1320 = vmatprep.subr.bf16.mxu0 %v717
    %1321 = vmatpush1.bf16.msra.mxu0 %v716
    %1322 = vmatprep.subr.bf16.mxu0 %v705
    %1323 = vmatpush1.bf16.msra.mxu0 %v704
    %1324 = vmatprep.subr.bf16.mxu0 %v885
    %1325 = vmatpush2.bf16.msra.mxu0 %v884
    %1326 = vmatprep.subr.bf16.mxu0 %v873
    %1327 = vmatpush2.bf16.msra.mxu0 %v872
    %1328 = vmatprep.subr.bf16.mxu0 %v861
    %1329 = vmatpush2.bf16.msra.mxu0 %v860
    %1330 = vmatprep.subr.bf16.mxu0 %v849
    %1331 = vmatpush2.bf16.msra.mxu0 %v848
    %1332 = vmatprep.subr.bf16.mxu0 %v837
    %1333 = vmatpush2.bf16.msra.mxu0 %v836
    %1334 = vmatprep.subr.bf16.mxu0 %v825
    %1335 = vmatpush2.bf16.msra.mxu0 %v824
    %1336 = vmatprep.subr.bf16.mxu0 %v813
    %1337 = vmatpush2.bf16.msra.mxu0 %v812
    %1338 = vmatprep.subr.bf16.mxu0 %v801
    %1339 = vmatpush2.bf16.msra.mxu0 %v800
    %1340 = vmatprep.mubr.bf16.mxu0 %v120
    %1341 = vmatmul.mubr.bf16.gmra.mxu0 %v119
    %v1342 = vpop.f32.mrf.mxu0
    %v1343 = vadd.f32 %v1017, %v1342
    %v1344 = vpop.f32.mrf.mxu0
    %v1345 = vadd.f32 %v1021, %v1344
    %v1346 = vpop.f32.mrf.mxu0
    %v1347 = vadd.f32 %v1017, %v1346
    %v1348 = vpop.f32.mrf.mxu0
    %v1349 = vadd.f32 %v1021, %v1348
    %1350 = vdwg.mxu0
    %1351 = vmatprep.subr.bf16.mxu0 %v981
    %1352 = vmatpush1.bf16.msra.mxu0 %v980
    %1353 = vmatprep.subr.bf16.mxu0 %v969
    %1354 = vmatpush1.bf16.msra.mxu0 %v968
    %1355 = vmatprep.subr.bf16.mxu0 %v957
    %1356 = vmatpush1.bf16.msra.mxu0 %v956
    %1357 = vmatprep.subr.bf16.mxu0 %v945
    %1358 = vmatpush1.bf16.msra.mxu0 %v944
    %1359 = vmatprep.subr.bf16.mxu0 %v933
    %1360 = vmatpush1.bf16.msra.mxu0 %v932
    %1361 = vmatprep.subr.bf16.mxu0 %v921
    %1362 = vmatpush1.bf16.msra.mxu0 %v920
    %1363 = vmatprep.subr.bf16.mxu0 %v909
    %1364 = vmatpush1.bf16.msra.mxu0 %v908
    %1365 = vmatprep.subr.bf16.mxu0 %v897
    %1366 = vmatpush1.bf16.msra.mxu0 %v896
    %1367 = vmatprep.subr.bf16.mxu0 0
    %1368 = vmatpush2.bf16.msra.mxu0 0
    %1369 = vmatprep.subr.bf16.mxu0 0
    %1370 = vmatpush2.bf16.msra.mxu0 0
    %1371 = vmatprep.subr.bf16.mxu0 0
    %1372 = vmatpush2.bf16.msra.mxu0 0
    %1373 = vmatprep.subr.bf16.mxu0 0
    %1374 = vmatpush2.bf16.msra.mxu0 0
    %1375 = vmatprep.subr.bf16.mxu0 0
    %1376 = vmatpush2.bf16.msra.mxu0 0
    %1377 = vmatprep.subr.bf16.mxu0 0
    %1378 = vmatpush2.bf16.msra.mxu0 0
    %1379 = vmatprep.subr.bf16.mxu0 0
    %1380 = vmatpush2.bf16.msra.mxu0 0
    %1381 = vmatprep.subr.bf16.mxu0 0
    %1382 = vmatpush2.bf16.msra.mxu0 0
    %1383 = vmatprep.mubr.bf16.mxu0 0
    %1384 = vmatmul.mubr.bf16.gmra.mxu0 %v121
    %v1385 = vpop.f32.mrf.mxu0
    %v1386 = vadd.f32 %v1343, %v1385
    %v1387 = vpop.f32.mrf.mxu0
    %v1388 = vadd.f32 %v1345, %v1387
    %v1389 = vpop.f32.mrf.mxu0
    %v1390 = vadd.f32 %v1347, %v1389
    %v1391 = vpop.f32.mrf.mxu0
    %v1392 = vadd.f32 %v1349, %v1391
    %1393 = vdwg.mxu0
    %1394 = vmatprep.subr.bf16.mxu0 %v791
    %1395 = vmatpush1.bf16.msra.mxu0 %v790
    %1396 = vmatprep.subr.bf16.mxu0 %v779
    %1397 = vmatpush1.bf16.msra.mxu0 %v778
    %1398 = vmatprep.subr.bf16.mxu0 %v767
    %1399 = vmatpush1.bf16.msra.mxu0 %v766
    %1400 = vmatprep.subr.bf16.mxu0 %v755
    %1401 = vmatpush1.bf16.msra.mxu0 %v754
    %1402 = vmatprep.subr.bf16.mxu0 %v743
    %1403 = vmatpush1.bf16.msra.mxu0 %v742
    %1404 = vmatprep.subr.bf16.mxu0 %v731
    %1405 = vmatpush1.bf16.msra.mxu0 %v730
    %1406 = vmatprep.subr.bf16.mxu0 %v719
    %1407 = vmatpush1.bf16.msra.mxu0 %v718
    %1408 = vmatprep.subr.bf16.mxu0 %v707
    %1409 = vmatpush1.bf16.msra.mxu0 %v706
    %1410 = vmatprep.subr.bf16.mxu0 %v887
    %1411 = vmatpush2.bf16.msra.mxu0 %v886
    %1412 = vmatprep.subr.bf16.mxu0 %v875
    %1413 = vmatpush2.bf16.msra.mxu0 %v874
    %1414 = vmatprep.subr.bf16.mxu0 %v863
    %1415 = vmatpush2.bf16.msra.mxu0 %v862
    %1416 = vmatprep.subr.bf16.mxu0 %v851
    %1417 = vmatpush2.bf16.msra.mxu0 %v850
    %1418 = vmatprep.subr.bf16.mxu0 %v839
    %1419 = vmatpush2.bf16.msra.mxu0 %v838
    %1420 = vmatprep.subr.bf16.mxu0 %v827
    %1421 = vmatpush2.bf16.msra.mxu0 %v826
    %1422 = vmatprep.subr.bf16.mxu0 %v815
    %1423 = vmatpush2.bf16.msra.mxu0 %v814
    %1424 = vmatprep.subr.bf16.mxu0 %v803
    %1425 = vmatpush2.bf16.msra.mxu0 %v802
    %1426 = vmatprep.mubr.bf16.mxu0 %v120
    %1427 = vmatmul.mubr.bf16.gmra.mxu0 %v119
    %v1428 = vpop.f32.mrf.mxu0
    %v1429 = vadd.f32 %v1025, %v1428
    %v1430 = vpop.f32.mrf.mxu0
    %v1431 = vadd.f32 %v1029, %v1430
    %v1432 = vpop.f32.mrf.mxu0
    %v1433 = vadd.f32 %v1025, %v1432
    %v1434 = vpop.f32.mrf.mxu0
    %v1435 = vadd.f32 %v1029, %v1434
    %1436 = vdwg.mxu0
    %1437 = vmatprep.subr.bf16.mxu0 %v983
    %1438 = vmatpush1.bf16.msra.mxu0 %v982
    %1439 = vmatprep.subr.bf16.mxu0 %v971
    %1440 = vmatpush1.bf16.msra.mxu0 %v970
    %1441 = vmatprep.subr.bf16.mxu0 %v959
    %1442 = vmatpush1.bf16.msra.mxu0 %v958
    %1443 = vmatprep.subr.bf16.mxu0 %v947
    %1444 = vmatpush1.bf16.msra.mxu0 %v946
    %1445 = vmatprep.subr.bf16.mxu0 %v935
    %1446 = vmatpush1.bf16.msra.mxu0 %v934
    %1447 = vmatprep.subr.bf16.mxu0 %v923
    %1448 = vmatpush1.bf16.msra.mxu0 %v922
    %1449 = vmatprep.subr.bf16.mxu0 %v911
    %1450 = vmatpush1.bf16.msra.mxu0 %v910
    %1451 = vmatprep.subr.bf16.mxu0 %v899
    %1452 = vmatpush1.bf16.msra.mxu0 %v898
    %1453 = vmatprep.subr.bf16.mxu0 0
    %1454 = vmatpush2.bf16.msra.mxu0 0
    %1455 = vmatprep.subr.bf16.mxu0 0
    %1456 = vmatpush2.bf16.msra.mxu0 0
    %1457 = vmatprep.subr.bf16.mxu0 0
    %1458 = vmatpush2.bf16.msra.mxu0 0
    %1459 = vmatprep.subr.bf16.mxu0 0
    %1460 = vmatpush2.bf16.msra.mxu0 0
    %1461 = vmatprep.subr.bf16.mxu0 0
    %1462 = vmatpush2.bf16.msra.mxu0 0
    %1463 = vmatprep.subr.bf16.mxu0 0
    %1464 = vmatpush2.bf16.msra.mxu0 0
    %1465 = vmatprep.subr.bf16.mxu0 0
    %1466 = vmatpush2.bf16.msra.mxu0 0
    %1467 = vmatprep.subr.bf16.mxu0 0
    %1468 = vmatpush2.bf16.msra.mxu0 0
    %1469 = vmatprep.mubr.bf16.mxu0 0
    %1470 = vmatmul.mubr.bf16.gmra.mxu0 %v121
    %v1471 = vpop.f32.mrf.mxu0
    %v1472 = vadd.f32 %v1429, %v1471
    %v1473 = vpop.f32.mrf.mxu0
    %v1474 = vadd.f32 %v1431, %v1473
    %v1475 = vpop.f32.mrf.mxu0
    %v1476 = vadd.f32 %v1433, %v1475
    %v1477 = vpop.f32.mrf.mxu0
    %v1478 = vadd.f32 %v1435, %v1477
    %1479 = vdwg.mxu0
    %1480 = vmatprep.subr.bf16.mxu0 %v793
    %1481 = vmatpush1.bf16.msra.mxu0 %v792
    %1482 = vmatprep.subr.bf16.mxu0 %v781
    %1483 = vmatpush1.bf16.msra.mxu0 %v780
    %1484 = vmatprep.subr.bf16.mxu0 %v769
    %1485 = vmatpush1.bf16.msra.mxu0 %v768
    %1486 = vmatprep.subr.bf16.mxu0 %v757
    %1487 = vmatpush1.bf16.msra.mxu0 %v756
    %1488 = vmatprep.subr.bf16.mxu0 %v745
    %1489 = vmatpush1.bf16.msra.mxu0 %v744
    %1490 = vmatprep.subr.bf16.mxu0 %v733
    %1491 = vmatpush1.bf16.msra.mxu0 %v732
    %1492 = vmatprep.subr.bf16.mxu0 %v721
    %1493 = vmatpush1.bf16.msra.mxu0 %v720
    %1494 = vmatprep.subr.bf16.mxu0 %v709
    %1495 = vmatpush1.bf16.msra.mxu0 %v708
    %1496 = vmatprep.subr.bf16.mxu0 %v889
    %1497 = vmatpush2.bf16.msra.mxu0 %v888
    %1498 = vmatprep.subr.bf16.mxu0 %v877
    %1499 = vmatpush2.bf16.msra.mxu0 %v876
    %1500 = vmatprep.subr.bf16.mxu0 %v865
    %1501 = vmatpush2.bf16.msra.mxu0 %v864
    %1502 = vmatprep.subr.bf16.mxu0 %v853
    %1503 = vmatpush2.bf16.msra.mxu0 %v852
    %1504 = vmatprep.subr.bf16.mxu0 %v841
    %1505 = vmatpush2.bf16.msra.mxu0 %v840
    %1506 = vmatprep.subr.bf16.mxu0 %v829
    %1507 = vmatpush2.bf16.msra.mxu0 %v828
    %1508 = vmatprep.subr.bf16.mxu0 %v817
    %1509 = vmatpush2.bf16.msra.mxu0 %v816
    %1510 = vmatprep.subr.bf16.mxu0 %v805
    %1511 = vmatpush2.bf16.msra.mxu0 %v804
    %1512 = vmatprep.mubr.bf16.mxu0 %v120
    %1513 = vmatmul.mubr.bf16.gmra.mxu0 %v119
    %v1514 = vpop.f32.mrf.mxu0
    %v1515 = vadd.f32 %v1033, %v1514
    %v1516 = vpop.f32.mrf.mxu0
    %v1517 = vadd.f32 %v1037, %v1516
    %v1518 = vpop.f32.mrf.mxu0
    %v1519 = vadd.f32 %v1033, %v1518
    %v1520 = vpop.f32.mrf.mxu0
    %v1521 = vadd.f32 %v1037, %v1520
    %1522 = vdwg.mxu0
    %1523 = vmatprep.subr.bf16.mxu0 %v985
    %1524 = vmatpush1.bf16.msra.mxu0 %v984
    %1525 = vmatprep.subr.bf16.mxu0 %v973
    %1526 = vmatpush1.bf16.msra.mxu0 %v972
    %1527 = vmatprep.subr.bf16.mxu0 %v961
    %1528 = vmatpush1.bf16.msra.mxu0 %v960
    %1529 = vmatprep.subr.bf16.mxu0 %v949
    %1530 = vmatpush1.bf16.msra.mxu0 %v948
    %1531 = vmatprep.subr.bf16.mxu0 %v937
    %1532 = vmatpush1.bf16.msra.mxu0 %v936
    %1533 = vmatprep.subr.bf16.mxu0 %v925
    %1534 = vmatpush1.bf16.msra.mxu0 %v924
    %1535 = vmatprep.subr.bf16.mxu0 %v913
    %1536 = vmatpush1.bf16.msra.mxu0 %v912
    %1537 = vmatprep.subr.bf16.mxu0 %v901
    %1538 = vmatpush1.bf16.msra.mxu0 %v900
    %1539 = vmatprep.subr.bf16.mxu0 0
    %1540 = vmatpush2.bf16.msra.mxu0 0
    %1541 = vmatprep.subr.bf16.mxu0 0
    %1542 = vmatpush2.bf16.msra.mxu0 0
    %1543 = vmatprep.subr.bf16.mxu0 0
    %1544 = vmatpush2.bf16.msra.mxu0 0
    %1545 = vmatprep.subr.bf16.mxu0 0
    %1546 = vmatpush2.bf16.msra.mxu0 0
    %1547 = vmatprep.subr.bf16.mxu0 0
    %1548 = vmatpush2.bf16.msra.mxu0 0
    %1549 = vmatprep.subr.bf16.mxu0 0
    %1550 = vmatpush2.bf16.msra.mxu0 0
    %1551 = vmatprep.subr.bf16.mxu0 0
    %1552 = vmatpush2.bf16.msra.mxu0 0
    %1553 = vmatprep.subr.bf16.mxu0 0
    %1554 = vmatpush2.bf16.msra.mxu0 0
    %1555 = vmatprep.mubr.bf16.mxu0 0
    %1556 = vmatmul.mubr.bf16.gmra.mxu0 %v121
    %v1557 = vpop.f32.mrf.mxu0
    %v1558 = vadd.f32 %v1515, %v1557
    %v1559 = vpop.f32.mrf.mxu0
    %v1560 = vadd.f32 %v1517, %v1559
    %v1561 = vpop.f32.mrf.mxu0
    %v1562 = vadd.f32 %v1519, %v1561
    %v1563 = vpop.f32.mrf.mxu0
    %v1564 = vadd.f32 %v1521, %v1563
    %1565 = vdwg.mxu0
    %v1566 = vmax.f32 %v1128, 0.0
    %v1567 = vmax.f32 %v1130, 0.0
    %v1568 = vmax.f32 %v1214, 0.0
    %v1569 = vmax.f32 %v1216, 0.0
    %v1570 = vmax.f32 %v1300, 0.0
    %v1571 = vmax.f32 %v1302, 0.0
    %v1572 = vmax.f32 %v1386, 0.0
    %v1573 = vmax.f32 %v1388, 0.0
    %v1574 = vmax.f32 %v1472, 0.0
    %v1575 = vmax.f32 %v1474, 0.0
    %v1576 = vmax.f32 %v1558, 0.0
    %v1577 = vmax.f32 %v1560, 0.0
    %v1578 = vmax.f32 %v1132, 0.0
    %v1579 = vmax.f32 %v1134, 0.0
    %v1580 = vmax.f32 %v1218, 0.0
    %v1581 = vmax.f32 %v1220, 0.0
    %v1582 = vmax.f32 %v1304, 0.0
    %v1583 = vmax.f32 %v1306, 0.0
    %v1584 = vmax.f32 %v1390, 0.0
    %v1585 = vmax.f32 %v1392, 0.0
    %v1586 = vmax.f32 %v1476, 0.0
    %v1587 = vmax.f32 %v1478, 0.0
    %v1588 = vmax.f32 %v1562, 0.0
    %v1589 = vmax.f32 %v1564, 0.0
    %v1590 = vld [vmem:[#allocation11] sm:$0xff]
    %v1591 = vld [vmem:[#allocation11 + $0x8] sm:$0xff]
    %v1592 = vld [vmem:[#allocation11 + $0x10] sm:$0xff]
    %v1593 = vld [vmem:[#allocation11 + $0x18] sm:$0xff]
    %v1594 = vld [vmem:[#allocation11 + $0x20] sm:$0xff]
    %v1595 = vld [vmem:[#allocation11 + $0x28] sm:$0xff]
    %v1596 = vpack.c.bf16 %v1578, %v1566
    %v1597 = vpack.c.bf16 %v1579, %v1567
    %v1598 = vpack.c.bf16 %v1580, %v1568
    %v1599 = vpack.c.bf16 %v1581, %v1569
    %v1600 = vpack.c.bf16 %v1582, %v1570
    %v1601 = vpack.c.bf16 %v1583, %v1571
    %v1602 = vpack.c.bf16 %v1584, %v1572
    %v1603 = vpack.c.bf16 %v1585, %v1573
    %v1604 = vpack.c.bf16 %v1586, %v1574
    %v1605 = vpack.c.bf16 %v1587, %v1575
    %v1606 = vpack.c.bf16 %v1588, %v1576
    %v1607 = vpack.c.bf16 %v1589, %v1577
    %v1608 = vld [vmem:[#allocation8] sm:$0xff]
    %v1609 = vld [vmem:[#allocation8 + $0x8] sm:$0xff]
    %v1610 = vld [vmem:[#allocation8 + $0x10] sm:$0xff]
    %v1611 = vld [vmem:[#allocation8 + $0x18] sm:$0xff]
    %v1612 = vld [vmem:[#allocation8 + $0x20] sm:$0xff]
    %v1613 = vld [vmem:[#allocation8 + $0x28] sm:$0xff]
    %v1614 = vld [vmem:[#allocation8 + $0x30] sm:$0xff]
    %v1615 = vld [vmem:[#allocation8 + $0x38] sm:$0xff]
    %v1616 = vld [vmem:[#allocation8 + $0x40] sm:$0xff]
    %v1617 = vld [vmem:[#allocation8 + $0x48] sm:$0xff]
    %v1618 = vld [vmem:[#allocation8 + $0x50] sm:$0xff]
    %v1619 = vld [vmem:[#allocation8 + $0x58] sm:$0xff]
    %v1620 = vld [vmem:[#allocation8 + $0x60] sm:$0xff]
    %v1621 = vld [vmem:[#allocation8 + $0x68] sm:$0xff]
    %v1622 = vld [vmem:[#allocation8 + $0x70] sm:$0xff]
    %v1623 = vld [vmem:[#allocation8 + $0x78] sm:$0xff]
    %v1624 = vld [vmem:[#allocation8 + $0x80] sm:$0xff]
    %v1625 = vld [vmem:[#allocation8 + $0x88] sm:$0xff]
    %v1626 = vld [vmem:[#allocation8 + $0x90] sm:$0xff]
    %v1627 = vld [vmem:[#allocation8 + $0x98] sm:$0xff]
    %v1628 = vld [vmem:[#allocation8 + $0xa0] sm:$0xff]
    %v1629 = vld [vmem:[#allocation8 + $0xa8] sm:$0xff]
    %v1630 = vld [vmem:[#allocation8 + $0xb0] sm:$0xff]
    %v1631 = vld [vmem:[#allocation8 + $0xb8] sm:$0xff]
    %v1632 = vld [vmem:[#allocation8 + $0xc0] sm:$0xff]
    %v1633 = vld [vmem:[#allocation8 + $0xc8] sm:$0xff]
    %v1634 = vld [vmem:[#allocation8 + $0xd0] sm:$0xff]
    %v1635 = vld [vmem:[#allocation8 + $0xd8] sm:$0xff]
    %v1636 = vld [vmem:[#allocation8 + $0xe0] sm:$0xff]
    %v1637 = vld [vmem:[#allocation8 + $0xe8] sm:$0xff]
    %v1638 = vld [vmem:[#allocation8 + $0xf0] sm:$0xff]
    %v1639 = vld [vmem:[#allocation8 + $0xf8] sm:$0xff]
    %v1640 = vld [vmem:[#allocation8 + $0x100] sm:$0xff]
    %v1641 = vld [vmem:[#allocation8 + $0x108] sm:$0xff]
    %v1642 = vld [vmem:[#allocation8 + $0x110] sm:$0xff]
    %v1643 = vld [vmem:[#allocation8 + $0x118] sm:$0xff]
    %v1644 = vld [vmem:[#allocation8 + $0x120] sm:$0xff]
    %v1645 = vld [vmem:[#allocation8 + $0x128] sm:$0xff]
    %v1646 = vld [vmem:[#allocation8 + $0x130] sm:$0xff]
    %v1647 = vld [vmem:[#allocation8 + $0x138] sm:$0xff]
    %v1648 = vld [vmem:[#allocation8 + $0x140] sm:$0xff]
    %v1649 = vld [vmem:[#allocation8 + $0x148] sm:$0xff]
    %v1650 = vld [vmem:[#allocation8 + $0x150] sm:$0xff]
    %v1651 = vld [vmem:[#allocation8 + $0x158] sm:$0xff]
    %v1652 = vld [vmem:[#allocation8 + $0x160] sm:$0xff]
    %v1653 = vld [vmem:[#allocation8 + $0x168] sm:$0xff]
    %v1654 = vld [vmem:[#allocation8 + $0x170] sm:$0xff]
    %v1655 = vld [vmem:[#allocation8 + $0x178] sm:$0xff]
    %v1656 = vld [vmem:[#allocation8 + $0x180] sm:$0xff]
    %v1657 = vld [vmem:[#allocation8 + $0x188] sm:$0xff]
    %v1658 = vld [vmem:[#allocation8 + $0x190] sm:$0xff]
    %v1659 = vld [vmem:[#allocation8 + $0x198] sm:$0xff]
    %v1660 = vld [vmem:[#allocation8 + $0x1a0] sm:$0xff]
    %v1661 = vld [vmem:[#allocation8 + $0x1a8] sm:$0xff]
    %v1662 = vld [vmem:[#allocation8 + $0x1b0] sm:$0xff]
    %v1663 = vld [vmem:[#allocation8 + $0x1b8] sm:$0xff]
    %v1664 = vld [vmem:[#allocation8 + $0x1c0] sm:$0xff]
    %v1665 = vld [vmem:[#allocation8 + $0x1c8] sm:$0xff]
    %v1666 = vld [vmem:[#allocation8 + $0x1d0] sm:$0xff]
    %v1667 = vld [vmem:[#allocation8 + $0x1d8] sm:$0xff]
    %v1668 = vld [vmem:[#allocation8 + $0x1e0] sm:$0xff]
    %v1669 = vld [vmem:[#allocation8 + $0x1e8] sm:$0xff]
    %v1670 = vld [vmem:[#allocation8 + $0x1f0] sm:$0xff]
    %v1671 = vld [vmem:[#allocation8 + $0x1f8] sm:$0xff]
    %v1672 = vld [vmem:[#allocation8 + $0x200] sm:$0xff]
    %v1673 = vld [vmem:[#allocation8 + $0x208] sm:$0xff]
    %v1674 = vld [vmem:[#allocation8 + $0x210] sm:$0xff]
    %v1675 = vld [vmem:[#allocation8 + $0x218] sm:$0xff]
    %v1676 = vld [vmem:[#allocation8 + $0x220] sm:$0xff]
    %v1677 = vld [vmem:[#allocation8 + $0x228] sm:$0xff]
    %v1678 = vld [vmem:[#allocation8 + $0x230] sm:$0xff]
    %v1679 = vld [vmem:[#allocation8 + $0x238] sm:$0xff]
    %v1680 = vld [vmem:[#allocation8 + $0x240] sm:$0xff]
    %v1681 = vld [vmem:[#allocation8 + $0x248] sm:$0xff]
    %v1682 = vld [vmem:[#allocation8 + $0x250] sm:$0xff]
    %v1683 = vld [vmem:[#allocation8 + $0x258] sm:$0xff]
    %v1684 = vld [vmem:[#allocation8 + $0x260] sm:$0xff]
    %v1685 = vld [vmem:[#allocation8 + $0x268] sm:$0xff]
    %v1686 = vld [vmem:[#allocation8 + $0x270] sm:$0xff]
    %v1687 = vld [vmem:[#allocation8 + $0x278] sm:$0xff]
    %v1688 = vld [vmem:[#allocation8 + $0x280] sm:$0xff]
    %v1689 = vld [vmem:[#allocation8 + $0x288] sm:$0xff]
    %v1690 = vld [vmem:[#allocation8 + $0x290] sm:$0xff]
    %v1691 = vld [vmem:[#allocation8 + $0x298] sm:$0xff]
    %v1692 = vld [vmem:[#allocation8 + $0x2a0] sm:$0xff]
    %v1693 = vld [vmem:[#allocation8 + $0x2a8] sm:$0xff]
    %v1694 = vld [vmem:[#allocation8 + $0x2b0] sm:$0xff]
    %v1695 = vld [vmem:[#allocation8 + $0x2b8] sm:$0xff]
    %v1696 = vld [vmem:[#allocation8 + $0x2c0] sm:$0xff]
    %v1697 = vld [vmem:[#allocation8 + $0x2c8] sm:$0xff]
    %v1698 = vld [vmem:[#allocation8 + $0x2d0] sm:$0xff]
    %v1699 = vld [vmem:[#allocation8 + $0x2d8] sm:$0xff]
    %v1700 = vld [vmem:[#allocation8 + $0x2e0] sm:$0xff]
    %v1701 = vld [vmem:[#allocation8 + $0x2e8] sm:$0xff]
    %v1702 = vld [vmem:[#allocation8 + $0x2f0] sm:$0xff]
    %v1703 = vld [vmem:[#allocation8 + $0x2f8] sm:$0xff]
    %v1704 = vld [vmem:[#allocation8 + $0x300] sm:$0xff]
    %v1705 = vld [vmem:[#allocation8 + $0x308] sm:$0xff]
    %v1706 = vld [vmem:[#allocation8 + $0x310] sm:$0xff]
    %v1707 = vld [vmem:[#allocation8 + $0x318] sm:$0xff]
    %v1708 = vld [vmem:[#allocation8 + $0x320] sm:$0xff]
    %v1709 = vld [vmem:[#allocation8 + $0x328] sm:$0xff]
    %v1710 = vld [vmem:[#allocation8 + $0x330] sm:$0xff]
    %v1711 = vld [vmem:[#allocation8 + $0x338] sm:$0xff]
    %v1712 = vld [vmem:[#allocation8 + $0x340] sm:$0xff]
    %v1713 = vld [vmem:[#allocation8 + $0x348] sm:$0xff]
    %v1714 = vld [vmem:[#allocation8 + $0x350] sm:$0xff]
    %v1715 = vld [vmem:[#allocation8 + $0x358] sm:$0xff]
    %v1716 = vld [vmem:[#allocation8 + $0x360] sm:$0xff]
    %v1717 = vld [vmem:[#allocation8 + $0x368] sm:$0xff]
    %v1718 = vld [vmem:[#allocation8 + $0x370] sm:$0xff]
    %v1719 = vld [vmem:[#allocation8 + $0x378] sm:$0xff]
    %v1720 = vld [vmem:[#allocation8 + $0x380] sm:$0xff]
    %v1721 = vld [vmem:[#allocation8 + $0x388] sm:$0xff]
    %v1722 = vld [vmem:[#allocation8 + $0x390] sm:$0xff]
    %v1723 = vld [vmem:[#allocation8 + $0x398] sm:$0xff]
    %v1724 = vld [vmem:[#allocation8 + $0x3a0] sm:$0xff]
    %v1725 = vld [vmem:[#allocation8 + $0x3a8] sm:$0xff]
    %v1726 = vld [vmem:[#allocation8 + $0x3b0] sm:$0xff]
    %v1727 = vld [vmem:[#allocation8 + $0x3b8] sm:$0xff]
    %v1728 = vld [vmem:[#allocation8 + $0x3c0] sm:$0xff]
    %v1729 = vld [vmem:[#allocation8 + $0x3c8] sm:$0xff]
    %v1730 = vld [vmem:[#allocation8 + $0x3d0] sm:$0xff]
    %v1731 = vld [vmem:[#allocation8 + $0x3d8] sm:$0xff]
    %v1732 = vld [vmem:[#allocation8 + $0x3e0] sm:$0xff]
    %v1733 = vld [vmem:[#allocation8 + $0x3e8] sm:$0xff]
    %v1734 = vld [vmem:[#allocation8 + $0x3f0] sm:$0xff]
    %v1735 = vld [vmem:[#allocation8 + $0x3f8] sm:$0xff]
    %v1736 = vld [vmem:[#allocation8 + $0x400] sm:$0xff]
    %v1737 = vld [vmem:[#allocation8 + $0x408] sm:$0xff]
    %v1738 = vld [vmem:[#allocation8 + $0x410] sm:$0xff]
    %v1739 = vld [vmem:[#allocation8 + $0x418] sm:$0xff]
    %v1740 = vld [vmem:[#allocation8 + $0x420] sm:$0xff]
    %v1741 = vld [vmem:[#allocation8 + $0x428] sm:$0xff]
    %v1742 = vld [vmem:[#allocation8 + $0x430] sm:$0xff]
    %v1743 = vld [vmem:[#allocation8 + $0x438] sm:$0xff]
    %v1744 = vld [vmem:[#allocation8 + $0x440] sm:$0xff]
    %v1745 = vld [vmem:[#allocation8 + $0x448] sm:$0xff]
    %v1746 = vld [vmem:[#allocation8 + $0x450] sm:$0xff]
    %v1747 = vld [vmem:[#allocation8 + $0x458] sm:$0xff]
    %v1748 = vld [vmem:[#allocation8 + $0x460] sm:$0xff]
    %v1749 = vld [vmem:[#allocation8 + $0x468] sm:$0xff]
    %v1750 = vld [vmem:[#allocation8 + $0x470] sm:$0xff]
    %v1751 = vld [vmem:[#allocation8 + $0x478] sm:$0xff]
    %v1752 = vld [vmem:[#allocation8 + $0x480] sm:$0xff]
    %v1753 = vld [vmem:[#allocation8 + $0x488] sm:$0xff]
    %v1754 = vld [vmem:[#allocation8 + $0x490] sm:$0xff]
    %v1755 = vld [vmem:[#allocation8 + $0x498] sm:$0xff]
    %v1756 = vld [vmem:[#allocation8 + $0x4a0] sm:$0xff]
    %v1757 = vld [vmem:[#allocation8 + $0x4a8] sm:$0xff]
    %v1758 = vld [vmem:[#allocation8 + $0x4b0] sm:$0xff]
    %v1759 = vld [vmem:[#allocation8 + $0x4b8] sm:$0xff]
    %v1760 = vld [vmem:[#allocation8 + $0x4c0] sm:$0xff]
    %v1761 = vld [vmem:[#allocation8 + $0x4c8] sm:$0xff]
    %v1762 = vld [vmem:[#allocation8 + $0x4d0] sm:$0xff]
    %v1763 = vld [vmem:[#allocation8 + $0x4d8] sm:$0xff]
    %v1764 = vld [vmem:[#allocation8 + $0x4e0] sm:$0xff]
    %v1765 = vld [vmem:[#allocation8 + $0x4e8] sm:$0xff]
    %v1766 = vld [vmem:[#allocation8 + $0x4f0] sm:$0xff]
    %v1767 = vld [vmem:[#allocation8 + $0x4f8] sm:$0xff]
    %v1768 = vld [vmem:[#allocation8 + $0x500] sm:$0xff]
    %v1769 = vld [vmem:[#allocation8 + $0x508] sm:$0xff]
    %v1770 = vld [vmem:[#allocation8 + $0x510] sm:$0xff]
    %v1771 = vld [vmem:[#allocation8 + $0x518] sm:$0xff]
    %v1772 = vld [vmem:[#allocation8 + $0x520] sm:$0xff]
    %v1773 = vld [vmem:[#allocation8 + $0x528] sm:$0xff]
    %v1774 = vld [vmem:[#allocation8 + $0x530] sm:$0xff]
    %v1775 = vld [vmem:[#allocation8 + $0x538] sm:$0xff]
    %v1776 = vld [vmem:[#allocation8 + $0x540] sm:$0xff]
    %v1777 = vld [vmem:[#allocation8 + $0x548] sm:$0xff]
    %v1778 = vld [vmem:[#allocation8 + $0x550] sm:$0xff]
    %v1779 = vld [vmem:[#allocation8 + $0x558] sm:$0xff]
    %v1780 = vld [vmem:[#allocation8 + $0x560] sm:$0xff]
    %v1781 = vld [vmem:[#allocation8 + $0x568] sm:$0xff]
    %v1782 = vld [vmem:[#allocation8 + $0x570] sm:$0xff]
    %v1783 = vld [vmem:[#allocation8 + $0x578] sm:$0xff]
    %v1784 = vld [vmem:[#allocation8 + $0x580] sm:$0xff]
    %v1785 = vld [vmem:[#allocation8 + $0x588] sm:$0xff]
    %v1786 = vld [vmem:[#allocation8 + $0x590] sm:$0xff]
    %v1787 = vld [vmem:[#allocation8 + $0x598] sm:$0xff]
    %v1788 = vld [vmem:[#allocation8 + $0x5a0] sm:$0xff]
    %v1789 = vld [vmem:[#allocation8 + $0x5a8] sm:$0xff]
    %v1790 = vld [vmem:[#allocation8 + $0x5b0] sm:$0xff]
    %v1791 = vld [vmem:[#allocation8 + $0x5b8] sm:$0xff]
    %v1792 = vld [vmem:[#allocation8 + $0x5c0] sm:$0xff]
    %v1793 = vld [vmem:[#allocation8 + $0x5c8] sm:$0xff]
    %v1794 = vld [vmem:[#allocation8 + $0x5d0] sm:$0xff]
    %v1795 = vld [vmem:[#allocation8 + $0x5d8] sm:$0xff]
    %v1796 = vld [vmem:[#allocation8 + $0x5e0] sm:$0xff]
    %v1797 = vld [vmem:[#allocation8 + $0x5e8] sm:$0xff]
    %v1798 = vld [vmem:[#allocation8 + $0x5f0] sm:$0xff]
    %v1799 = vld [vmem:[#allocation8 + $0x5f8] sm:$0xff]
    %v1800 = vld [vmem:[#allocation8 + $0x600] sm:$0xff]
    %v1801 = vld [vmem:[#allocation8 + $0x608] sm:$0xff]
    %v1802 = vld [vmem:[#allocation8 + $0x610] sm:$0xff]
    %v1803 = vld [vmem:[#allocation8 + $0x618] sm:$0xff]
    %v1804 = vld [vmem:[#allocation8 + $0x620] sm:$0xff]
    %v1805 = vld [vmem:[#allocation8 + $0x628] sm:$0xff]
    %v1806 = vld [vmem:[#allocation8 + $0x630] sm:$0xff]
    %v1807 = vld [vmem:[#allocation8 + $0x638] sm:$0xff]
    %v1808 = vld [vmem:[#allocation8 + $0x640] sm:$0xff]
    %v1809 = vld [vmem:[#allocation8 + $0x648] sm:$0xff]
    %v1810 = vld [vmem:[#allocation8 + $0x650] sm:$0xff]
    %v1811 = vld [vmem:[#allocation8 + $0x658] sm:$0xff]
    %v1812 = vld [vmem:[#allocation8 + $0x660] sm:$0xff]
    %v1813 = vld [vmem:[#allocation8 + $0x668] sm:$0xff]
    %v1814 = vld [vmem:[#allocation8 + $0x670] sm:$0xff]
    %v1815 = vld [vmem:[#allocation8 + $0x678] sm:$0xff]
    %v1816 = vld [vmem:[#allocation8 + $0x680] sm:$0xff]
    %v1817 = vld [vmem:[#allocation8 + $0x688] sm:$0xff]
    %v1818 = vld [vmem:[#allocation8 + $0x690] sm:$0xff]
    %v1819 = vld [vmem:[#allocation8 + $0x698] sm:$0xff]
    %v1820 = vld [vmem:[#allocation8 + $0x6a0] sm:$0xff]
    %v1821 = vld [vmem:[#allocation8 + $0x6a8] sm:$0xff]
    %v1822 = vld [vmem:[#allocation8 + $0x6b0] sm:$0xff]
    %v1823 = vld [vmem:[#allocation8 + $0x6b8] sm:$0xff]
    %v1824 = vld [vmem:[#allocation8 + $0x6c0] sm:$0xff]
    %v1825 = vld [vmem:[#allocation8 + $0x6c8] sm:$0xff]
    %v1826 = vld [vmem:[#allocation8 + $0x6d0] sm:$0xff]
    %v1827 = vld [vmem:[#allocation8 + $0x6d8] sm:$0xff]
    %v1828 = vld [vmem:[#allocation8 + $0x6e0] sm:$0xff]
    %v1829 = vld [vmem:[#allocation8 + $0x6e8] sm:$0xff]
    %v1830 = vld [vmem:[#allocation8 + $0x6f0] sm:$0xff]
    %v1831 = vld [vmem:[#allocation8 + $0x6f8] sm:$0xff]
    %v1832 = vld [vmem:[#allocation8 + $0x700] sm:$0xff]
    %v1833 = vld [vmem:[#allocation8 + $0x708] sm:$0xff]
    %v1834 = vld [vmem:[#allocation8 + $0x710] sm:$0xff]
    %v1835 = vld [vmem:[#allocation8 + $0x718] sm:$0xff]
    %v1836 = vld [vmem:[#allocation8 + $0x720] sm:$0xff]
    %v1837 = vld [vmem:[#allocation8 + $0x728] sm:$0xff]
    %v1838 = vld [vmem:[#allocation8 + $0x730] sm:$0xff]
    %v1839 = vld [vmem:[#allocation8 + $0x738] sm:$0xff]
    %v1840 = vld [vmem:[#allocation8 + $0x740] sm:$0xff]
    %v1841 = vld [vmem:[#allocation8 + $0x748] sm:$0xff]
    %v1842 = vld [vmem:[#allocation8 + $0x750] sm:$0xff]
    %v1843 = vld [vmem:[#allocation8 + $0x758] sm:$0xff]
    %v1844 = vld [vmem:[#allocation8 + $0x760] sm:$0xff]
    %v1845 = vld [vmem:[#allocation8 + $0x768] sm:$0xff]
    %v1846 = vld [vmem:[#allocation8 + $0x770] sm:$0xff]
    %v1847 = vld [vmem:[#allocation8 + $0x778] sm:$0xff]
    %v1848 = vld [vmem:[#allocation8 + $0x780] sm:$0xff]
    %v1849 = vld [vmem:[#allocation8 + $0x788] sm:$0xff]
    %v1850 = vld [vmem:[#allocation8 + $0x790] sm:$0xff]
    %v1851 = vld [vmem:[#allocation8 + $0x798] sm:$0xff]
    %v1852 = vld [vmem:[#allocation8 + $0x7a0] sm:$0xff]
    %v1853 = vld [vmem:[#allocation8 + $0x7a8] sm:$0xff]
    %v1854 = vld [vmem:[#allocation8 + $0x7b0] sm:$0xff]
    %v1855 = vld [vmem:[#allocation8 + $0x7b8] sm:$0xff]
    %v1856 = vld [vmem:[#allocation8 + $0x7c0] sm:$0xff]
    %v1857 = vld [vmem:[#allocation8 + $0x7c8] sm:$0xff]
    %v1858 = vld [vmem:[#allocation8 + $0x7d0] sm:$0xff]
    %v1859 = vld [vmem:[#allocation8 + $0x7d8] sm:$0xff]
    %v1860 = vld [vmem:[#allocation8 + $0x7e0] sm:$0xff]
    %v1861 = vld [vmem:[#allocation8 + $0x7e8] sm:$0xff]
    %v1862 = vld [vmem:[#allocation8 + $0x7f0] sm:$0xff]
    %v1863 = vld [vmem:[#allocation8 + $0x7f8] sm:$0xff]
    %v1864 = vld [vmem:[#allocation8 + $0x800] sm:$0xff]
    %v1865 = vld [vmem:[#allocation8 + $0x808] sm:$0xff]
    %v1866 = vld [vmem:[#allocation8 + $0x810] sm:$0xff]
    %v1867 = vld [vmem:[#allocation8 + $0x818] sm:$0xff]
    %v1868 = vld [vmem:[#allocation8 + $0x820] sm:$0xff]
    %v1869 = vld [vmem:[#allocation8 + $0x828] sm:$0xff]
    %v1870 = vld [vmem:[#allocation8 + $0x830] sm:$0xff]
    %v1871 = vld [vmem:[#allocation8 + $0x838] sm:$0xff]
    %v1872 = vld [vmem:[#allocation8 + $0x840] sm:$0xff]
    %v1873 = vld [vmem:[#allocation8 + $0x848] sm:$0xff]
    %v1874 = vld [vmem:[#allocation8 + $0x850] sm:$0xff]
    %v1875 = vld [vmem:[#allocation8 + $0x858] sm:$0xff]
    %v1876 = vld [vmem:[#allocation8 + $0x860] sm:$0xff]
    %v1877 = vld [vmem:[#allocation8 + $0x868] sm:$0xff]
    %v1878 = vld [vmem:[#allocation8 + $0x870] sm:$0xff]
    %v1879 = vld [vmem:[#allocation8 + $0x878] sm:$0xff]
    %v1880 = vld [vmem:[#allocation8 + $0x880] sm:$0xff]
    %v1881 = vld [vmem:[#allocation8 + $0x888] sm:$0xff]
    %v1882 = vld [vmem:[#allocation8 + $0x890] sm:$0xff]
    %v1883 = vld [vmem:[#allocation8 + $0x898] sm:$0xff]
    %v1884 = vld [vmem:[#allocation8 + $0x8a0] sm:$0xff]
    %v1885 = vld [vmem:[#allocation8 + $0x8a8] sm:$0xff]
    %v1886 = vld [vmem:[#allocation8 + $0x8b0] sm:$0xff]
    %v1887 = vld [vmem:[#allocation8 + $0x8b8] sm:$0xff]
    %v1888 = vld [vmem:[#allocation8 + $0x8c0] sm:$0xff]
    %v1889 = vld [vmem:[#allocation8 + $0x8c8] sm:$0xff]
    %v1890 = vld [vmem:[#allocation8 + $0x8d0] sm:$0xff]
    %v1891 = vld [vmem:[#allocation8 + $0x8d8] sm:$0xff]
    %v1892 = vld [vmem:[#allocation8 + $0x8e0] sm:$0xff]
    %v1893 = vld [vmem:[#allocation8 + $0x8e8] sm:$0xff]
    %v1894 = vld [vmem:[#allocation8 + $0x8f0] sm:$0xff]
    %v1895 = vld [vmem:[#allocation8 + $0x8f8] sm:$0xff]
    %v1896 = vld [vmem:[#allocation8 + $0x900] sm:$0xff]
    %v1897 = vld [vmem:[#allocation8 + $0x908] sm:$0xff]
    %v1898 = vld [vmem:[#allocation8 + $0x910] sm:$0xff]
    %v1899 = vld [vmem:[#allocation8 + $0x918] sm:$0xff]
    %v1900 = vld [vmem:[#allocation8 + $0x920] sm:$0xff]
    %v1901 = vld [vmem:[#allocation8 + $0x928] sm:$0xff]
    %v1902 = vld [vmem:[#allocation8 + $0x930] sm:$0xff]
    %v1903 = vld [vmem:[#allocation8 + $0x938] sm:$0xff]
    %v1904 = vld [vmem:[#allocation8 + $0x940] sm:$0xff]
    %v1905 = vld [vmem:[#allocation8 + $0x948] sm:$0xff]
    %v1906 = vld [vmem:[#allocation8 + $0x950] sm:$0xff]
    %v1907 = vld [vmem:[#allocation8 + $0x958] sm:$0xff]
    %v1908 = vld [vmem:[#allocation8 + $0x960] sm:$0xff]
    %v1909 = vld [vmem:[#allocation8 + $0x968] sm:$0xff]
    %v1910 = vld [vmem:[#allocation8 + $0x970] sm:$0xff]
    %v1911 = vld [vmem:[#allocation8 + $0x978] sm:$0xff]
    %v1912 = vld [vmem:[#allocation8 + $0x980] sm:$0xff]
    %v1913 = vld [vmem:[#allocation8 + $0x988] sm:$0xff]
    %v1914 = vld [vmem:[#allocation8 + $0x990] sm:$0xff]
    %v1915 = vld [vmem:[#allocation8 + $0x998] sm:$0xff]
    %v1916 = vld [vmem:[#allocation8 + $0x9a0] sm:$0xff]
    %v1917 = vld [vmem:[#allocation8 + $0x9a8] sm:$0xff]
    %v1918 = vld [vmem:[#allocation8 + $0x9b0] sm:$0xff]
    %v1919 = vld [vmem:[#allocation8 + $0x9b8] sm:$0xff]
    %v1920 = vld [vmem:[#allocation8 + $0x9c0] sm:$0xff]
    %v1921 = vld [vmem:[#allocation8 + $0x9c8] sm:$0xff]
    %v1922 = vld [vmem:[#allocation8 + $0x9d0] sm:$0xff]
    %v1923 = vld [vmem:[#allocation8 + $0x9d8] sm:$0xff]
    %v1924 = vld [vmem:[#allocation8 + $0x9e0] sm:$0xff]
    %v1925 = vld [vmem:[#allocation8 + $0x9e8] sm:$0xff]
    %v1926 = vld [vmem:[#allocation8 + $0x9f0] sm:$0xff]
    %v1927 = vld [vmem:[#allocation8 + $0x9f8] sm:$0xff]
    %v1928 = vld [vmem:[#allocation8 + $0xa00] sm:$0xff]
    %v1929 = vld [vmem:[#allocation8 + $0xa08] sm:$0xff]
    %v1930 = vld [vmem:[#allocation8 + $0xa10] sm:$0xff]
    %v1931 = vld [vmem:[#allocation8 + $0xa18] sm:$0xff]
    %v1932 = vld [vmem:[#allocation8 + $0xa20] sm:$0xff]
    %v1933 = vld [vmem:[#allocation8 + $0xa28] sm:$0xff]
    %v1934 = vld [vmem:[#allocation8 + $0xa30] sm:$0xff]
    %v1935 = vld [vmem:[#allocation8 + $0xa38] sm:$0xff]
    %v1936 = vld [vmem:[#allocation8 + $0xa40] sm:$0xff]
    %v1937 = vld [vmem:[#allocation8 + $0xa48] sm:$0xff]
    %v1938 = vld [vmem:[#allocation8 + $0xa50] sm:$0xff]
    %v1939 = vld [vmem:[#allocation8 + $0xa58] sm:$0xff]
    %v1940 = vld [vmem:[#allocation8 + $0xa60] sm:$0xff]
    %v1941 = vld [vmem:[#allocation8 + $0xa68] sm:$0xff]
    %v1942 = vld [vmem:[#allocation8 + $0xa70] sm:$0xff]
    %v1943 = vld [vmem:[#allocation8 + $0xa78] sm:$0xff]
    %v1944 = vld [vmem:[#allocation8 + $0xa80] sm:$0xff]
    %v1945 = vld [vmem:[#allocation8 + $0xa88] sm:$0xff]
    %v1946 = vld [vmem:[#allocation8 + $0xa90] sm:$0xff]
    %v1947 = vld [vmem:[#allocation8 + $0xa98] sm:$0xff]
    %v1948 = vld [vmem:[#allocation8 + $0xaa0] sm:$0xff]
    %v1949 = vld [vmem:[#allocation8 + $0xaa8] sm:$0xff]
    %v1950 = vld [vmem:[#allocation8 + $0xab0] sm:$0xff]
    %v1951 = vld [vmem:[#allocation8 + $0xab8] sm:$0xff]
    %v1952 = vld [vmem:[#allocation8 + $0xac0] sm:$0xff]
    %v1953 = vld [vmem:[#allocation8 + $0xac8] sm:$0xff]
    %v1954 = vld [vmem:[#allocation8 + $0xad0] sm:$0xff]
    %v1955 = vld [vmem:[#allocation8 + $0xad8] sm:$0xff]
    %v1956 = vld [vmem:[#allocation8 + $0xae0] sm:$0xff]
    %v1957 = vld [vmem:[#allocation8 + $0xae8] sm:$0xff]
    %v1958 = vld [vmem:[#allocation8 + $0xaf0] sm:$0xff]
    %v1959 = vld [vmem:[#allocation8 + $0xaf8] sm:$0xff]
    %v1960 = vld [vmem:[#allocation8 + $0xb00] sm:$0xff]
    %v1961 = vld [vmem:[#allocation8 + $0xb08] sm:$0xff]
    %v1962 = vld [vmem:[#allocation8 + $0xb10] sm:$0xff]
    %v1963 = vld [vmem:[#allocation8 + $0xb18] sm:$0xff]
    %v1964 = vld [vmem:[#allocation8 + $0xb20] sm:$0xff]
    %v1965 = vld [vmem:[#allocation8 + $0xb28] sm:$0xff]
    %v1966 = vld [vmem:[#allocation8 + $0xb30] sm:$0xff]
    %v1967 = vld [vmem:[#allocation8 + $0xb38] sm:$0xff]
    %v1968 = vld [vmem:[#allocation8 + $0xb40] sm:$0xff]
    %v1969 = vld [vmem:[#allocation8 + $0xb48] sm:$0xff]
    %v1970 = vld [vmem:[#allocation8 + $0xb50] sm:$0xff]
    %v1971 = vld [vmem:[#allocation8 + $0xb58] sm:$0xff]
    %v1972 = vld [vmem:[#allocation8 + $0xb60] sm:$0xff]
    %v1973 = vld [vmem:[#allocation8 + $0xb68] sm:$0xff]
    %v1974 = vld [vmem:[#allocation8 + $0xb70] sm:$0xff]
    %v1975 = vld [vmem:[#allocation8 + $0xb78] sm:$0xff]
    %v1976 = vld [vmem:[#allocation8 + $0xb80] sm:$0xff]
    %v1977 = vld [vmem:[#allocation8 + $0xb88] sm:$0xff]
    %v1978 = vld [vmem:[#allocation8 + $0xb90] sm:$0xff]
    %v1979 = vld [vmem:[#allocation8 + $0xb98] sm:$0xff]
    %v1980 = vld [vmem:[#allocation8 + $0xba0] sm:$0xff]
    %v1981 = vld [vmem:[#allocation8 + $0xba8] sm:$0xff]
    %v1982 = vld [vmem:[#allocation8 + $0xbb0] sm:$0xff]
    %v1983 = vld [vmem:[#allocation8 + $0xbb8] sm:$0xff]
    %v1984 = vld [vmem:[#allocation8 + $0xbc0] sm:$0xff]
    %v1985 = vld [vmem:[#allocation8 + $0xbc8] sm:$0xff]
    %v1986 = vld [vmem:[#allocation8 + $0xbd0] sm:$0xff]
    %v1987 = vld [vmem:[#allocation8 + $0xbd8] sm:$0xff]
    %v1988 = vld [vmem:[#allocation8 + $0xbe0] sm:$0xff]
    %v1989 = vld [vmem:[#allocation8 + $0xbe8] sm:$0xff]
    %v1990 = vld [vmem:[#allocation8 + $0xbf0] sm:$0xff]
    %v1991 = vld [vmem:[#allocation8 + $0xbf8] sm:$0xff]
    %v1992 = vld [vmem:[#allocation8 + $0xc00] sm:$0xff]
    %v1993 = vld [vmem:[#allocation8 + $0xc08] sm:$0xff]
    %v1994 = vld [vmem:[#allocation8 + $0xc10] sm:$0xff]
    %v1995 = vld [vmem:[#allocation8 + $0xc18] sm:$0xff]
    %v1996 = vld [vmem:[#allocation8 + $0xc20] sm:$0xff]
    %v1997 = vld [vmem:[#allocation8 + $0xc28] sm:$0xff]
    %v1998 = vld [vmem:[#allocation8 + $0xc30] sm:$0xff]
    %v1999 = vld [vmem:[#allocation8 + $0xc38] sm:$0xff]
    %v2000 = vld [vmem:[#allocation8 + $0xc40] sm:$0xff]
    %v2001 = vld [vmem:[#allocation8 + $0xc48] sm:$0xff]
    %v2002 = vld [vmem:[#allocation8 + $0xc50] sm:$0xff]
    %v2003 = vld [vmem:[#allocation8 + $0xc58] sm:$0xff]
    %v2004 = vld [vmem:[#allocation8 + $0xc60] sm:$0xff]
    %v2005 = vld [vmem:[#allocation8 + $0xc68] sm:$0xff]
    %v2006 = vld [vmem:[#allocation8 + $0xc70] sm:$0xff]
    %v2007 = vld [vmem:[#allocation8 + $0xc78] sm:$0xff]
    %v2008 = vld [vmem:[#allocation8 + $0xc80] sm:$0xff]
    %v2009 = vld [vmem:[#allocation8 + $0xc88] sm:$0xff]
    %v2010 = vld [vmem:[#allocation8 + $0xc90] sm:$0xff]
    %v2011 = vld [vmem:[#allocation8 + $0xc98] sm:$0xff]
    %v2012 = vld [vmem:[#allocation8 + $0xca0] sm:$0xff]
    %v2013 = vld [vmem:[#allocation8 + $0xca8] sm:$0xff]
    %v2014 = vld [vmem:[#allocation8 + $0xcb0] sm:$0xff]
    %v2015 = vld [vmem:[#allocation8 + $0xcb8] sm:$0xff]
    %v2016 = vld [vmem:[#allocation8 + $0xcc0] sm:$0xff]
    %v2017 = vld [vmem:[#allocation8 + $0xcc8] sm:$0xff]
    %v2018 = vld [vmem:[#allocation8 + $0xcd0] sm:$0xff]
    %v2019 = vld [vmem:[#allocation8 + $0xcd8] sm:$0xff]
    %v2020 = vld [vmem:[#allocation8 + $0xce0] sm:$0xff]
    %v2021 = vld [vmem:[#allocation8 + $0xce8] sm:$0xff]
    %v2022 = vld [vmem:[#allocation8 + $0xcf0] sm:$0xff]
    %v2023 = vld [vmem:[#allocation8 + $0xcf8] sm:$0xff]
    %v2024 = vld [vmem:[#allocation8 + $0xd00] sm:$0xff]
    %v2025 = vld [vmem:[#allocation8 + $0xd08] sm:$0xff]
    %v2026 = vld [vmem:[#allocation8 + $0xd10] sm:$0xff]
    %v2027 = vld [vmem:[#allocation8 + $0xd18] sm:$0xff]
    %v2028 = vld [vmem:[#allocation8 + $0xd20] sm:$0xff]
    %v2029 = vld [vmem:[#allocation8 + $0xd28] sm:$0xff]
    %v2030 = vld [vmem:[#allocation8 + $0xd30] sm:$0xff]
    %v2031 = vld [vmem:[#allocation8 + $0xd38] sm:$0xff]
    %v2032 = vld [vmem:[#allocation8 + $0xd40] sm:$0xff]
    %v2033 = vld [vmem:[#allocation8 + $0xd48] sm:$0xff]
    %v2034 = vld [vmem:[#allocation8 + $0xd50] sm:$0xff]
    %v2035 = vld [vmem:[#allocation8 + $0xd58] sm:$0xff]
    %v2036 = vld [vmem:[#allocation8 + $0xd60] sm:$0xff]
    %v2037 = vld [vmem:[#allocation8 + $0xd68] sm:$0xff]
    %v2038 = vld [vmem:[#allocation8 + $0xd70] sm:$0xff]
    %v2039 = vld [vmem:[#allocation8 + $0xd78] sm:$0xff]
    %v2040 = vld [vmem:[#allocation8 + $0xd80] sm:$0xff]
    %v2041 = vld [vmem:[#allocation8 + $0xd88] sm:$0xff]
    %v2042 = vld [vmem:[#allocation8 + $0xd90] sm:$0xff]
    %v2043 = vld [vmem:[#allocation8 + $0xd98] sm:$0xff]
    %v2044 = vld [vmem:[#allocation8 + $0xda0] sm:$0xff]
    %v2045 = vld [vmem:[#allocation8 + $0xda8] sm:$0xff]
    %v2046 = vld [vmem:[#allocation8 + $0xdb0] sm:$0xff]
    %v2047 = vld [vmem:[#allocation8 + $0xdb8] sm:$0xff]
    %v2048 = vld [vmem:[#allocation8 + $0xdc0] sm:$0xff]
    %v2049 = vld [vmem:[#allocation8 + $0xdc8] sm:$0xff]
    %v2050 = vld [vmem:[#allocation8 + $0xdd0] sm:$0xff]
    %v2051 = vld [vmem:[#allocation8 + $0xdd8] sm:$0xff]
    %v2052 = vld [vmem:[#allocation8 + $0xde0] sm:$0xff]
    %v2053 = vld [vmem:[#allocation8 + $0xde8] sm:$0xff]
    %v2054 = vld [vmem:[#allocation8 + $0xdf0] sm:$0xff]
    %v2055 = vld [vmem:[#allocation8 + $0xdf8] sm:$0xff]
    %v2056 = vld [vmem:[#allocation8 + $0xe00] sm:$0xff]
    %v2057 = vld [vmem:[#allocation8 + $0xe08] sm:$0xff]
    %v2058 = vld [vmem:[#allocation8 + $0xe10] sm:$0xff]
    %v2059 = vld [vmem:[#allocation8 + $0xe18] sm:$0xff]
    %v2060 = vld [vmem:[#allocation8 + $0xe20] sm:$0xff]
    %v2061 = vld [vmem:[#allocation8 + $0xe28] sm:$0xff]
    %v2062 = vld [vmem:[#allocation8 + $0xe30] sm:$0xff]
    %v2063 = vld [vmem:[#allocation8 + $0xe38] sm:$0xff]
    %v2064 = vld [vmem:[#allocation8 + $0xe40] sm:$0xff]
    %v2065 = vld [vmem:[#allocation8 + $0xe48] sm:$0xff]
    %v2066 = vld [vmem:[#allocation8 + $0xe50] sm:$0xff]
    %v2067 = vld [vmem:[#allocation8 + $0xe58] sm:$0xff]
    %v2068 = vld [vmem:[#allocation8 + $0xe60] sm:$0xff]
    %v2069 = vld [vmem:[#allocation8 + $0xe68] sm:$0xff]
    %v2070 = vld [vmem:[#allocation8 + $0xe70] sm:$0xff]
    %v2071 = vld [vmem:[#allocation8 + $0xe78] sm:$0xff]
    %v2072 = vld [vmem:[#allocation8 + $0xe80] sm:$0xff]
    %v2073 = vld [vmem:[#allocation8 + $0xe88] sm:$0xff]
    %v2074 = vld [vmem:[#allocation8 + $0xe90] sm:$0xff]
    %v2075 = vld [vmem:[#allocation8 + $0xe98] sm:$0xff]
    %v2076 = vld [vmem:[#allocation8 + $0xea0] sm:$0xff]
    %v2077 = vld [vmem:[#allocation8 + $0xea8] sm:$0xff]
    %v2078 = vld [vmem:[#allocation8 + $0xeb0] sm:$0xff]
    %v2079 = vld [vmem:[#allocation8 + $0xeb8] sm:$0xff]
    %v2080 = vld [vmem:[#allocation8 + $0xec0] sm:$0xff]
    %v2081 = vld [vmem:[#allocation8 + $0xec8] sm:$0xff]
    %v2082 = vld [vmem:[#allocation8 + $0xed0] sm:$0xff]
    %v2083 = vld [vmem:[#allocation8 + $0xed8] sm:$0xff]
    %v2084 = vld [vmem:[#allocation8 + $0xee0] sm:$0xff]
    %v2085 = vld [vmem:[#allocation8 + $0xee8] sm:$0xff]
    %v2086 = vld [vmem:[#allocation8 + $0xef0] sm:$0xff]
    %v2087 = vld [vmem:[#allocation8 + $0xef8] sm:$0xff]
    %v2088 = vld [vmem:[#allocation8 + $0xf00] sm:$0xff]
    %v2089 = vld [vmem:[#allocation8 + $0xf08] sm:$0xff]
    %v2090 = vld [vmem:[#allocation8 + $0xf10] sm:$0xff]
    %v2091 = vld [vmem:[#allocation8 + $0xf18] sm:$0xff]
    %v2092 = vld [vmem:[#allocation8 + $0xf20] sm:$0xff]
    %v2093 = vld [vmem:[#allocation8 + $0xf28] sm:$0xff]
    %v2094 = vld [vmem:[#allocation8 + $0xf30] sm:$0xff]
    %v2095 = vld [vmem:[#allocation8 + $0xf38] sm:$0xff]
    %v2096 = vld [vmem:[#allocation8 + $0xf40] sm:$0xff]
    %v2097 = vld [vmem:[#allocation8 + $0xf48] sm:$0xff]
    %v2098 = vld [vmem:[#allocation8 + $0xf50] sm:$0xff]
    %v2099 = vld [vmem:[#allocation8 + $0xf58] sm:$0xff]
    %v2100 = vld [vmem:[#allocation8 + $0xf60] sm:$0xff]
    %v2101 = vld [vmem:[#allocation8 + $0xf68] sm:$0xff]
    %v2102 = vld [vmem:[#allocation8 + $0xf70] sm:$0xff]
    %v2103 = vld [vmem:[#allocation8 + $0xf78] sm:$0xff]
    %v2104 = vld [vmem:[#allocation8 + $0xf80] sm:$0xff]
    %v2105 = vld [vmem:[#allocation8 + $0xf88] sm:$0xff]
    %v2106 = vld [vmem:[#allocation8 + $0xf90] sm:$0xff]
    %v2107 = vld [vmem:[#allocation8 + $0xf98] sm:$0xff]
    %v2108 = vld [vmem:[#allocation8 + $0xfa0] sm:$0xff]
    %v2109 = vld [vmem:[#allocation8 + $0xfa8] sm:$0xff]
    %v2110 = vld [vmem:[#allocation8 + $0xfb0] sm:$0xff]
    %v2111 = vld [vmem:[#allocation8 + $0xfb8] sm:$0xff]
    %v2112 = vld [vmem:[#allocation8 + $0xfc0] sm:$0xff]
    %v2113 = vld [vmem:[#allocation8 + $0xfc8] sm:$0xff]
    %v2114 = vld [vmem:[#allocation8 + $0xfd0] sm:$0xff]
    %v2115 = vld [vmem:[#allocation8 + $0xfd8] sm:$0xff]
    %v2116 = vld [vmem:[#allocation8 + $0xfe0] sm:$0xff]
    %v2117 = vld [vmem:[#allocation8 + $0xfe8] sm:$0xff]
    %v2118 = vld [vmem:[#allocation8 + $0xff0] sm:$0xff]
    %v2119 = vld [vmem:[#allocation8 + $0xff8] sm:$0xff]
    %v2120 = vld [vmem:[#allocation8 + $0x1000] sm:$0xff]
    %v2121 = vld [vmem:[#allocation8 + $0x1008] sm:$0xff]
    %v2122 = vld [vmem:[#allocation8 + $0x1010] sm:$0xff]
    %v2123 = vld [vmem:[#allocation8 + $0x1018] sm:$0xff]
    %v2124 = vld [vmem:[#allocation8 + $0x1020] sm:$0xff]
    %v2125 = vld [vmem:[#allocation8 + $0x1028] sm:$0xff]
    %v2126 = vld [vmem:[#allocation8 + $0x1030] sm:$0xff]
    %v2127 = vld [vmem:[#allocation8 + $0x1038] sm:$0xff]
    %v2128 = vld [vmem:[#allocation8 + $0x1040] sm:$0xff]
    %v2129 = vld [vmem:[#allocation8 + $0x1048] sm:$0xff]
    %v2130 = vld [vmem:[#allocation8 + $0x1050] sm:$0xff]
    %v2131 = vld [vmem:[#allocation8 + $0x1058] sm:$0xff]
    %v2132 = vld [vmem:[#allocation8 + $0x1060] sm:$0xff]
    %v2133 = vld [vmem:[#allocation8 + $0x1068] sm:$0xff]
    %v2134 = vld [vmem:[#allocation8 + $0x1070] sm:$0xff]
    %v2135 = vld [vmem:[#allocation8 + $0x1078] sm:$0xff]
    %v2136 = vld [vmem:[#allocation8 + $0x1080] sm:$0xff]
    %v2137 = vld [vmem:[#allocation8 + $0x1088] sm:$0xff]
    %v2138 = vld [vmem:[#allocation8 + $0x1090] sm:$0xff]
    %v2139 = vld [vmem:[#allocation8 + $0x1098] sm:$0xff]
    %v2140 = vld [vmem:[#allocation8 + $0x10a0] sm:$0xff]
    %v2141 = vld [vmem:[#allocation8 + $0x10a8] sm:$0xff]
    %v2142 = vld [vmem:[#allocation8 + $0x10b0] sm:$0xff]
    %v2143 = vld [vmem:[#allocation8 + $0x10b8] sm:$0xff]
    %v2144 = vld [vmem:[#allocation8 + $0x10c0] sm:$0xff]
    %v2145 = vld [vmem:[#allocation8 + $0x10c8] sm:$0xff]
    %v2146 = vld [vmem:[#allocation8 + $0x10d0] sm:$0xff]
    %v2147 = vld [vmem:[#allocation8 + $0x10d8] sm:$0xff]
    %v2148 = vld [vmem:[#allocation8 + $0x10e0] sm:$0xff]
    %v2149 = vld [vmem:[#allocation8 + $0x10e8] sm:$0xff]
    %v2150 = vld [vmem:[#allocation8 + $0x10f0] sm:$0xff]
    %v2151 = vld [vmem:[#allocation8 + $0x10f8] sm:$0xff]
    %v2152 = vld [vmem:[#allocation8 + $0x1100] sm:$0xff]
    %v2153 = vld [vmem:[#allocation8 + $0x1108] sm:$0xff]
    %v2154 = vld [vmem:[#allocation8 + $0x1110] sm:$0xff]
    %v2155 = vld [vmem:[#allocation8 + $0x1118] sm:$0xff]
    %v2156 = vld [vmem:[#allocation8 + $0x1120] sm:$0xff]
    %v2157 = vld [vmem:[#allocation8 + $0x1128] sm:$0xff]
    %v2158 = vld [vmem:[#allocation8 + $0x1130] sm:$0xff]
    %v2159 = vld [vmem:[#allocation8 + $0x1138] sm:$0xff]
    %v2160 = vld [vmem:[#allocation8 + $0x1140] sm:$0xff]
    %v2161 = vld [vmem:[#allocation8 + $0x1148] sm:$0xff]
    %v2162 = vld [vmem:[#allocation8 + $0x1150] sm:$0xff]
    %v2163 = vld [vmem:[#allocation8 + $0x1158] sm:$0xff]
    %v2164 = vld [vmem:[#allocation8 + $0x1160] sm:$0xff]
    %v2165 = vld [vmem:[#allocation8 + $0x1168] sm:$0xff]
    %v2166 = vld [vmem:[#allocation8 + $0x1170] sm:$0xff]
    %v2167 = vld [vmem:[#allocation8 + $0x1178] sm:$0xff]
    %v2168 = vld [vmem:[#allocation8 + $0x1180] sm:$0xff]
    %v2169 = vld [vmem:[#allocation8 + $0x1188] sm:$0xff]
    %v2170 = vld [vmem:[#allocation8 + $0x1190] sm:$0xff]
    %v2171 = vld [vmem:[#allocation8 + $0x1198] sm:$0xff]
    %v2172 = vld [vmem:[#allocation8 + $0x11a0] sm:$0xff]
    %v2173 = vld [vmem:[#allocation8 + $0x11a8] sm:$0xff]
    %v2174 = vld [vmem:[#allocation8 + $0x11b0] sm:$0xff]
    %v2175 = vld [vmem:[#allocation8 + $0x11b8] sm:$0xff]
    %v2176 = vld [vmem:[#allocation8 + $0x11c0] sm:$0xff]
    %v2177 = vld [vmem:[#allocation8 + $0x11c8] sm:$0xff]
    %v2178 = vld [vmem:[#allocation8 + $0x11d0] sm:$0xff]
    %v2179 = vld [vmem:[#allocation8 + $0x11d8] sm:$0xff]
    %v2180 = vld [vmem:[#allocation8 + $0x11e0] sm:$0xff]
    %v2181 = vld [vmem:[#allocation8 + $0x11e8] sm:$0xff]
    %v2182 = vld [vmem:[#allocation8 + $0x11f0] sm:$0xff]
    %v2183 = vld [vmem:[#allocation8 + $0x11f8] sm:$0xff]
    %v2184 = vpack.c.bf16 %v1611, %v1608
    %v2185 = vpack.c.bf16 %v1612, %v1609
    %v2186 = vpack.c.bf16 %v1613, %v1610
    %v2187 = vpack.c.bf16 %v1617, %v1614
    %v2188 = vpack.c.bf16 %v1618, %v1615
    %v2189 = vpack.c.bf16 %v1619, %v1616
    %v2190 = vpack.c.bf16 %v1623, %v1620
    %v2191 = vpack.c.bf16 %v1624, %v1621
    %v2192 = vpack.c.bf16 %v1625, %v1622
    %v2193 = vpack.c.bf16 %v1629, %v1626
    %v2194 = vpack.c.bf16 %v1630, %v1627
    %v2195 = vpack.c.bf16 %v1631, %v1628
    %v2196 = vpack.c.bf16 %v1635, %v1632
    %v2197 = vpack.c.bf16 %v1636, %v1633
    %v2198 = vpack.c.bf16 %v1637, %v1634
    %v2199 = vpack.c.bf16 %v1641, %v1638
    %v2200 = vpack.c.bf16 %v1642, %v1639
    %v2201 = vpack.c.bf16 %v1643, %v1640
    %v2202 = vpack.c.bf16 %v1647, %v1644
    %v2203 = vpack.c.bf16 %v1648, %v1645
    %v2204 = vpack.c.bf16 %v1649, %v1646
    %v2205 = vpack.c.bf16 %v1653, %v1650
    %v2206 = vpack.c.bf16 %v1654, %v1651
    %v2207 = vpack.c.bf16 %v1655, %v1652
    %v2208 = vpack.c.bf16 %v1659, %v1656
    %v2209 = vpack.c.bf16 %v1660, %v1657
    %v2210 = vpack.c.bf16 %v1661, %v1658
    %v2211 = vpack.c.bf16 %v1665, %v1662
    %v2212 = vpack.c.bf16 %v1666, %v1663
    %v2213 = vpack.c.bf16 %v1667, %v1664
    %v2214 = vpack.c.bf16 %v1671, %v1668
    %v2215 = vpack.c.bf16 %v1672, %v1669
    %v2216 = vpack.c.bf16 %v1673, %v1670
    %v2217 = vpack.c.bf16 %v1677, %v1674
    %v2218 = vpack.c.bf16 %v1678, %v1675
    %v2219 = vpack.c.bf16 %v1679, %v1676
    %v2220 = vpack.c.bf16 %v1683, %v1680
    %v2221 = vpack.c.bf16 %v1684, %v1681
    %v2222 = vpack.c.bf16 %v1685, %v1682
    %v2223 = vpack.c.bf16 %v1689, %v1686
    %v2224 = vpack.c.bf16 %v1690, %v1687
    %v2225 = vpack.c.bf16 %v1691, %v1688
    %v2226 = vpack.c.bf16 %v1695, %v1692
    %v2227 = vpack.c.bf16 %v1696, %v1693
    %v2228 = vpack.c.bf16 %v1697, %v1694
    %v2229 = vpack.c.bf16 %v1701, %v1698
    %v2230 = vpack.c.bf16 %v1702, %v1699
    %v2231 = vpack.c.bf16 %v1703, %v1700
    %v2232 = vpack.c.bf16 %v1707, %v1704
    %v2233 = vpack.c.bf16 %v1708, %v1705
    %v2234 = vpack.c.bf16 %v1709, %v1706
    %v2235 = vpack.c.bf16 %v1713, %v1710
    %v2236 = vpack.c.bf16 %v1714, %v1711
    %v2237 = vpack.c.bf16 %v1715, %v1712
    %v2238 = vpack.c.bf16 %v1719, %v1716
    %v2239 = vpack.c.bf16 %v1720, %v1717
    %v2240 = vpack.c.bf16 %v1721, %v1718
    %v2241 = vpack.c.bf16 %v1725, %v1722
    %v2242 = vpack.c.bf16 %v1726, %v1723
    %v2243 = vpack.c.bf16 %v1727, %v1724
    %v2244 = vpack.c.bf16 %v1731, %v1728
    %v2245 = vpack.c.bf16 %v1732, %v1729
    %v2246 = vpack.c.bf16 %v1733, %v1730
    %v2247 = vpack.c.bf16 %v1737, %v1734
    %v2248 = vpack.c.bf16 %v1738, %v1735
    %v2249 = vpack.c.bf16 %v1739, %v1736
    %v2250 = vpack.c.bf16 %v1743, %v1740
    %v2251 = vpack.c.bf16 %v1744, %v1741
    %v2252 = vpack.c.bf16 %v1745, %v1742
    %v2253 = vpack.c.bf16 %v1749, %v1746
    %v2254 = vpack.c.bf16 %v1750, %v1747
    %v2255 = vpack.c.bf16 %v1751, %v1748
    %v2256 = vpack.c.bf16 %v1755, %v1752
    %v2257 = vpack.c.bf16 %v1756, %v1753
    %v2258 = vpack.c.bf16 %v1757, %v1754
    %v2259 = vpack.c.bf16 %v1761, %v1758
    %v2260 = vpack.c.bf16 %v1762, %v1759
    %v2261 = vpack.c.bf16 %v1763, %v1760
    %v2262 = vpack.c.bf16 %v1767, %v1764
    %v2263 = vpack.c.bf16 %v1768, %v1765
    %v2264 = vpack.c.bf16 %v1769, %v1766
    %v2265 = vpack.c.bf16 %v1773, %v1770
    %v2266 = vpack.c.bf16 %v1774, %v1771
    %v2267 = vpack.c.bf16 %v1775, %v1772
    %v2268 = vpack.c.bf16 %v1779, %v1776
    %v2269 = vpack.c.bf16 %v1780, %v1777
    %v2270 = vpack.c.bf16 %v1781, %v1778
    %v2271 = vpack.c.bf16 %v1785, %v1782
    %v2272 = vpack.c.bf16 %v1786, %v1783
    %v2273 = vpack.c.bf16 %v1787, %v1784
    %v2274 = vpack.c.bf16 %v1791, %v1788
    %v2275 = vpack.c.bf16 %v1792, %v1789
    %v2276 = vpack.c.bf16 %v1793, %v1790
    %v2277 = vpack.c.bf16 %v1797, %v1794
    %v2278 = vpack.c.bf16 %v1798, %v1795
    %v2279 = vpack.c.bf16 %v1799, %v1796
    %v2280 = vpack.c.bf16 %v1803, %v1800
    %v2281 = vpack.c.bf16 %v1804, %v1801
    %v2282 = vpack.c.bf16 %v1805, %v1802
    %v2283 = vpack.c.bf16 %v1809, %v1806
    %v2284 = vpack.c.bf16 %v1810, %v1807
    %v2285 = vpack.c.bf16 %v1811, %v1808
    %v2286 = vpack.c.bf16 %v1815, %v1812
    %v2287 = vpack.c.bf16 %v1816, %v1813
    %v2288 = vpack.c.bf16 %v1817, %v1814
    %v2289 = vpack.c.bf16 %v1821, %v1818
    %v2290 = vpack.c.bf16 %v1822, %v1819
    %v2291 = vpack.c.bf16 %v1823, %v1820
    %v2292 = vpack.c.bf16 %v1827, %v1824
    %v2293 = vpack.c.bf16 %v1828, %v1825
    %v2294 = vpack.c.bf16 %v1829, %v1826
    %v2295 = vpack.c.bf16 %v1833, %v1830
    %v2296 = vpack.c.bf16 %v1834, %v1831
    %v2297 = vpack.c.bf16 %v1835, %v1832
    %v2298 = vpack.c.bf16 %v1839, %v1836
    %v2299 = vpack.c.bf16 %v1840, %v1837
    %v2300 = vpack.c.bf16 %v1841, %v1838
    %v2301 = vpack.c.bf16 %v1845, %v1842
    %v2302 = vpack.c.bf16 %v1846, %v1843
    %v2303 = vpack.c.bf16 %v1847, %v1844
    %v2304 = vpack.c.bf16 %v1851, %v1848
    %v2305 = vpack.c.bf16 %v1852, %v1849
    %v2306 = vpack.c.bf16 %v1853, %v1850
    %v2307 = vpack.c.bf16 %v1857, %v1854
    %v2308 = vpack.c.bf16 %v1858, %v1855
    %v2309 = vpack.c.bf16 %v1859, %v1856
    %v2310 = vpack.c.bf16 %v1863, %v1860
    %v2311 = vpack.c.bf16 %v1864, %v1861
    %v2312 = vpack.c.bf16 %v1865, %v1862
    %v2313 = vpack.c.bf16 %v1869, %v1866
    %v2314 = vpack.c.bf16 %v1870, %v1867
    %v2315 = vpack.c.bf16 %v1871, %v1868
    %v2316 = vpack.c.bf16 %v1875, %v1872
    %v2317 = vpack.c.bf16 %v1876, %v1873
    %v2318 = vpack.c.bf16 %v1877, %v1874
    %v2319 = vpack.c.bf16 %v1881, %v1878
    %v2320 = vpack.c.bf16 %v1882, %v1879
    %v2321 = vpack.c.bf16 %v1883, %v1880
    %v2322 = vpack.c.bf16 %v1887, %v1884
    %v2323 = vpack.c.bf16 %v1888, %v1885
    %v2324 = vpack.c.bf16 %v1889, %v1886
    %v2325 = vpack.c.bf16 %v1893, %v1890
    %v2326 = vpack.c.bf16 %v1894, %v1891
    %v2327 = vpack.c.bf16 %v1895, %v1892
    %v2328 = vpack.c.bf16 %v1899, %v1896
    %v2329 = vpack.c.bf16 %v1900, %v1897
    %v2330 = vpack.c.bf16 %v1901, %v1898
    %v2331 = vpack.c.bf16 %v1905, %v1902
    %v2332 = vpack.c.bf16 %v1906, %v1903
    %v2333 = vpack.c.bf16 %v1907, %v1904
    %v2334 = vpack.c.bf16 %v1911, %v1908
    %v2335 = vpack.c.bf16 %v1912, %v1909
    %v2336 = vpack.c.bf16 %v1913, %v1910
    %v2337 = vpack.c.bf16 %v1917, %v1914
    %v2338 = vpack.c.bf16 %v1918, %v1915
    %v2339 = vpack.c.bf16 %v1919, %v1916
    %v2340 = vpack.c.bf16 %v1923, %v1920
    %v2341 = vpack.c.bf16 %v1924, %v1921
    %v2342 = vpack.c.bf16 %v1925, %v1922
    %v2343 = vpack.c.bf16 %v1929, %v1926
    %v2344 = vpack.c.bf16 %v1930, %v1927
    %v2345 = vpack.c.bf16 %v1931, %v1928
    %v2346 = vpack.c.bf16 %v1935, %v1932
    %v2347 = vpack.c.bf16 %v1936, %v1933
    %v2348 = vpack.c.bf16 %v1937, %v1934
    %v2349 = vpack.c.bf16 %v1941, %v1938
    %v2350 = vpack.c.bf16 %v1942, %v1939
    %v2351 = vpack.c.bf16 %v1943, %v1940
    %v2352 = vpack.c.bf16 %v1947, %v1944
    %v2353 = vpack.c.bf16 %v1948, %v1945
    %v2354 = vpack.c.bf16 %v1949, %v1946
    %v2355 = vpack.c.bf16 %v1953, %v1950
    %v2356 = vpack.c.bf16 %v1954, %v1951
    %v2357 = vpack.c.bf16 %v1955, %v1952
    %v2358 = vpack.c.bf16 %v1959, %v1956
    %v2359 = vpack.c.bf16 %v1960, %v1957
    %v2360 = vpack.c.bf16 %v1961, %v1958
    %v2361 = vpack.c.bf16 %v1965, %v1962
    %v2362 = vpack.c.bf16 %v1966, %v1963
    %v2363 = vpack.c.bf16 %v1967, %v1964
    %v2364 = vpack.c.bf16 %v1971, %v1968
    %v2365 = vpack.c.bf16 %v1972, %v1969
    %v2366 = vpack.c.bf16 %v1973, %v1970
    %v2367 = vpack.c.bf16 %v1977, %v1974
    %v2368 = vpack.c.bf16 %v1978, %v1975
    %v2369 = vpack.c.bf16 %v1979, %v1976
    %v2370 = vpack.c.bf16 %v1983, %v1980
    %v2371 = vpack.c.bf16 %v1984, %v1981
    %v2372 = vpack.c.bf16 %v1985, %v1982
    %v2373 = vpack.c.bf16 %v1989, %v1986
    %v2374 = vpack.c.bf16 %v1990, %v1987
    %v2375 = vpack.c.bf16 %v1991, %v1988
    %v2376 = vpack.c.bf16 %v1995, %v1992
    %v2377 = vpack.c.bf16 %v1996, %v1993
    %v2378 = vpack.c.bf16 %v1997, %v1994
    %v2379 = vpack.c.bf16 %v2001, %v1998
    %v2380 = vpack.c.bf16 %v2002, %v1999
    %v2381 = vpack.c.bf16 %v2003, %v2000
    %v2382 = vpack.c.bf16 %v2007, %v2004
    %v2383 = vpack.c.bf16 %v2008, %v2005
    %v2384 = vpack.c.bf16 %v2009, %v2006
    %v2385 = vpack.c.bf16 %v2013, %v2010
    %v2386 = vpack.c.bf16 %v2014, %v2011
    %v2387 = vpack.c.bf16 %v2015, %v2012
    %v2388 = vpack.c.bf16 %v2019, %v2016
    %v2389 = vpack.c.bf16 %v2020, %v2017
    %v2390 = vpack.c.bf16 %v2021, %v2018
    %v2391 = vpack.c.bf16 %v2025, %v2022
    %v2392 = vpack.c.bf16 %v2026, %v2023
    %v2393 = vpack.c.bf16 %v2027, %v2024
    %v2394 = vpack.c.bf16 %v2031, %v2028
    %v2395 = vpack.c.bf16 %v2032, %v2029
    %v2396 = vpack.c.bf16 %v2033, %v2030
    %v2397 = vpack.c.bf16 %v2037, %v2034
    %v2398 = vpack.c.bf16 %v2038, %v2035
    %v2399 = vpack.c.bf16 %v2039, %v2036
    %v2400 = vpack.c.bf16 %v2043, %v2040
    %v2401 = vpack.c.bf16 %v2044, %v2041
    %v2402 = vpack.c.bf16 %v2045, %v2042
    %v2403 = vpack.c.bf16 %v2049, %v2046
    %v2404 = vpack.c.bf16 %v2050, %v2047
    %v2405 = vpack.c.bf16 %v2051, %v2048
    %v2406 = vpack.c.bf16 %v2055, %v2052
    %v2407 = vpack.c.bf16 %v2056, %v2053
    %v2408 = vpack.c.bf16 %v2057, %v2054
    %v2409 = vpack.c.bf16 %v2061, %v2058
    %v2410 = vpack.c.bf16 %v2062, %v2059
    %v2411 = vpack.c.bf16 %v2063, %v2060
    %v2412 = vpack.c.bf16 %v2067, %v2064
    %v2413 = vpack.c.bf16 %v2068, %v2065
    %v2414 = vpack.c.bf16 %v2069, %v2066
    %v2415 = vpack.c.bf16 %v2073, %v2070
    %v2416 = vpack.c.bf16 %v2074, %v2071
    %v2417 = vpack.c.bf16 %v2075, %v2072
    %v2418 = vpack.c.bf16 %v2079, %v2076
    %v2419 = vpack.c.bf16 %v2080, %v2077
    %v2420 = vpack.c.bf16 %v2081, %v2078
    %v2421 = vpack.c.bf16 %v2085, %v2082
    %v2422 = vpack.c.bf16 %v2086, %v2083
    %v2423 = vpack.c.bf16 %v2087, %v2084
    %v2424 = vpack.c.bf16 %v2091, %v2088
    %v2425 = vpack.c.bf16 %v2092, %v2089
    %v2426 = vpack.c.bf16 %v2093, %v2090
    %v2427 = vpack.c.bf16 %v2097, %v2094
    %v2428 = vpack.c.bf16 %v2098, %v2095
    %v2429 = vpack.c.bf16 %v2099, %v2096
    %v2430 = vpack.c.bf16 %v2103, %v2100
    %v2431 = vpack.c.bf16 %v2104, %v2101
    %v2432 = vpack.c.bf16 %v2105, %v2102
    %v2433 = vpack.c.bf16 %v2109, %v2106
    %v2434 = vpack.c.bf16 %v2110, %v2107
    %v2435 = vpack.c.bf16 %v2111, %v2108
    %v2436 = vpack.c.bf16 %v2115, %v2112
    %v2437 = vpack.c.bf16 %v2116, %v2113
    %v2438 = vpack.c.bf16 %v2117, %v2114
    %v2439 = vpack.c.bf16 %v2121, %v2118
    %v2440 = vpack.c.bf16 %v2122, %v2119
    %v2441 = vpack.c.bf16 %v2123, %v2120
    %v2442 = vpack.c.bf16 %v2127, %v2124
    %v2443 = vpack.c.bf16 %v2128, %v2125
    %v2444 = vpack.c.bf16 %v2129, %v2126
    %v2445 = vpack.c.bf16 %v2133, %v2130
    %v2446 = vpack.c.bf16 %v2134, %v2131
    %v2447 = vpack.c.bf16 %v2135, %v2132
    %v2448 = vpack.c.bf16 %v2139, %v2136
    %v2449 = vpack.c.bf16 %v2140, %v2137
    %v2450 = vpack.c.bf16 %v2141, %v2138
    %v2451 = vpack.c.bf16 %v2145, %v2142
    %v2452 = vpack.c.bf16 %v2146, %v2143
    %v2453 = vpack.c.bf16 %v2147, %v2144
    %v2454 = vpack.c.bf16 %v2151, %v2148
    %v2455 = vpack.c.bf16 %v2152, %v2149
    %v2456 = vpack.c.bf16 %v2153, %v2150
    %v2457 = vpack.c.bf16 %v2157, %v2154
    %v2458 = vpack.c.bf16 %v2158, %v2155
    %v2459 = vpack.c.bf16 %v2159, %v2156
    %v2460 = vpack.c.bf16 %v2163, %v2160
    %v2461 = vpack.c.bf16 %v2164, %v2161
    %v2462 = vpack.c.bf16 %v2165, %v2162
    %v2463 = vpack.c.bf16 %v2169, %v2166
    %v2464 = vpack.c.bf16 %v2170, %v2167
    %v2465 = vpack.c.bf16 %v2171, %v2168
    %v2466 = vpack.c.bf16 %v2175, %v2172
    %v2467 = vpack.c.bf16 %v2176, %v2173
    %v2468 = vpack.c.bf16 %v2177, %v2174
    %v2469 = vpack.c.bf16 %v2181, %v2178
    %v2470 = vpack.c.bf16 %v2182, %v2179
    %v2471 = vpack.c.bf16 %v2183, %v2180
    %2472 = vmatprep.subr.bf16.mxu0 %v2206
    %2473 = vmatpush1.bf16.msra.mxu0 %v2205
    %2474 = vmatprep.subr.bf16.mxu0 %v2203
    %2475 = vmatpush1.bf16.msra.mxu0 %v2202
    %2476 = vmatprep.subr.bf16.mxu0 %v2200
    %2477 = vmatpush1.bf16.msra.mxu0 %v2199
    %2478 = vmatprep.subr.bf16.mxu0 %v2197
    %2479 = vmatpush1.bf16.msra.mxu0 %v2196
    %2480 = vmatprep.subr.bf16.mxu0 %v2194
    %2481 = vmatpush1.bf16.msra.mxu0 %v2193
    %2482 = vmatprep.subr.bf16.mxu0 %v2191
    %2483 = vmatpush1.bf16.msra.mxu0 %v2190
    %2484 = vmatprep.subr.bf16.mxu0 %v2188
    %2485 = vmatpush1.bf16.msra.mxu0 %v2187
    %2486 = vmatprep.subr.bf16.mxu0 %v2185
    %2487 = vmatpush1.bf16.msra.mxu0 %v2184
    %2488 = vmatprep.subr.bf16.mxu0 %v2230
    %2489 = vmatpush2.bf16.msra.mxu0 %v2229
    %2490 = vmatprep.subr.bf16.mxu0 %v2227
    %2491 = vmatpush2.bf16.msra.mxu0 %v2226
    %2492 = vmatprep.subr.bf16.mxu0 %v2224
    %2493 = vmatpush2.bf16.msra.mxu0 %v2223
    %2494 = vmatprep.subr.bf16.mxu0 %v2221
    %2495 = vmatpush2.bf16.msra.mxu0 %v2220
    %2496 = vmatprep.subr.bf16.mxu0 %v2218
    %2497 = vmatpush2.bf16.msra.mxu0 %v2217
    %2498 = vmatprep.subr.bf16.mxu0 %v2215
    %2499 = vmatpush2.bf16.msra.mxu0 %v2214
    %2500 = vmatprep.subr.bf16.mxu0 %v2212
    %2501 = vmatpush2.bf16.msra.mxu0 %v2211
    %2502 = vmatprep.subr.bf16.mxu0 %v2209
    %2503 = vmatpush2.bf16.msra.mxu0 %v2208
    %2504 = vmatprep.mubr.bf16.mxu0 %v1597
    %2505 = vmatmul.mubr.bf16.gmra.mxu0 %v1596
    %v2506 = vpop.f32.mrf.mxu0
    %v2507 = vadd.f32 0.0, %v2506
    %v2508 = vpop.f32.mrf.mxu0
    %v2509 = vadd.f32 0.0, %v2508
    %v2510 = vpop.f32.mrf.mxu0
    %v2511 = vadd.f32 0.0, %v2510
    %v2512 = vpop.f32.mrf.mxu0
    %v2513 = vadd.f32 0.0, %v2512
    %2514 = vdwg.mxu0
    %2515 = vmatprep.subr.bf16.mxu0 %v2254
    %2516 = vmatpush1.bf16.msra.mxu0 %v2253
    %2517 = vmatprep.subr.bf16.mxu0 %v2251
    %2518 = vmatpush1.bf16.msra.mxu0 %v2250
    %2519 = vmatprep.subr.bf16.mxu0 %v2248
    %2520 = vmatpush1.bf16.msra.mxu0 %v2247
    %2521 = vmatprep.subr.bf16.mxu0 %v2245
    %2522 = vmatpush1.bf16.msra.mxu0 %v2244
    %2523 = vmatprep.subr.bf16.mxu0 %v2242
    %2524 = vmatpush1.bf16.msra.mxu0 %v2241
    %2525 = vmatprep.subr.bf16.mxu0 %v2239
    %2526 = vmatpush1.bf16.msra.mxu0 %v2238
    %2527 = vmatprep.subr.bf16.mxu0 %v2236
    %2528 = vmatpush1.bf16.msra.mxu0 %v2235
    %2529 = vmatprep.subr.bf16.mxu0 %v2233
    %2530 = vmatpush1.bf16.msra.mxu0 %v2232
    %2531 = vmatprep.subr.bf16.mxu0 %v2278
    %2532 = vmatpush2.bf16.msra.mxu0 %v2277
    %2533 = vmatprep.subr.bf16.mxu0 %v2275
    %2534 = vmatpush2.bf16.msra.mxu0 %v2274
    %2535 = vmatprep.subr.bf16.mxu0 %v2272
    %2536 = vmatpush2.bf16.msra.mxu0 %v2271
    %2537 = vmatprep.subr.bf16.mxu0 %v2269
    %2538 = vmatpush2.bf16.msra.mxu0 %v2268
    %2539 = vmatprep.subr.bf16.mxu0 %v2266
    %2540 = vmatpush2.bf16.msra.mxu0 %v2265
    %2541 = vmatprep.subr.bf16.mxu0 %v2263
    %2542 = vmatpush2.bf16.msra.mxu0 %v2262
    %2543 = vmatprep.subr.bf16.mxu0 %v2260
    %2544 = vmatpush2.bf16.msra.mxu0 %v2259
    %2545 = vmatprep.subr.bf16.mxu0 %v2257
    %2546 = vmatpush2.bf16.msra.mxu0 %v2256
    %2547 = vmatprep.mubr.bf16.mxu0 %v1599
    %2548 = vmatmul.mubr.bf16.gmra.mxu0 %v1598
    %v2549 = vpop.f32.mrf.mxu0
    %v2550 = vadd.f32 %v2507, %v2549
    %v2551 = vpop.f32.mrf.mxu0
    %v2552 = vadd.f32 %v2509, %v2551
    %v2553 = vpop.f32.mrf.mxu0
    %v2554 = vadd.f32 %v2511, %v2553
    %v2555 = vpop.f32.mrf.mxu0
    %v2556 = vadd.f32 %v2513, %v2555
    %2557 = vdwg.mxu0
    %2558 = vmatprep.subr.bf16.mxu0 %v2302
    %2559 = vmatpush1.bf16.msra.mxu0 %v2301
    %2560 = vmatprep.subr.bf16.mxu0 %v2299
    %2561 = vmatpush1.bf16.msra.mxu0 %v2298
    %2562 = vmatprep.subr.bf16.mxu0 %v2296
    %2563 = vmatpush1.bf16.msra.mxu0 %v2295
    %2564 = vmatprep.subr.bf16.mxu0 %v2293
    %2565 = vmatpush1.bf16.msra.mxu0 %v2292
    %2566 = vmatprep.subr.bf16.mxu0 %v2290
    %2567 = vmatpush1.bf16.msra.mxu0 %v2289
    %2568 = vmatprep.subr.bf16.mxu0 %v2287
    %2569 = vmatpush1.bf16.msra.mxu0 %v2286
    %2570 = vmatprep.subr.bf16.mxu0 %v2284
    %2571 = vmatpush1.bf16.msra.mxu0 %v2283
    %2572 = vmatprep.subr.bf16.mxu0 %v2281
    %2573 = vmatpush1.bf16.msra.mxu0 %v2280
    %2574 = vmatprep.subr.bf16.mxu0 %v2326
    %2575 = vmatpush2.bf16.msra.mxu0 %v2325
    %2576 = vmatprep.subr.bf16.mxu0 %v2323
    %2577 = vmatpush2.bf16.msra.mxu0 %v2322
    %2578 = vmatprep.subr.bf16.mxu0 %v2320
    %2579 = vmatpush2.bf16.msra.mxu0 %v2319
    %2580 = vmatprep.subr.bf16.mxu0 %v2317
    %2581 = vmatpush2.bf16.msra.mxu0 %v2316
    %2582 = vmatprep.subr.bf16.mxu0 %v2314
    %2583 = vmatpush2.bf16.msra.mxu0 %v2313
    %2584 = vmatprep.subr.bf16.mxu0 %v2311
    %2585 = vmatpush2.bf16.msra.mxu0 %v2310
    %2586 = vmatprep.subr.bf16.mxu0 %v2308
    %2587 = vmatpush2.bf16.msra.mxu0 %v2307
    %2588 = vmatprep.subr.bf16.mxu0 %v2305
    %2589 = vmatpush2.bf16.msra.mxu0 %v2304
    %2590 = vmatprep.mubr.bf16.mxu0 %v1601
    %2591 = vmatmul.mubr.bf16.gmra.mxu0 %v1600
    %v2592 = vpop.f32.mrf.mxu0
    %v2593 = vadd.f32 %v2550, %v2592
    %v2594 = vpop.f32.mrf.mxu0
    %v2595 = vadd.f32 %v2552, %v2594
    %v2596 = vpop.f32.mrf.mxu0
    %v2597 = vadd.f32 %v2554, %v2596
    %v2598 = vpop.f32.mrf.mxu0
    %v2599 = vadd.f32 %v2556, %v2598
    %2600 = vdwg.mxu0
    %2601 = vmatprep.subr.bf16.mxu0 %v2350
    %2602 = vmatpush1.bf16.msra.mxu0 %v2349
    %2603 = vmatprep.subr.bf16.mxu0 %v2347
    %2604 = vmatpush1.bf16.msra.mxu0 %v2346
    %2605 = vmatprep.subr.bf16.mxu0 %v2344
    %2606 = vmatpush1.bf16.msra.mxu0 %v2343
    %2607 = vmatprep.subr.bf16.mxu0 %v2341
    %2608 = vmatpush1.bf16.msra.mxu0 %v2340
    %2609 = vmatprep.subr.bf16.mxu0 %v2338
    %2610 = vmatpush1.bf16.msra.mxu0 %v2337
    %2611 = vmatprep.subr.bf16.mxu0 %v2335
    %2612 = vmatpush1.bf16.msra.mxu0 %v2334
    %2613 = vmatprep.subr.bf16.mxu0 %v2332
    %2614 = vmatpush1.bf16.msra.mxu0 %v2331
    %2615 = vmatprep.subr.bf16.mxu0 %v2329
    %2616 = vmatpush1.bf16.msra.mxu0 %v2328
    %2617 = vmatprep.subr.bf16.mxu0 %v2374
    %2618 = vmatpush2.bf16.msra.mxu0 %v2373
    %2619 = vmatprep.subr.bf16.mxu0 %v2371
    %2620 = vmatpush2.bf16.msra.mxu0 %v2370
    %2621 = vmatprep.subr.bf16.mxu0 %v2368
    %2622 = vmatpush2.bf16.msra.mxu0 %v2367
    %2623 = vmatprep.subr.bf16.mxu0 %v2365
    %2624 = vmatpush2.bf16.msra.mxu0 %v2364
    %2625 = vmatprep.subr.bf16.mxu0 %v2362
    %2626 = vmatpush2.bf16.msra.mxu0 %v2361
    %2627 = vmatprep.subr.bf16.mxu0 %v2359
    %2628 = vmatpush2.bf16.msra.mxu0 %v2358
    %2629 = vmatprep.subr.bf16.mxu0 %v2356
    %2630 = vmatpush2.bf16.msra.mxu0 %v2355
    %2631 = vmatprep.subr.bf16.mxu0 %v2353
    %2632 = vmatpush2.bf16.msra.mxu0 %v2352
    %2633 = vmatprep.mubr.bf16.mxu0 %v1603
    %2634 = vmatmul.mubr.bf16.gmra.mxu0 %v1602
    %v2635 = vpop.f32.mrf.mxu0
    %v2636 = vadd.f32 %v2593, %v2635
    %v2637 = vpop.f32.mrf.mxu0
    %v2638 = vadd.f32 %v2595, %v2637
    %v2639 = vpop.f32.mrf.mxu0
    %v2640 = vadd.f32 %v2597, %v2639
    %v2641 = vpop.f32.mrf.mxu0
    %v2642 = vadd.f32 %v2599, %v2641
    %2643 = vdwg.mxu0
    %2644 = vmatprep.subr.bf16.mxu0 %v2398
    %2645 = vmatpush1.bf16.msra.mxu0 %v2397
    %2646 = vmatprep.subr.bf16.mxu0 %v2395
    %2647 = vmatpush1.bf16.msra.mxu0 %v2394
    %2648 = vmatprep.subr.bf16.mxu0 %v2392
    %2649 = vmatpush1.bf16.msra.mxu0 %v2391
    %2650 = vmatprep.subr.bf16.mxu0 %v2389
    %2651 = vmatpush1.bf16.msra.mxu0 %v2388
    %2652 = vmatprep.subr.bf16.mxu0 %v2386
    %2653 = vmatpush1.bf16.msra.mxu0 %v2385
    %2654 = vmatprep.subr.bf16.mxu0 %v2383
    %2655 = vmatpush1.bf16.msra.mxu0 %v2382
    %2656 = vmatprep.subr.bf16.mxu0 %v2380
    %2657 = vmatpush1.bf16.msra.mxu0 %v2379
    %2658 = vmatprep.subr.bf16.mxu0 %v2377
    %2659 = vmatpush1.bf16.msra.mxu0 %v2376
    %2660 = vmatprep.subr.bf16.mxu0 %v2422
    %2661 = vmatpush2.bf16.msra.mxu0 %v2421
    %2662 = vmatprep.subr.bf16.mxu0 %v2419
    %2663 = vmatpush2.bf16.msra.mxu0 %v2418
    %2664 = vmatprep.subr.bf16.mxu0 %v2416
    %2665 = vmatpush2.bf16.msra.mxu0 %v2415
    %2666 = vmatprep.subr.bf16.mxu0 %v2413
    %2667 = vmatpush2.bf16.msra.mxu0 %v2412
    %2668 = vmatprep.subr.bf16.mxu0 %v2410
    %2669 = vmatpush2.bf16.msra.mxu0 %v2409
    %2670 = vmatprep.subr.bf16.mxu0 %v2407
    %2671 = vmatpush2.bf16.msra.mxu0 %v2406
    %2672 = vmatprep.subr.bf16.mxu0 %v2404
    %2673 = vmatpush2.bf16.msra.mxu0 %v2403
    %2674 = vmatprep.subr.bf16.mxu0 %v2401
    %2675 = vmatpush2.bf16.msra.mxu0 %v2400
    %2676 = vmatprep.mubr.bf16.mxu0 %v1605
    %2677 = vmatmul.mubr.bf16.gmra.mxu0 %v1604
    %v2678 = vpop.f32.mrf.mxu0
    %v2679 = vadd.f32 %v2636, %v2678
    %v2680 = vpop.f32.mrf.mxu0
    %v2681 = vadd.f32 %v2638, %v2680
    %v2682 = vpop.f32.mrf.mxu0
    %v2683 = vadd.f32 %v2640, %v2682
    %v2684 = vpop.f32.mrf.mxu0
    %v2685 = vadd.f32 %v2642, %v2684
    %2686 = vdwg.mxu0
    %2687 = vmatprep.subr.bf16.mxu0 %v2446
    %2688 = vmatpush1.bf16.msra.mxu0 %v2445
    %2689 = vmatprep.subr.bf16.mxu0 %v2443
    %2690 = vmatpush1.bf16.msra.mxu0 %v2442
    %2691 = vmatprep.subr.bf16.mxu0 %v2440
    %2692 = vmatpush1.bf16.msra.mxu0 %v2439
    %2693 = vmatprep.subr.bf16.mxu0 %v2437
    %2694 = vmatpush1.bf16.msra.mxu0 %v2436
    %2695 = vmatprep.subr.bf16.mxu0 %v2434
    %2696 = vmatpush1.bf16.msra.mxu0 %v2433
    %2697 = vmatprep.subr.bf16.mxu0 %v2431
    %2698 = vmatpush1.bf16.msra.mxu0 %v2430
    %2699 = vmatprep.subr.bf16.mxu0 %v2428
    %2700 = vmatpush1.bf16.msra.mxu0 %v2427
    %2701 = vmatprep.subr.bf16.mxu0 %v2425
    %2702 = vmatpush1.bf16.msra.mxu0 %v2424
    %2703 = vmatprep.subr.bf16.mxu0 %v2470
    %2704 = vmatpush2.bf16.msra.mxu0 %v2469
    %2705 = vmatprep.subr.bf16.mxu0 %v2467
    %2706 = vmatpush2.bf16.msra.mxu0 %v2466
    %2707 = vmatprep.subr.bf16.mxu0 %v2464
    %2708 = vmatpush2.bf16.msra.mxu0 %v2463
    %2709 = vmatprep.subr.bf16.mxu0 %v2461
    %2710 = vmatpush2.bf16.msra.mxu0 %v2460
    %2711 = vmatprep.subr.bf16.mxu0 %v2458
    %2712 = vmatpush2.bf16.msra.mxu0 %v2457
    %2713 = vmatprep.subr.bf16.mxu0 %v2455
    %2714 = vmatpush2.bf16.msra.mxu0 %v2454
    %2715 = vmatprep.subr.bf16.mxu0 %v2452
    %2716 = vmatpush2.bf16.msra.mxu0 %v2451
    %2717 = vmatprep.subr.bf16.mxu0 %v2449
    %2718 = vmatpush2.bf16.msra.mxu0 %v2448
    %2719 = vmatprep.mubr.bf16.mxu0 %v1607
    %2720 = vmatmul.mubr.bf16.gmra.mxu0 %v1606
    %v2721 = vpop.f32.mrf.mxu0
    %v2722 = vadd.f32 %v2679, %v2721
    %v2723 = vpop.f32.mrf.mxu0
    %v2724 = vadd.f32 %v2681, %v2723
    %v2725 = vpop.f32.mrf.mxu0
    %v2726 = vadd.f32 %v2683, %v2725
    %v2727 = vpop.f32.mrf.mxu0
    %v2728 = vadd.f32 %v2685, %v2727
    %2729 = vdwg.mxu0
    %2730 = vmatprep.subr.bf16.mxu0 0
    %2731 = vmatpush1.bf16.msra.mxu0 %v2207
    %2732 = vmatprep.subr.bf16.mxu0 0
    %2733 = vmatpush1.bf16.msra.mxu0 %v2204
    %2734 = vmatprep.subr.bf16.mxu0 0
    %2735 = vmatpush1.bf16.msra.mxu0 %v2201
    %2736 = vmatprep.subr.bf16.mxu0 0
    %2737 = vmatpush1.bf16.msra.mxu0 %v2198
    %2738 = vmatprep.subr.bf16.mxu0 0
    %2739 = vmatpush1.bf16.msra.mxu0 %v2195
    %2740 = vmatprep.subr.bf16.mxu0 0
    %2741 = vmatpush1.bf16.msra.mxu0 %v2192
    %2742 = vmatprep.subr.bf16.mxu0 0
    %2743 = vmatpush1.bf16.msra.mxu0 %v2189
    %2744 = vmatprep.subr.bf16.mxu0 0
    %2745 = vmatpush1.bf16.msra.mxu0 %v2186
    %2746 = vmatprep.subr.bf16.mxu0 0
    %2747 = vmatpush2.bf16.msra.mxu0 %v2231
    %2748 = vmatprep.subr.bf16.mxu0 0
    %2749 = vmatpush2.bf16.msra.mxu0 %v2228
    %2750 = vmatprep.subr.bf16.mxu0 0
    %2751 = vmatpush2.bf16.msra.mxu0 %v2225
    %2752 = vmatprep.subr.bf16.mxu0 0
    %2753 = vmatpush2.bf16.msra.mxu0 %v2222
    %2754 = vmatprep.subr.bf16.mxu0 0
    %2755 = vmatpush2.bf16.msra.mxu0 %v2219
    %2756 = vmatprep.subr.bf16.mxu0 0
    %2757 = vmatpush2.bf16.msra.mxu0 %v2216
    %2758 = vmatprep.subr.bf16.mxu0 0
    %2759 = vmatpush2.bf16.msra.mxu0 %v2213
    %2760 = vmatprep.subr.bf16.mxu0 0
    %2761 = vmatpush2.bf16.msra.mxu0 %v2210
    %2762 = vmatprep.mubr.bf16.mxu0 %v1597
    %2763 = vmatmul.mubr.bf16.gmra.mxu0 %v1596
    %v2764 = vpop.f32.mrf.mxu0
    %v2765 = vadd.f32 0.0, %v2764
    %v2766 = vpop.f32.mrf.mxu0
    %v2767 = vpop.f32.mrf.mxu0
    %v2768 = vadd.f32 0.0, %v2767
    %v2769 = vpop.f32.mrf.mxu0
    %2770 = vdwg.mxu0
    %2771 = vmatprep.subr.bf16.mxu0 0
    %2772 = vmatpush1.bf16.msra.mxu0 %v2255
    %2773 = vmatprep.subr.bf16.mxu0 0
    %2774 = vmatpush1.bf16.msra.mxu0 %v2252
    %2775 = vmatprep.subr.bf16.mxu0 0
    %2776 = vmatpush1.bf16.msra.mxu0 %v2249
    %2777 = vmatprep.subr.bf16.mxu0 0
    %2778 = vmatpush1.bf16.msra.mxu0 %v2246
    %2779 = vmatprep.subr.bf16.mxu0 0
    %2780 = vmatpush1.bf16.msra.mxu0 %v2243
    %2781 = vmatprep.subr.bf16.mxu0 0
    %2782 = vmatpush1.bf16.msra.mxu0 %v2240
    %2783 = vmatprep.subr.bf16.mxu0 0
    %2784 = vmatpush1.bf16.msra.mxu0 %v2237
    %2785 = vmatprep.subr.bf16.mxu0 0
    %2786 = vmatpush1.bf16.msra.mxu0 %v2234
    %2787 = vmatprep.subr.bf16.mxu0 0
    %2788 = vmatpush2.bf16.msra.mxu0 %v2279
    %2789 = vmatprep.subr.bf16.mxu0 0
    %2790 = vmatpush2.bf16.msra.mxu0 %v2276
    %2791 = vmatprep.subr.bf16.mxu0 0
    %2792 = vmatpush2.bf16.msra.mxu0 %v2273
    %2793 = vmatprep.subr.bf16.mxu0 0
    %2794 = vmatpush2.bf16.msra.mxu0 %v2270
    %2795 = vmatprep.subr.bf16.mxu0 0
    %2796 = vmatpush2.bf16.msra.mxu0 %v2267
    %2797 = vmatprep.subr.bf16.mxu0 0
    %2798 = vmatpush2.bf16.msra.mxu0 %v2264
    %2799 = vmatprep.subr.bf16.mxu0 0
    %2800 = vmatpush2.bf16.msra.mxu0 %v2261
    %2801 = vmatprep.subr.bf16.mxu0 0
    %2802 = vmatpush2.bf16.msra.mxu0 %v2258
    %2803 = vmatprep.mubr.bf16.mxu0 %v1599
    %2804 = vmatmul.mubr.bf16.gmra.mxu0 %v1598
    %v2805 = vpop.f32.mrf.mxu0
    %v2806 = vadd.f32 %v2765, %v2805
    %v2807 = vpop.f32.mrf.mxu0
    %v2808 = vpop.f32.mrf.mxu0
    %v2809 = vadd.f32 %v2768, %v2808
    %v2810 = vpop.f32.mrf.mxu0
    %2811 = vdwg.mxu0
    %2812 = vmatprep.subr.bf16.mxu0 0
    %2813 = vmatpush1.bf16.msra.mxu0 %v2303
    %2814 = vmatprep.subr.bf16.mxu0 0
    %2815 = vmatpush1.bf16.msra.mxu0 %v2300
    %2816 = vmatprep.subr.bf16.mxu0 0
    %2817 = vmatpush1.bf16.msra.mxu0 %v2297
    %2818 = vmatprep.subr.bf16.mxu0 0
    %2819 = vmatpush1.bf16.msra.mxu0 %v2294
    %2820 = vmatprep.subr.bf16.mxu0 0
    %2821 = vmatpush1.bf16.msra.mxu0 %v2291
    %2822 = vmatprep.subr.bf16.mxu0 0
    %2823 = vmatpush1.bf16.msra.mxu0 %v2288
    %2824 = vmatprep.subr.bf16.mxu0 0
    %2825 = vmatpush1.bf16.msra.mxu0 %v2285
    %2826 = vmatprep.subr.bf16.mxu0 0
    %2827 = vmatpush1.bf16.msra.mxu0 %v2282
    %2828 = vmatprep.subr.bf16.mxu0 0
    %2829 = vmatpush2.bf16.msra.mxu0 %v2327
    %2830 = vmatprep.subr.bf16.mxu0 0
    %2831 = vmatpush2.bf16.msra.mxu0 %v2324
    %2832 = vmatprep.subr.bf16.mxu0 0
    %2833 = vmatpush2.bf16.msra.mxu0 %v2321
    %2834 = vmatprep.subr.bf16.mxu0 0
    %2835 = vmatpush2.bf16.msra.mxu0 %v2318
    %2836 = vmatprep.subr.bf16.mxu0 0
    %2837 = vmatpush2.bf16.msra.mxu0 %v2315
    %2838 = vmatprep.subr.bf16.mxu0 0
    %2839 = vmatpush2.bf16.msra.mxu0 %v2312
    %2840 = vmatprep.subr.bf16.mxu0 0
    %2841 = vmatpush2.bf16.msra.mxu0 %v2309
    %2842 = vmatprep.subr.bf16.mxu0 0
    %2843 = vmatpush2.bf16.msra.mxu0 %v2306
    %2844 = vmatprep.mubr.bf16.mxu0 %v1601
    %2845 = vmatmul.mubr.bf16.gmra.mxu0 %v1600
    %v2846 = vpop.f32.mrf.mxu0
    %v2847 = vadd.f32 %v2806, %v2846
    %v2848 = vpop.f32.mrf.mxu0
    %v2849 = vpop.f32.mrf.mxu0
    %v2850 = vadd.f32 %v2809, %v2849
    %v2851 = vpop.f32.mrf.mxu0
    %2852 = vdwg.mxu0
    %2853 = vmatprep.subr.bf16.mxu0 0
    %2854 = vmatpush1.bf16.msra.mxu0 %v2351
    %2855 = vmatprep.subr.bf16.mxu0 0
    %2856 = vmatpush1.bf16.msra.mxu0 %v2348
    %2857 = vmatprep.subr.bf16.mxu0 0
    %2858 = vmatpush1.bf16.msra.mxu0 %v2345
    %2859 = vmatprep.subr.bf16.mxu0 0
    %2860 = vmatpush1.bf16.msra.mxu0 %v2342
    %2861 = vmatprep.subr.bf16.mxu0 0
    %2862 = vmatpush1.bf16.msra.mxu0 %v2339
    %2863 = vmatprep.subr.bf16.mxu0 0
    %2864 = vmatpush1.bf16.msra.mxu0 %v2336
    %2865 = vmatprep.subr.bf16.mxu0 0
    %2866 = vmatpush1.bf16.msra.mxu0 %v2333
    %2867 = vmatprep.subr.bf16.mxu0 0
    %2868 = vmatpush1.bf16.msra.mxu0 %v2330
    %2869 = vmatprep.subr.bf16.mxu0 0
    %2870 = vmatpush2.bf16.msra.mxu0 %v2375
    %2871 = vmatprep.subr.bf16.mxu0 0
    %2872 = vmatpush2.bf16.msra.mxu0 %v2372
    %2873 = vmatprep.subr.bf16.mxu0 0
    %2874 = vmatpush2.bf16.msra.mxu0 %v2369
    %2875 = vmatprep.subr.bf16.mxu0 0
    %2876 = vmatpush2.bf16.msra.mxu0 %v2366
    %2877 = vmatprep.subr.bf16.mxu0 0
    %2878 = vmatpush2.bf16.msra.mxu0 %v2363
    %2879 = vmatprep.subr.bf16.mxu0 0
    %2880 = vmatpush2.bf16.msra.mxu0 %v2360
    %2881 = vmatprep.subr.bf16.mxu0 0
    %2882 = vmatpush2.bf16.msra.mxu0 %v2357
    %2883 = vmatprep.subr.bf16.mxu0 0
    %2884 = vmatpush2.bf16.msra.mxu0 %v2354
    %2885 = vmatprep.mubr.bf16.mxu0 %v1603
    %2886 = vmatmul.mubr.bf16.gmra.mxu0 %v1602
    %v2887 = vpop.f32.mrf.mxu0
    %v2888 = vadd.f32 %v2847, %v2887
    %v2889 = vpop.f32.mrf.mxu0
    %v2890 = vpop.f32.mrf.mxu0
    %v2891 = vadd.f32 %v2850, %v2890
    %v2892 = vpop.f32.mrf.mxu0
    %2893 = vdwg.mxu0
    %2894 = vmatprep.subr.bf16.mxu0 0
    %2895 = vmatpush1.bf16.msra.mxu0 %v2399
    %2896 = vmatprep.subr.bf16.mxu0 0
    %2897 = vmatpush1.bf16.msra.mxu0 %v2396
    %2898 = vmatprep.subr.bf16.mxu0 0
    %2899 = vmatpush1.bf16.msra.mxu0 %v2393
    %2900 = vmatprep.subr.bf16.mxu0 0
    %2901 = vmatpush1.bf16.msra.mxu0 %v2390
    %2902 = vmatprep.subr.bf16.mxu0 0
    %2903 = vmatpush1.bf16.msra.mxu0 %v2387
    %2904 = vmatprep.subr.bf16.mxu0 0
    %2905 = vmatpush1.bf16.msra.mxu0 %v2384
    %2906 = vmatprep.subr.bf16.mxu0 0
    %2907 = vmatpush1.bf16.msra.mxu0 %v2381
    %2908 = vmatprep.subr.bf16.mxu0 0
    %2909 = vmatpush1.bf16.msra.mxu0 %v2378
    %2910 = vmatprep.subr.bf16.mxu0 0
    %2911 = vmatpush2.bf16.msra.mxu0 %v2423
    %2912 = vmatprep.subr.bf16.mxu0 0
    %2913 = vmatpush2.bf16.msra.mxu0 %v2420
    %2914 = vmatprep.subr.bf16.mxu0 0
    %2915 = vmatpush2.bf16.msra.mxu0 %v2417
    %2916 = vmatprep.subr.bf16.mxu0 0
    %2917 = vmatpush2.bf16.msra.mxu0 %v2414
    %2918 = vmatprep.subr.bf16.mxu0 0
    %2919 = vmatpush2.bf16.msra.mxu0 %v2411
    %2920 = vmatprep.subr.bf16.mxu0 0
    %2921 = vmatpush2.bf16.msra.mxu0 %v2408
    %2922 = vmatprep.subr.bf16.mxu0 0
    %2923 = vmatpush2.bf16.msra.mxu0 %v2405
    %2924 = vmatprep.subr.bf16.mxu0 0
    %2925 = vmatpush2.bf16.msra.mxu0 %v2402
    %2926 = vmatprep.mubr.bf16.mxu0 %v1605
    %2927 = vmatmul.mubr.bf16.gmra.mxu0 %v1604
    %v2928 = vpop.f32.mrf.mxu0
    %v2929 = vadd.f32 %v2888, %v2928
    %v2930 = vpop.f32.mrf.mxu0
    %v2931 = vpop.f32.mrf.mxu0
    %v2932 = vadd.f32 %v2891, %v2931
    %v2933 = vpop.f32.mrf.mxu0
    %2934 = vdwg.mxu0
    %2935 = vmatprep.subr.bf16.mxu0 0
    %2936 = vmatpush1.bf16.msra.mxu0 %v2447
    %2937 = vmatprep.subr.bf16.mxu0 0
    %2938 = vmatpush1.bf16.msra.mxu0 %v2444
    %2939 = vmatprep.subr.bf16.mxu0 0
    %2940 = vmatpush1.bf16.msra.mxu0 %v2441
    %2941 = vmatprep.subr.bf16.mxu0 0
    %2942 = vmatpush1.bf16.msra.mxu0 %v2438
    %2943 = vmatprep.subr.bf16.mxu0 0
    %2944 = vmatpush1.bf16.msra.mxu0 %v2435
    %2945 = vmatprep.subr.bf16.mxu0 0
    %2946 = vmatpush1.bf16.msra.mxu0 %v2432
    %2947 = vmatprep.subr.bf16.mxu0 0
    %2948 = vmatpush1.bf16.msra.mxu0 %v2429
    %2949 = vmatprep.subr.bf16.mxu0 0
    %2950 = vmatpush1.bf16.msra.mxu0 %v2426
    %2951 = vmatprep.subr.bf16.mxu0 0
    %2952 = vmatpush2.bf16.msra.mxu0 %v2471
    %2953 = vmatprep.subr.bf16.mxu0 0
    %2954 = vmatpush2.bf16.msra.mxu0 %v2468
    %2955 = vmatprep.subr.bf16.mxu0 0
    %2956 = vmatpush2.bf16.msra.mxu0 %v2465
    %2957 = vmatprep.subr.bf16.mxu0 0
    %2958 = vmatpush2.bf16.msra.mxu0 %v2462
    %2959 = vmatprep.subr.bf16.mxu0 0
    %2960 = vmatpush2.bf16.msra.mxu0 %v2459
    %2961 = vmatprep.subr.bf16.mxu0 0
    %2962 = vmatpush2.bf16.msra.mxu0 %v2456
    %2963 = vmatprep.subr.bf16.mxu0 0
    %2964 = vmatpush2.bf16.msra.mxu0 %v2453
    %2965 = vmatprep.subr.bf16.mxu0 0
    %2966 = vmatpush2.bf16.msra.mxu0 %v2450
    %2967 = vmatprep.mubr.bf16.mxu0 %v1607
    %2968 = vmatmul.mubr.bf16.gmra.mxu0 %v1606
    %v2969 = vpop.f32.mrf.mxu0
    %v2970 = vadd.f32 %v2929, %v2969
    %v2971 = vpop.f32.mrf.mxu0
    %v2972 = vpop.f32.mrf.mxu0
    %v2973 = vadd.f32 %v2932, %v2972
    %v2974 = vpop.f32.mrf.mxu0
    %2975 = vdwg.mxu0
    %v2976 = vadd.f32 %v1590, %v2722
    %v2977 = vadd.f32 %v1591, %v2724
    %v2978 = vadd.f32 %v1592, %v2970
    %v2979 = vadd.f32 %v1593, %v2726
    %v2980 = vadd.f32 %v1594, %v2728
    %v2981 = vadd.f32 %v1595, %v2973
    %2982 = vst [vmem:[#allocation11] sm:$0xff] %v2976
    %2983 = vst [vmem:[#allocation11 + $0x8] sm:$0xff] %v2977
    %2984 = vst [vmem:[#allocation11 + $0x10] sm:$0xff] %v2978
    %2985 = vst [vmem:[#allocation11 + $0x18] sm:$0xff] %v2979
    %2986 = vst [vmem:[#allocation11 + $0x20] sm:$0xff] %v2980
    %2987 = vst [vmem:[#allocation11 + $0x28] sm:$0xff] %v2981
    // Predicated region
    $region46: #{tpu_custom_call.1} parent=1 // pred_check
      _
    $region47: #{tpu_custom_call.1} parent=1 // pred_check_branch
      %2989 = sbr.rel (0) target = $region49
    $region48: #{tpu_custom_call.1} parent=1 // pred_region
      %s2991 = ssub.s32 768, 768
      %2992 = vsyncadd [#allocation4], %s2991
      %s2993 = sshll.u32 [#allocation11], 4
      %s2994 = int_to_ptr.vmem [resolvable:$true] %s2993
      %2999 = dma.vmem_to_hbm [thread:$0]  %s2994, 768, %s5, [#allocation4], 384, 384, 24
    $region49: #{tpu_custom_call.1} parent=1 // pred_fallthru
      _
    // Predicated region
    $region50: #{tpu_custom_call.1} parent=1 // pred_check
      _
    $region51: #{tpu_custom_call.1} parent=1 // pred_check_branch
      %3001 = sbr.rel (0) target = $region53
    $region52: #{tpu_custom_call.1} parent=1 // pred_region
      %3002 = dma.done [#allocation4], 768
    $region53: #{tpu_custom_call.1} parent=1 // pred_fallthru
      _
    %3003 = vsyncpa [#allocation3], 1
    %3004 = vsyncpa [#allocation6], 1
    %3005 = vsyncpa [#allocation9], 1
    %3006 = vsyncpa [#allocation4], 1

</llo_original>
